<compile_context>
chip_gen: v7x
topology: tpu7x:2x2x1
jax: 0.10.0
libtpu: 0.0.40
codegen_flags: <defaults>
</compile_context>

<pallas_src>
import functools
import numpy as np
import jax
import jax.numpy as jnp
from jax.experimental import pallas as pl
from jax.experimental.pallas import tpu as pltpu


def _round_up(n, m):
    return ((n + m - 1) // m) * m


def _pad_dim(n):
    # lane/sublane mapped dims: multiple of 128 once large, multiple of 16 when small
    return _round_up(n, 128) if n > 128 else _round_up(n, 16)


def _pad_axis(a, axis, new_size):
    pad = new_size - a.shape[axis]
    if pad <= 0:
        return a
    widths = [(0, 0)] * a.ndim
    widths[axis] = (0, pad)
    return jnp.pad(a, widths)


# ----------------------------------------------------------------------------
# Spherical-harmonic transform tables (deterministic, numpy, glue)
# ----------------------------------------------------------------------------
def _precompute_legpoly(mmax, lmax, theta, csphase=True):
    """Orthonormal associated Legendre polys P_lm(cos theta); shape (mmax, lmax, ntheta)."""
    nmax = max(mmax, lmax)
    ct = np.cos(theta)
    st = np.sin(theta)
    vdm = np.zeros((nmax, nmax, len(theta)), dtype=np.float64)
    vdm[0, 0, :] = 1.0 / np.sqrt(4.0 * np.pi)
    for l in range(1, nmax):
        vdm[l - 1, l] = np.sqrt(2.0 * l + 1.0) * ct * vdm[l - 1, l - 1]
        vdm[l, l] = np.sqrt((2.0 * l + 1.0) / (2.0 * l)) * st * vdm[l - 1, l - 1]
    for l in range(2, nmax):
        for m in range(0, l - 1):
            a = np.sqrt((2.0 * l - 1.0) * (2.0 * l + 1.0) / ((l - m) * (l + m)))
            b = np.sqrt((l + m - 1.0) * (l - m - 1.0) * (2.0 * l + 1.0)
                        / ((l - m) * (l + m) * (2.0 * l - 3.0)))
            vdm[m, l] = a * ct * vdm[m, l - 1] - b * vdm[m, l - 2]
    vdm = vdm[:mmax, :lmax]
    if csphase:
        vdm[1::2] *= -1.0
    return vdm


def make_sht_tables(nlat, nlon):
    """Gauss-Legendre grid SHT tables (torch_harmonics RealSHT, norm='ortho').

    Quadrature weights (and the 2*pi forward-FFT factor) are *not* baked into the
    table any more; they are folded into x on the host.  Tables are returned already
    zero-padded to the kernel's (Lp, Hp) tile sizes and cast to bf16, so the per-call
    path does no table padding / casting work.
    """
    lmax = nlat
    mmax = nlon // 2 + 1
    cost, quad_w = np.polynomial.legendre.leggauss(nlat)
    theta = np.flip(np.arccos(cost)).copy()
    quad_w = np.flip(quad_w).copy()
    pct = _precompute_legpoly(mmax, lmax, theta)                  # (mmax, lmax, nlat)

    Hp = _pad_dim(nlat)
    Lp = _pad_dim(lmax)
    fwd = np.zeros((mmax, Lp, Hp), dtype=np.float32)              # streamed (l, theta)
    fwd[:, :lmax, :nlat] = pct
    inv = np.zeros((mmax, Hp, Lp), dtype=np.float32)              # streamed (theta, l)
    inv[:, :nlat, :lmax] = np.transpose(pct, (0, 2, 1))
    # TODO(synk): bf16 tables validated at small nlat only; keep an f32 escape hatch
    # for production resolutions if high-degree P_lm exceed the error budget.
    qw = (2.0 * np.pi) * quad_w                                   # folded 2*pi factor
    return (jnp.asarray(fwd, dtype=jnp.bfloat16),
            jnp.asarray(inv, dtype=jnp.bfloat16),
            jnp.asarray(qw, dtype=jnp.float32),
            lmax, mmax, Hp, Lp)


# ----------------------------------------------------------------------------
# Hardware-aware sizing
# ----------------------------------------------------------------------------
def _vmem_config():
    try:
        phys = int(pltpu.get_tpu_info().vmem_capacity_bytes)
    except Exception:
        phys = 64 * 1024 * 1024                                   # conservative (v7x-sized)
    if phys >= (100 << 20):            # 128 MiB class (v5e / v6e): use ~phys/3 for blocks
        block_budget = min(44 << 20, phys // 3)
        vmem_limit = min(100 << 20, (phys * 3) // 4)
    else:                              # 64 MiB class (v7x): stay conservative
        block_budget = max(4 << 20, phys // 3)
        vmem_limit = max(32 << 20, (phys * 3) // 4)
    return block_budget, vmem_limit


def _num_tensorcores():
    """Best-effort TensorCore count (1 on v5e/v6e, 2 on v7x); defaults to 1."""
    try:
        info = pltpu.get_tpu_info()
        for name in ("num_cores", "core_count", "num_tensorcores", "tensorcore_count"):
            v = getattr(info, name, None)
            if isinstance(v, int) and 1 <= v <= 8:
                return v
    except Exception:
        pass
    try:
        d = jax.devices()[0]
        for name in ("num_cores", "core_count"):
            v = getattr(d, name, None)
            if isinstance(v, int) and 1 <= v <= 8:
                return v
        kind = (getattr(d, "device_kind", "") or "").lower()
        if "v7" in kind:
            return 2
    except Exception:
        pass
    return 1


# ----------------------------------------------------------------------------
# Fused Pallas kernel: forward Legendre -> per-l complex channel mix -> inverse
# Legendre, for a block of GB longitudinal modes m per grid step.
# ----------------------------------------------------------------------------
def _sfno_fused_kernel(C, B, x_ref, fwd_ref, inv_ref, wr_ref, wi_ref, o_ref):
    # x_ref  : (GB, Hp, R)  bf16   lanes r = (reim, chan, batch), R = 2*C*B
    # fwd_ref: (GB, Lp, Hp) bf16   P_lm(theta) per m, streamed MXU operand
    # inv_ref: (GB, Hp, Lp) bf16   P_lm(theta)^T per m, streamed MXU operand
    # wr_ref : (C,  Lp, CB) f32    lane-expanded real mixing weights (resident)
    # wi_ref : (C,  Lp, CB) f32    lane-expanded imag mixing weights (resident)
    # o_ref  : (GB, Hp, R)  bf16
    CB = C * B

    # (a) forward Legendre transform: the big table is the streamed LHS, the narrow
    #     activation block is the stationary weight -> weight reloads amortised over
    #     Lp streamed rows instead of R rows.
    coeff = jnp.einsum('glh,ghr->glr', fwd_ref[...], x_ref[...],
                       preferred_element_type=jnp.float32)        # (GB, Lp, R) f32
    cr = coeff[:, :, :CB]
    ci = coeff[:, :, CB:]

    # (b) per-l complex block-diagonal channel mix, entirely in registers (no VMEM
    #     scratch round trip).  One lane tile per input channel; weights were
    #     lane-expanded on the host so no per-(i,o) broadcasts are generated here.
    #     TODO(synk): for large C this should become an l-gridded MXU stage.
    acc_r = None
    acc_i = None
    for i in range(C):
        cri = jnp.concatenate([cr[:, :, i * B:(i + 1) * B]] * C, axis=-1)   # (GB,Lp,CB)
        cii = jnp.concatenate([ci[:, :, i * B:(i + 1) * B]] * C, axis=-1)
        w_r = wr_ref[i]                                                     # (Lp, CB)
        w_i = wi_ref[i]
        tr = cri * w_r - cii * w_i
        ti = cri * w_i + cii * w_r
        acc_r = tr if acc_r is None else acc_r + tr
        acc_i = ti if acc_i is None else acc_i + ti
    mixed = jnp.concatenate([acc_r, acc_i], axis=-1).astype(jnp.bfloat16)   # (GB,Lp,R)

    # (c) inverse Legendre transform, again with the table streamed; bf16 writeback.
    y = jnp.einsum('ghl,glr->ghr', inv_ref[...], mixed,
                   preferred_element_type=jnp.float32)            # (GB, Hp, R) f32
    o_ref[...] = y.astype(o_ref.dtype)


def _spectral_core_pallas(xg, fwd_tab, inv_tab, wr_exp, wi_exp, C, B):
    """xg: (M, Hp, R) bf16; fwd_tab: (M, Lp, Hp) bf16; inv_tab: (M, Hp, Lp) bf16;
       wr_exp/wi_exp: (C, Lp, C*B) f32.  Returns (M, Hp, R) bf16."""
    M, Hp, R = xg.shape
    Lp = fwd_tab.shape[1]
    CB = C * B
    block_budget, vmem_limit = _vmem_config()
    cores = _num_tensorcores()

    # Per-m VMEM bytes: double-buffered pipeline blocks (bf16) plus an allowance for
    # the f32 matmul results / mix intermediates the compiler materialises.
    bytes_per_m = 2 * (Hp * R * 2 + Lp * Hp * 2 + Hp * Lp * 2 + Hp * R * 2)
    bytes_per_m += (Lp * R + Hp * R) * 4 * 2
    resident = 2 * 2 * (C * Lp * CB * 4)                      # wr/wi blocks
    gb = max(1, (block_budget - resident) // bytes_per_m)
    gb = min(gb, M)
    if cores > 1 and M > 1:
        gb = min(gb, pl.cdiv(M, cores))                       # >= 1 step per TensorCore
    grid_m = pl.cdiv(M, gb)
    if cores > 1:
        grid_m = _round_up(grid_m, cores)                     # even step count across TCs
    Mp = grid_m * gb

    # Pad the m axis only when the grid rounding requires it (no-op on 1-TC chips
    # whenever everything fits in one step).
    xg = _pad_axis(xg, 0, Mp)
    fwd_tab = _pad_axis(fwd_tab, 0, Mp)
    inv_tab = _pad_axis(inv_tab, 0, Mp)

    kernel = functools.partial(_sfno_fused_kernel, C, B)
    out = pl.pallas_call(
        kernel,
        out_shape=jax.ShapeDtypeStruct((Mp, Hp, R), jnp.bfloat16),
        grid=(grid_m,),
        in_specs=[
            pl.BlockSpec((gb, Hp, R), lambda g: (g, 0, 0)),
            pl.BlockSpec((gb, Lp, Hp), lambda g: (g, 0, 0)),
            pl.BlockSpec((gb, Hp, Lp), lambda g: (g, 0, 0)),
            pl.BlockSpec((C, Lp, CB), lambda g: (0, 0, 0)),
            pl.BlockSpec((C, Lp, CB), lambda g: (0, 0, 0)),
        ],
        out_specs=pl.BlockSpec((gb, Hp, R), lambda g: (g, 0, 0)),
        compiler_params=pltpu.CompilerParams(
            dimension_semantics=("parallel",),
            vmem_limit_bytes=vmem_limit),
    )(xg, fwd_tab, inv_tab, wr_exp, wi_exp)
    return out[:M]


def _spectral_core_reference(xg, fwd_tab, inv_tab, wr_exp, wi_exp, C, B):
    """Plain-JAX mirror of the fused kernel (same layout / dtypes), for validation."""
    CB = C * B
    coeff = jnp.einsum('mlh,mhr->mlr', fwd_tab, xg, preferred_element_type=jnp.float32)
    cr = coeff[..., :CB]
    ci = coeff[..., CB:]
    acc_r = 0.0
    acc_i = 0.0
    for i in range(C):
        cri = jnp.concatenate([cr[..., i * B:(i + 1) * B]] * C, axis=-1)
        cii = jnp.concatenate([ci[..., i * B:(i + 1) * B]] * C, axis=-1)
        acc_r = acc_r + cri * wr_exp[i] - cii * wi_exp[i]
        acc_i = acc_i + cri * wi_exp[i] + cii * wr_exp[i]
    mixed = jnp.concatenate([acc_r, acc_i], axis=-1).astype(jnp.bfloat16)
    y = jnp.einsum('mhl,mlr->mhr', inv_tab, mixed, preferred_element_type=jnp.float32)
    return y.astype(jnp.bfloat16)


# ----------------------------------------------------------------------------
# SpectralFilterLayer forward (linear filter = SpectralConvS2)
# ----------------------------------------------------------------------------
def spectral_filter_forward(x, fwd_tab, inv_tab, qw, wr, wi, bias, *, use_pallas=True):
    B, C, H, W = x.shape
    residual = x                       # SpectralConvS2 returns (filtered, residual)
    mmax, Lp, Hp = fwd_tab.shape
    CB = C * B

    # 1) quadrature weights + 2*pi factor folded into x, then longitude FFT.
    # TODO(synk): FFT has no clean Pallas TPU primitive; performed in plain JAX.
    xq = x.astype(jnp.float32) * qw[None, None, :, None]
    xhat = jnp.fft.rfft(xq, axis=-1, norm="forward")              # (B,C,H,mmax) cplx
    # canonical kernel layout (lanes = reim x chan x batch); real/imag transposed
    # separately so no stacked 5-D intermediate is materialised.
    xr = jnp.transpose(jnp.real(xhat), (3, 2, 1, 0)).reshape(mmax, H, CB)
    xi = jnp.transpose(jnp.imag(xhat), (3, 2, 1, 0)).reshape(mmax, H, CB)
    xg = jnp.concatenate([xr, xi], axis=-1)                       # (mmax, H, 2CB)
    xg = _pad_axis(xg, 1, Hp).astype(jnp.bfloat16)

    # lane-expanded complex mixing weights: (C, Lp, C*B), [i, l, o*B+b] = w[i, o, l]
    wr_exp = _pad_axis(jnp.repeat(jnp.transpose(wr, (0, 2, 1)), B, axis=-1), 1, Lp)
    wi_exp = _pad_axis(jnp.repeat(jnp.transpose(wi, (0, 2, 1)), B, axis=-1), 1, Lp)
    wr_exp = wr_exp.astype(jnp.float32)
    wi_exp = wi_exp.astype(jnp.float32)

    # 2) fused SHT -> block-diagonal complex mix -> inverse SHT (Pallas)
    core = _spectral_core_pallas if use_pallas else _spectral_core_reference
    s = core(xg, fwd_tab, inv_tab, wr_exp, wi_exp, C, B)          # (mmax, Hp, 2CB) bf16

    # 3) back to NCHW + inverse longitude FFT + bias (upcast only here)
    s = s[:, :H, :].astype(jnp.float32)
    yr = jnp.transpose(s[..., :CB].reshape(mmax, H, C, B), (3, 2, 1, 0))   # (B,C,H,M)
    yi = jnp.transpose(s[..., CB:].reshape(mmax, H, C, B), (3, 2, 1, 0))
    y = jnp.fft.irfft(yr + 1j * yi, n=W, axis=-1, norm="forward")          # (B,C,H,W)
    y = y + bias                                                   # bias (1,C,1,1)
    return y.astype(x.dtype), residual


if __name__ == "__main__":
    # Small deterministic example consistent with the module:
    # embed_dim=4, batch=2, spherical grid nlat=16 x nlon=32.
    B, C = 2, 4
    nlat, nlon = 16, 32

    fwd_tab, inv_tab, qw, lmax, mmax, Hp, Lp = make_sht_tables(nlat, nlon)

    key = jax.random.PRNGKey(0)
    kx, kwr, kwi = jax.random.split(key, 3)
    x = jax.random.normal(kx, (B, C, nlat, nlon), dtype=jnp.float32)

    # SpectralConvS2 weight: complex block-diagonal operator -> per-l channel-mixing
    # blocks (in_channels, out_channels, modes_lat); scale ~ sqrt(1/in_ch).
    scale = float(np.sqrt(1.0 / C))
    wr = scale * jax.random.normal(kwr, (C, C, lmax), dtype=jnp.float32)
    wi = scale * jax.random.normal(kwi, (C, C, lmax), dtype=jnp.float32)
    bias = jnp.zeros((1, C, 1, 1), dtype=jnp.float32)   # bias=True, zero-initialized

    fwd_fn = jax.jit(spectral_filter_forward, static_argnames=("use_pallas",))
    y, residual = fwd_fn(x, fwd_tab, inv_tab, qw, wr, wi, bias)
    jax.block_until_ready(y)
    jax.block_until_ready(residual)

    # Cross-check the Pallas path against identical plain-JAX math.
    y_ref, _ = spectral_filter_forward(x, fwd_tab, inv_tab, qw, wr, wi, bias,
                                       use_pallas=False)
    err = float(jnp.max(jnp.abs(y - y_ref)))
    ref_scale = float(jnp.max(jnp.abs(y_ref))) + 1e-6

    assert y.shape == x.shape and residual.shape == x.shape
    assert bool(jnp.all(jnp.isfinite(y)))
    assert err <= 2e-2 * ref_scale + 1e-3, f"mismatch: err={err} scale={ref_scale}"
    print("KERNEL_OK")
</pallas_src>

<mosaic_0001>
module attributes {stable_mosaic.version = 11 : i64} {
  func.func @_sfno_fused_kernel(%arg0: i32, %arg1: memref<17x16x16xbf16, #tpu.memory_space<vmem>>, %arg2: memref<17x16x16xbf16, #tpu.memory_space<vmem>>, %arg3: memref<17x16x16xbf16, #tpu.memory_space<vmem>>, %arg4: memref<4x16x8xf32, #tpu.memory_space<vmem>>, %arg5: memref<4x16x8xf32, #tpu.memory_space<vmem>>, %arg6: memref<17x16x16xbf16, #tpu.memory_space<vmem>>) attributes {dimension_semantics = [#tpu.dimension_semantics<parallel>], iteration_bounds = array<i64: 1>, scalar_prefetch = 0 : i64, scratch_operands = 0 : i64, tpu.core_type = #tpu.core_type<tc>, window_params = [{transform_indices = @transform_0, window_bounds = array<i64: 17, 16, 16>}, {transform_indices = @transform_1, window_bounds = array<i64: 17, 16, 16>}, {transform_indices = @transform_2, window_bounds = array<i64: 17, 16, 16>}, {pipeline_mode = #tpu.pipeline_mode<synchronous>, transform_indices = @transform_3, window_bounds = array<i64: 4, 16, 8>}, {pipeline_mode = #tpu.pipeline_mode<synchronous>, transform_indices = @transform_4, window_bounds = array<i64: 4, 16, 8>}, {transform_indices = @transform_5, window_bounds = array<i64: 17, 16, 16>}]} {
    %c0 = arith.constant 0 : index
    %c0_0 = arith.constant 0 : index
    %c0_1 = arith.constant 0 : index
    %0 = vector.load %arg2[%c0, %c0_0, %c0_1] : memref<17x16x16xbf16, #tpu.memory_space<vmem>>, vector<17x16x16xbf16>
    %c0_2 = arith.constant 0 : index
    %c0_3 = arith.constant 0 : index
    %c0_4 = arith.constant 0 : index
    %1 = vector.load %arg1[%c0_2, %c0_3, %c0_4] : memref<17x16x16xbf16, #tpu.memory_space<vmem>>, vector<17x16x16xbf16>
    "tpu.trace_start"() <{level = 10 : i32, message = "glh,ghr->glr"}> : () -> ()
    %cst = arith.constant dense<0.000000e+00> : vector<17x16x16xf32>
    %2 = tpu.matmul %0, %1, %cst {dimension_numbers = #tpu.dot_dimension_numbers<[2], [1], [1], [2], [0, 0, 0, 1, 1, 2], [0], [0]>} : vector<17x16x16xbf16>, vector<17x16x16xbf16>, vector<17x16x16xf32> -> vector<17x16x16xf32>
    "tpu.trace_stop"() : () -> ()
    %3 = vector.extract_strided_slice %2 {offsets = [0, 0, 0], sizes = [17, 16, 8], strides = [1, 1, 1]} : vector<17x16x16xf32> to vector<17x16x8xf32>
    %4 = vector.extract_strided_slice %2 {offsets = [0, 0, 8], sizes = [17, 16, 8], strides = [1, 1, 1]} : vector<17x16x16xf32> to vector<17x16x8xf32>
    %5 = vector.extract_strided_slice %3 {offsets = [0, 0, 0], sizes = [17, 16, 2], strides = [1, 1, 1]} : vector<17x16x8xf32> to vector<17x16x2xf32>
    %6 = tpu.concatenate %5, %5, %5, %5 in 2 : vector<17x16x2xf32>, vector<17x16x2xf32>, vector<17x16x2xf32>, vector<17x16x2xf32> -> vector<17x16x8xf32>
    %7 = vector.extract_strided_slice %4 {offsets = [0, 0, 0], sizes = [17, 16, 2], strides = [1, 1, 1]} : vector<17x16x8xf32> to vector<17x16x2xf32>
    %8 = tpu.concatenate %7, %7, %7, %7 in 2 : vector<17x16x2xf32>, vector<17x16x2xf32>, vector<17x16x2xf32>, vector<17x16x2xf32> -> vector<17x16x8xf32>
    %c0_5 = arith.constant 0 : index
    %c0_6 = arith.constant 0 : index
    %c0_7 = arith.constant 0 : index
    %9 = vector.load %arg4[%c0_5, %c0_6, %c0_7] : memref<4x16x8xf32, #tpu.memory_space<vmem>>, vector<1x16x8xf32>
    %10 = vector.shape_cast %9 : vector<1x16x8xf32> to vector<16x8xf32>
    %c0_8 = arith.constant 0 : index
    %c0_9 = arith.constant 0 : index
    %c0_10 = arith.constant 0 : index
    %11 = vector.load %arg5[%c0_8, %c0_9, %c0_10] : memref<4x16x8xf32, #tpu.memory_space<vmem>>, vector<1x16x8xf32>
    %12 = vector.shape_cast %11 : vector<1x16x8xf32> to vector<16x8xf32>
    %13 = vector.shape_cast %10 : vector<16x8xf32> to vector<1x16x8xf32>
    %14 = vector.broadcast %13 : vector<1x16x8xf32> to vector<17x16x8xf32>
    %15 = arith.mulf %6, %14 : vector<17x16x8xf32>
    %16 = vector.shape_cast %12 : vector<16x8xf32> to vector<1x16x8xf32>
    %17 = vector.broadcast %16 : vector<1x16x8xf32> to vector<17x16x8xf32>
    %18 = arith.mulf %8, %17 : vector<17x16x8xf32>
    %19 = arith.subf %15, %18 : vector<17x16x8xf32>
    %20 = vector.shape_cast %12 : vector<16x8xf32> to vector<1x16x8xf32>
    %21 = vector.broadcast %20 : vector<1x16x8xf32> to vector<17x16x8xf32>
    %22 = arith.mulf %6, %21 : vector<17x16x8xf32>
    %23 = vector.shape_cast %10 : vector<16x8xf32> to vector<1x16x8xf32>
    %24 = vector.broadcast %23 : vector<1x16x8xf32> to vector<17x16x8xf32>
    %25 = arith.mulf %8, %24 : vector<17x16x8xf32>
    %26 = arith.addf %22, %25 : vector<17x16x8xf32>
    %27 = vector.extract_strided_slice %3 {offsets = [0, 0, 2], sizes = [17, 16, 2], strides = [1, 1, 1]} : vector<17x16x8xf32> to vector<17x16x2xf32>
    %28 = tpu.concatenate %27, %27, %27, %27 in 2 : vector<17x16x2xf32>, vector<17x16x2xf32>, vector<17x16x2xf32>, vector<17x16x2xf32> -> vector<17x16x8xf32>
    %29 = vector.extract_strided_slice %4 {offsets = [0, 0, 2], sizes = [17, 16, 2], strides = [1, 1, 1]} : vector<17x16x8xf32> to vector<17x16x2xf32>
    %30 = tpu.concatenate %29, %29, %29, %29 in 2 : vector<17x16x2xf32>, vector<17x16x2xf32>, vector<17x16x2xf32>, vector<17x16x2xf32> -> vector<17x16x8xf32>
    %c1 = arith.constant 1 : index
    %c0_11 = arith.constant 0 : index
    %c0_12 = arith.constant 0 : index
    %31 = vector.load %arg4[%c1, %c0_11, %c0_12] : memref<4x16x8xf32, #tpu.memory_space<vmem>>, vector<1x16x8xf32>
    %32 = vector.shape_cast %31 : vector<1x16x8xf32> to vector<16x8xf32>
    %c1_13 = arith.constant 1 : index
    %c0_14 = arith.constant 0 : index
    %c0_15 = arith.constant 0 : index
    %33 = vector.load %arg5[%c1_13, %c0_14, %c0_15] : memref<4x16x8xf32, #tpu.memory_space<vmem>>, vector<1x16x8xf32>
    %34 = vector.shape_cast %33 : vector<1x16x8xf32> to vector<16x8xf32>
    %35 = vector.shape_cast %32 : vector<16x8xf32> to vector<1x16x8xf32>
    %36 = vector.broadcast %35 : vector<1x16x8xf32> to vector<17x16x8xf32>
    %37 = arith.mulf %28, %36 : vector<17x16x8xf32>
    %38 = vector.shape_cast %34 : vector<16x8xf32> to vector<1x16x8xf32>
    %39 = vector.broadcast %38 : vector<1x16x8xf32> to vector<17x16x8xf32>
    %40 = arith.mulf %30, %39 : vector<17x16x8xf32>
    %41 = arith.subf %37, %40 : vector<17x16x8xf32>
    %42 = vector.shape_cast %34 : vector<16x8xf32> to vector<1x16x8xf32>
    %43 = vector.broadcast %42 : vector<1x16x8xf32> to vector<17x16x8xf32>
    %44 = arith.mulf %28, %43 : vector<17x16x8xf32>
    %45 = vector.shape_cast %32 : vector<16x8xf32> to vector<1x16x8xf32>
    %46 = vector.broadcast %45 : vector<1x16x8xf32> to vector<17x16x8xf32>
    %47 = arith.mulf %30, %46 : vector<17x16x8xf32>
    %48 = arith.addf %44, %47 : vector<17x16x8xf32>
    %49 = arith.addf %19, %41 : vector<17x16x8xf32>
    %50 = arith.addf %26, %48 : vector<17x16x8xf32>
    %51 = vector.extract_strided_slice %3 {offsets = [0, 0, 4], sizes = [17, 16, 2], strides = [1, 1, 1]} : vector<17x16x8xf32> to vector<17x16x2xf32>
    %52 = tpu.concatenate %51, %51, %51, %51 in 2 : vector<17x16x2xf32>, vector<17x16x2xf32>, vector<17x16x2xf32>, vector<17x16x2xf32> -> vector<17x16x8xf32>
    %53 = vector.extract_strided_slice %4 {offsets = [0, 0, 4], sizes = [17, 16, 2], strides = [1, 1, 1]} : vector<17x16x8xf32> to vector<17x16x2xf32>
    %54 = tpu.concatenate %53, %53, %53, %53 in 2 : vector<17x16x2xf32>, vector<17x16x2xf32>, vector<17x16x2xf32>, vector<17x16x2xf32> -> vector<17x16x8xf32>
    %c2 = arith.constant 2 : index
    %c0_16 = arith.constant 0 : index
    %c0_17 = arith.constant 0 : index
    %55 = vector.load %arg4[%c2, %c0_16, %c0_17] : memref<4x16x8xf32, #tpu.memory_space<vmem>>, vector<1x16x8xf32>
    %56 = vector.shape_cast %55 : vector<1x16x8xf32> to vector<16x8xf32>
    %c2_18 = arith.constant 2 : index
    %c0_19 = arith.constant 0 : index
    %c0_20 = arith.constant 0 : index
    %57 = vector.load %arg5[%c2_18, %c0_19, %c0_20] : memref<4x16x8xf32, #tpu.memory_space<vmem>>, vector<1x16x8xf32>
    %58 = vector.shape_cast %57 : vector<1x16x8xf32> to vector<16x8xf32>
    %59 = vector.shape_cast %56 : vector<16x8xf32> to vector<1x16x8xf32>
    %60 = vector.broadcast %59 : vector<1x16x8xf32> to vector<17x16x8xf32>
    %61 = arith.mulf %52, %60 : vector<17x16x8xf32>
    %62 = vector.shape_cast %58 : vector<16x8xf32> to vector<1x16x8xf32>
    %63 = vector.broadcast %62 : vector<1x16x8xf32> to vector<17x16x8xf32>
    %64 = arith.mulf %54, %63 : vector<17x16x8xf32>
    %65 = arith.subf %61, %64 : vector<17x16x8xf32>
    %66 = vector.shape_cast %58 : vector<16x8xf32> to vector<1x16x8xf32>
    %67 = vector.broadcast %66 : vector<1x16x8xf32> to vector<17x16x8xf32>
    %68 = arith.mulf %52, %67 : vector<17x16x8xf32>
    %69 = vector.shape_cast %56 : vector<16x8xf32> to vector<1x16x8xf32>
    %70 = vector.broadcast %69 : vector<1x16x8xf32> to vector<17x16x8xf32>
    %71 = arith.mulf %54, %70 : vector<17x16x8xf32>
    %72 = arith.addf %68, %71 : vector<17x16x8xf32>
    %73 = arith.addf %49, %65 : vector<17x16x8xf32>
    %74 = arith.addf %50, %72 : vector<17x16x8xf32>
    %75 = vector.extract_strided_slice %3 {offsets = [0, 0, 6], sizes = [17, 16, 2], strides = [1, 1, 1]} : vector<17x16x8xf32> to vector<17x16x2xf32>
    %76 = tpu.concatenate %75, %75, %75, %75 in 2 : vector<17x16x2xf32>, vector<17x16x2xf32>, vector<17x16x2xf32>, vector<17x16x2xf32> -> vector<17x16x8xf32>
    %77 = vector.extract_strided_slice %4 {offsets = [0, 0, 6], sizes = [17, 16, 2], strides = [1, 1, 1]} : vector<17x16x8xf32> to vector<17x16x2xf32>
    %78 = tpu.concatenate %77, %77, %77, %77 in 2 : vector<17x16x2xf32>, vector<17x16x2xf32>, vector<17x16x2xf32>, vector<17x16x2xf32> -> vector<17x16x8xf32>
    %c3 = arith.constant 3 : index
    %c0_21 = arith.constant 0 : index
    %c0_22 = arith.constant 0 : index
    %79 = vector.load %arg4[%c3, %c0_21, %c0_22] : memref<4x16x8xf32, #tpu.memory_space<vmem>>, vector<1x16x8xf32>
    %80 = vector.shape_cast %79 : vector<1x16x8xf32> to vector<16x8xf32>
    %c3_23 = arith.constant 3 : index
    %c0_24 = arith.constant 0 : index
    %c0_25 = arith.constant 0 : index
    %81 = vector.load %arg5[%c3_23, %c0_24, %c0_25] : memref<4x16x8xf32, #tpu.memory_space<vmem>>, vector<1x16x8xf32>
    %82 = vector.shape_cast %81 : vector<1x16x8xf32> to vector<16x8xf32>
    %83 = vector.shape_cast %80 : vector<16x8xf32> to vector<1x16x8xf32>
    %84 = vector.broadcast %83 : vector<1x16x8xf32> to vector<17x16x8xf32>
    %85 = arith.mulf %76, %84 : vector<17x16x8xf32>
    %86 = vector.shape_cast %82 : vector<16x8xf32> to vector<1x16x8xf32>
    %87 = vector.broadcast %86 : vector<1x16x8xf32> to vector<17x16x8xf32>
    %88 = arith.mulf %78, %87 : vector<17x16x8xf32>
    %89 = arith.subf %85, %88 : vector<17x16x8xf32>
    %90 = vector.shape_cast %82 : vector<16x8xf32> to vector<1x16x8xf32>
    %91 = vector.broadcast %90 : vector<1x16x8xf32> to vector<17x16x8xf32>
    %92 = arith.mulf %76, %91 : vector<17x16x8xf32>
    %93 = vector.shape_cast %80 : vector<16x8xf32> to vector<1x16x8xf32>
    %94 = vector.broadcast %93 : vector<1x16x8xf32> to vector<17x16x8xf32>
    %95 = arith.mulf %78, %94 : vector<17x16x8xf32>
    %96 = arith.addf %92, %95 : vector<17x16x8xf32>
    %97 = arith.addf %73, %89 : vector<17x16x8xf32>
    %98 = arith.addf %74, %96 : vector<17x16x8xf32>
    %99 = tpu.concatenate %97, %98 in 2 : vector<17x16x8xf32>, vector<17x16x8xf32> -> vector<17x16x16xf32>
    %100 = arith.truncf %99 : vector<17x16x16xf32> to vector<17x16x16xbf16>
    %c0_26 = arith.constant 0 : index
    %c0_27 = arith.constant 0 : index
    %c0_28 = arith.constant 0 : index
    %101 = vector.load %arg3[%c0_26, %c0_27, %c0_28] : memref<17x16x16xbf16, #tpu.memory_space<vmem>>, vector<17x16x16xbf16>
    "tpu.trace_start"() <{level = 10 : i32, message = "ghl,glr->ghr"}> : () -> ()
    %cst_29 = arith.constant dense<0.000000e+00> : vector<17x16x16xf32>
    %102 = tpu.matmul %101, %100, %cst_29 {dimension_numbers = #tpu.dot_dimension_numbers<[2], [1], [1], [2], [0, 0, 0, 1, 1, 2], [0], [0]>} : vector<17x16x16xbf16>, vector<17x16x16xbf16>, vector<17x16x16xf32> -> vector<17x16x16xf32>
    "tpu.trace_stop"() : () -> ()
    %103 = arith.truncf %102 : vector<17x16x16xf32> to vector<17x16x16xbf16>
    %c0_30 = arith.constant 0 : index
    %c0_31 = arith.constant 0 : index
    %c0_32 = arith.constant 0 : index
    %104 = vector.load %arg6[%c0_30, %c0_31, %c0_32] : memref<17x16x16xbf16, #tpu.memory_space<vmem>>, vector<17x16x16xbf16>
    tpu.vector_store %arg6[%c0_30, %c0_31, %c0_32], %103 {strides = array<i32>} : memref<17x16x16xbf16, #tpu.memory_space<vmem>>, vector<17x16x16xbf16>,
    return
  }
  func.func @transform_0(%arg0: i32) -> (i32, i32, i32) {
    %c0_i32 = arith.constant 0 : i32
    %c0_i32_0 = arith.constant 0 : i32
    %c0_i32_1 = arith.constant 0 : i32
    return %arg0, %c0_i32, %c0_i32_0 : i32, i32, i32
  }
  func.func @transform_1(%arg0: i32) -> (i32, i32, i32) {
    %c0_i32 = arith.constant 0 : i32
    %c0_i32_0 = arith.constant 0 : i32
    %c0_i32_1 = arith.constant 0 : i32
    return %arg0, %c0_i32, %c0_i32_0 : i32, i32, i32
  }
  func.func @transform_2(%arg0: i32) -> (i32, i32, i32) {
    %c0_i32 = arith.constant 0 : i32
    %c0_i32_0 = arith.constant 0 : i32
    %c0_i32_1 = arith.constant 0 : i32
    return %arg0, %c0_i32, %c0_i32_0 : i32, i32, i32
  }
  func.func @transform_3(%arg0: i32) -> (i32, i32, i32) {
    %c0_i32 = arith.constant 0 : i32
    %c0_i32_0 = arith.constant 0 : i32
    %c0_i32_1 = arith.constant 0 : i32
    %c0_i32_2 = arith.constant 0 : i32
    return %c0_i32, %c0_i32_0, %c0_i32_1 : i32, i32, i32
  }
  func.func @transform_4(%arg0: i32) -> (i32, i32, i32) {
    %c0_i32 = arith.constant 0 : i32
    %c0_i32_0 = arith.constant 0 : i32
    %c0_i32_1 = arith.constant 0 : i32
    %c0_i32_2 = arith.constant 0 : i32
    return %c0_i32, %c0_i32_0, %c0_i32_1 : i32, i32, i32
  }
  func.func @transform_5(%arg0: i32) -> (i32, i32, i32) {
    %c0_i32 = arith.constant 0 : i32
    %c0_i32_0 = arith.constant 0 : i32
    %c0_i32_1 = arith.constant 0 : i32
    return %arg0, %c0_i32, %c0_i32_0 : i32, i32, i32
  }
}

</mosaic_0001>

<llo_original>
// kernel: reverse.1
$region0: #{reverse.1}
  %s0 = inlined_call_operand.vmem [shape: f32[2,4,16,15], index: 0, kind: input, shape index: {}]
  %s1 = inlined_call_operand.vmem [shape: f32[2,4,16,15], index: 1, kind: output, shape index: {}]
  %v2 = vlaneseq
  %v3 = vsub.s32 14, %v2
  %4 = vset.pattern.permute.xlu0 %v3
  $region1: #{reverse.1} parent=0
    #allocation0 [shape = 'u8[65536]{0}', space=vmem, size = 0x10000, scoped, tag = 'operand span for operand 0']
    #allocation1 [shape = 'u8[65536]{0}', space=vmem, size = 0x10000, scoped, tag = 'operand span for operand 1']
    // Predicated region
    $region2: #{reverse.1} parent=1 // pred_check
      _
    $region3: #{reverse.1} parent=1 // pred_check_branch
      %6 = sbr.rel (0) target = $region5
    $region4: #{reverse.1} parent=1 // pred_region
      // Predicated region
      $region6: #{reverse.1} parent=4 // pred_check
        _
      $region7: #{reverse.1} parent=4 // pred_check_branch
        %8 = sbr.rel (0) target = $region9
      $region8: #{reverse.1} parent=4 // pred_region
        // Predicated region
        $region21: #{reverse.1} parent=8 // pred_check
          _
        $region22: #{reverse.1} parent=8 // pred_check_branch
          %53 = sbr.rel (0) target = $region24
        $region23: #{reverse.1} parent=8 // pred_region
          loop: start=0, step=1, limit=1
          $region25: #{reverse.1} parent=23 // loop_pre_header
            _
          $region26: #{reverse.1} parent=23 // loop_header
            %s55 = sphi 0, %s59
            %p56 = scmp.ge.s32.totalorder %s55, 1
            %s60 = sphi %s0, %s0
            %s61 = sphi [#allocation0], [#allocation0]
          $region27: #{reverse.1} parent=23 // loop_header_branch
            %58 = sbr.rel (%p56) target = $region31
          $region28: #{reverse.1} parent=23 // loop_body
            %v62 = vld [vmem:[%s60] sm:$0xff]
            %63 = vst [vmem:[%s61] sm:$0xff] %v62
            %v64 = vld [vmem:[%s60 + $0x8] sm:$0xff]
            %65 = vst [vmem:[%s61 + $0x8] sm:$0xff] %v64
            %v66 = vld [vmem:[%s60 + $0x10] sm:$0xff]
            %67 = vst [vmem:[%s61 + $0x10] sm:$0xff] %v66
            %v68 = vld [vmem:[%s60 + $0x18] sm:$0xff]
            %69 = vst [vmem:[%s61 + $0x18] sm:$0xff] %v68
            %v70 = vld [vmem:[%s60 + $0x20] sm:$0xff]
            %71 = vst [vmem:[%s61 + $0x20] sm:$0xff] %v70
            %v72 = vld [vmem:[%s60 + $0x28] sm:$0xff]
            %73 = vst [vmem:[%s61 + $0x28] sm:$0xff] %v72
            %v74 = vld [vmem:[%s60 + $0x30] sm:$0xff]
            %75 = vst [vmem:[%s61 + $0x30] sm:$0xff] %v74
            %v76 = vld [vmem:[%s60 + $0x38] sm:$0xff]
            %77 = vst [vmem:[%s61 + $0x38] sm:$0xff] %v76
            %v78 = vld [vmem:[%s60 + $0x40] sm:$0xff]
            %79 = vst [vmem:[%s61 + $0x40] sm:$0xff] %v78
            %v80 = vld [vmem:[%s60 + $0x48] sm:$0xff]
            %81 = vst [vmem:[%s61 + $0x48] sm:$0xff] %v80
            %v82 = vld [vmem:[%s60 + $0x50] sm:$0xff]
            %83 = vst [vmem:[%s61 + $0x50] sm:$0xff] %v82
            %v84 = vld [vmem:[%s60 + $0x58] sm:$0xff]
            %85 = vst [vmem:[%s61 + $0x58] sm:$0xff] %v84
            %v86 = vld [vmem:[%s60 + $0x60] sm:$0xff]
            %87 = vst [vmem:[%s61 + $0x60] sm:$0xff] %v86
            %v88 = vld [vmem:[%s60 + $0x68] sm:$0xff]
            %89 = vst [vmem:[%s61 + $0x68] sm:$0xff] %v88
            %v90 = vld [vmem:[%s60 + $0x70] sm:$0xff]
            %91 = vst [vmem:[%s61 + $0x70] sm:$0xff] %v90
            %v92 = vld [vmem:[%s60 + $0x78] sm:$0xff]
            %93 = vst [vmem:[%s61 + $0x78] sm:$0xff] %v92
          $region29: #{reverse.1} parent=23 // loop_footer
            %s59 = sadd.s32 1, %s55
          $region30: #{reverse.1} parent=23 // loop_footer_branch
            %54 = sbr.rel target = $region26
          $region31: #{reverse.1} parent=23 // loop_exit
            _
        $region24: #{reverse.1} parent=8 // pred_fallthru
          _
        // Predicated region
        $region32: #{reverse.1} parent=8 // pred_check
          _
        $region33: #{reverse.1} parent=8 // pred_check_branch
          %95 = sbr.rel target = $region35
        $region34: #{reverse.1} parent=8 // pred_region
          _
        $region35: #{reverse.1} parent=8 // pred_fallthru
          _
      $region9: #{reverse.1} parent=4 // pred_fallthru
        _
      // Predicated region
      $region10: #{reverse.1} parent=4 // pred_check
        _
      $region11: #{reverse.1} parent=4 // pred_check_branch
        %10 = sbr.rel target = $region13
      $region12: #{reverse.1} parent=4 // pred_region
        loop: start=0, step=1, limit=1
        $region14: #{reverse.1} parent=12 // loop_pre_header
          _
        $region15: #{reverse.1} parent=12 // loop_header
          %s13 = sphi 0, %s17
          %p14 = scmp.ge.s32.totalorder %s13, 1
          %s18 = sphi %s0, %s0
          %s19 = sphi [#allocation0], [#allocation0]
        $region16: #{reverse.1} parent=12 // loop_header_branch
          %16 = sbr.rel (%p14) target = $region20
        $region17: #{reverse.1} parent=12 // loop_body
          %v20 = vld [vmem:[%s18] sm:$0xff]
          %21 = vst [vmem:[%s19] sm:$0xff] %v20
          %v22 = vld [vmem:[%s18 + $0x8] sm:$0xff]
          %23 = vst [vmem:[%s19 + $0x8] sm:$0xff] %v22
          %v24 = vld [vmem:[%s18 + $0x10] sm:$0xff]
          %25 = vst [vmem:[%s19 + $0x10] sm:$0xff] %v24
          %v26 = vld [vmem:[%s18 + $0x18] sm:$0xff]
          %27 = vst [vmem:[%s19 + $0x18] sm:$0xff] %v26
          %v28 = vld [vmem:[%s18 + $0x20] sm:$0xff]
          %29 = vst [vmem:[%s19 + $0x20] sm:$0xff] %v28
          %v30 = vld [vmem:[%s18 + $0x28] sm:$0xff]
          %31 = vst [vmem:[%s19 + $0x28] sm:$0xff] %v30
          %v32 = vld [vmem:[%s18 + $0x30] sm:$0xff]
          %33 = vst [vmem:[%s19 + $0x30] sm:$0xff] %v32
          %v34 = vld [vmem:[%s18 + $0x38] sm:$0xff]
          %35 = vst [vmem:[%s19 + $0x38] sm:$0xff] %v34
          %v36 = vld [vmem:[%s18 + $0x40] sm:$0xff]
          %37 = vst [vmem:[%s19 + $0x40] sm:$0xff] %v36
          %v38 = vld [vmem:[%s18 + $0x48] sm:$0xff]
          %39 = vst [vmem:[%s19 + $0x48] sm:$0xff] %v38
          %v40 = vld [vmem:[%s18 + $0x50] sm:$0xff]
          %41 = vst [vmem:[%s19 + $0x50] sm:$0xff] %v40
          %v42 = vld [vmem:[%s18 + $0x58] sm:$0xff]
          %43 = vst [vmem:[%s19 + $0x58] sm:$0xff] %v42
          %v44 = vld [vmem:[%s18 + $0x60] sm:$0xff]
          %45 = vst [vmem:[%s19 + $0x60] sm:$0xff] %v44
          %v46 = vld [vmem:[%s18 + $0x68] sm:$0xff]
          %47 = vst [vmem:[%s19 + $0x68] sm:$0xff] %v46
          %v48 = vld [vmem:[%s18 + $0x70] sm:$0xff]
          %49 = vst [vmem:[%s19 + $0x70] sm:$0xff] %v48
          %v50 = vld [vmem:[%s18 + $0x78] sm:$0xff]
          %51 = vst [vmem:[%s19 + $0x78] sm:$0xff] %v50
        $region18: #{reverse.1} parent=12 // loop_footer
          %s17 = sadd.s32 1, %s13
        $region19: #{reverse.1} parent=12 // loop_footer_branch
          %12 = sbr.rel target = $region15
        $region20: #{reverse.1} parent=12 // loop_exit
          _
      $region13: #{reverse.1} parent=4 // pred_fallthru
        _
    $region5: #{reverse.1} parent=1 // pred_fallthru
      _
    %96 = vnop
    %v97 = vld [vmem:[#allocation0] sm:$0xff]
    %98 = vperm.xlu0 %4, %v97
    %v99 = vpop.permute.xlu0 %98
    %100 = vst [vmem:[#allocation1] sm:$0xff] %v99
    %s101 = scalar_lea.vmem [#allocation1], 8
    %s102 = scalar_lea.vmem [#allocation0], 8
    %v103 = vld [vmem:[%s102] sm:$0xff]
    %104 = vperm.xlu0 %4, %v103
    %v105 = vpop.permute.xlu0 %104
    %106 = vst [vmem:[%s101] sm:$0xff] %v105
    %s107 = scalar_lea.vmem [#allocation1], 16
    %s108 = scalar_lea.vmem [#allocation0], 16
    %v109 = vld [vmem:[%s108] sm:$0xff]
    %110 = vperm.xlu0 %4, %v109
    %v111 = vpop.permute.xlu0 %110
    %112 = vst [vmem:[%s107] sm:$0xff] %v111
    %s113 = scalar_lea.vmem %s107, 8 [#allocation1]
    %s114 = scalar_lea.vmem %s108, 8 [#allocation0]
    %v115 = vld [vmem:[%s114] sm:$0xff]
    %116 = vperm.xlu0 %4, %v115
    %v117 = vpop.permute.xlu0 %116
    %118 = vst [vmem:[%s113] sm:$0xff] %v117
    %s119 = scalar_lea.vmem [#allocation1], 32
    %s120 = scalar_lea.vmem [#allocation0], 32
    %v121 = vld [vmem:[%s120] sm:$0xff]
    %122 = vperm.xlu0 %4, %v121
    %v123 = vpop.permute.xlu0 %122
    %124 = vst [vmem:[%s119] sm:$0xff] %v123
    %s125 = scalar_lea.vmem %s119, 8 [#allocation1]
    %s126 = scalar_lea.vmem %s120, 8 [#allocation0]
    %v127 = vld [vmem:[%s126] sm:$0xff]
    %128 = vperm.xlu0 %4, %v127
    %v129 = vpop.permute.xlu0 %128
    %130 = vst [vmem:[%s125] sm:$0xff] %v129
    %s131 = scalar_lea.vmem [#allocation1], 48
    %s132 = scalar_lea.vmem [#allocation0], 48
    %v133 = vld [vmem:[%s132] sm:$0xff]
    %134 = vperm.xlu0 %4, %v133
    %v135 = vpop.permute.xlu0 %134
    %136 = vst [vmem:[%s131] sm:$0xff] %v135
    %s137 = scalar_lea.vmem %s131, 8 [#allocation1]
    %s138 = scalar_lea.vmem %s132, 8 [#allocation0]
    %v139 = vld [vmem:[%s138] sm:$0xff]
    %140 = vperm.xlu0 %4, %v139
    %v141 = vpop.permute.xlu0 %140
    %142 = vst [vmem:[%s137] sm:$0xff] %v141
    %s143 = scalar_lea.vmem [#allocation1], 64
    %s144 = scalar_lea.vmem [#allocation0], 64
    %v145 = vld [vmem:[%s144] sm:$0xff]
    %146 = vperm.xlu0 %4, %v145
    %v147 = vpop.permute.xlu0 %146
    %148 = vst [vmem:[%s143] sm:$0xff] %v147
    %s149 = scalar_lea.vmem %s143, 8 [#allocation1]
    %s150 = scalar_lea.vmem %s144, 8 [#allocation0]
    %v151 = vld [vmem:[%s150] sm:$0xff]
    %152 = vperm.xlu0 %4, %v151
    %v153 = vpop.permute.xlu0 %152
    %154 = vst [vmem:[%s149] sm:$0xff] %v153
    %s155 = scalar_lea.vmem [#allocation1], 80
    %s156 = scalar_lea.vmem [#allocation0], 80
    %v157 = vld [vmem:[%s156] sm:$0xff]
    %158 = vperm.xlu0 %4, %v157
    %v159 = vpop.permute.xlu0 %158
    %160 = vst [vmem:[%s155] sm:$0xff] %v159
    %s161 = scalar_lea.vmem %s155, 8 [#allocation1]
    %s162 = scalar_lea.vmem %s156, 8 [#allocation0]
    %v163 = vld [vmem:[%s162] sm:$0xff]
    %164 = vperm.xlu0 %4, %v163
    %v165 = vpop.permute.xlu0 %164
    %166 = vst [vmem:[%s161] sm:$0xff] %v165
    %s167 = scalar_lea.vmem [#allocation1], 96
    %s168 = scalar_lea.vmem [#allocation0], 96
    %v169 = vld [vmem:[%s168] sm:$0xff]
    %170 = vperm.xlu0 %4, %v169
    %v171 = vpop.permute.xlu0 %170
    %172 = vst [vmem:[%s167] sm:$0xff] %v171
    %s173 = scalar_lea.vmem %s167, 8 [#allocation1]
    %s174 = scalar_lea.vmem %s168, 8 [#allocation0]
    %v175 = vld [vmem:[%s174] sm:$0xff]
    %176 = vperm.xlu0 %4, %v175
    %v177 = vpop.permute.xlu0 %176
    %178 = vst [vmem:[%s173] sm:$0xff] %v177
    %s179 = scalar_lea.vmem [#allocation1], 112
    %s180 = scalar_lea.vmem [#allocation0], 112
    %v181 = vld [vmem:[%s180] sm:$0xff]
    %182 = vperm.xlu0 %4, %v181
    %v183 = vpop.permute.xlu0 %182
    %184 = vst [vmem:[%s179] sm:$0xff] %v183
    %s185 = scalar_lea.vmem %s179, 8 [#allocation1]
    %s186 = scalar_lea.vmem %s180, 8 [#allocation0]
    %v187 = vld [vmem:[%s186] sm:$0xff]
    %188 = vperm.xlu0 %4, %v187
    %v189 = vpop.permute.xlu0 %188
    %190 = vst [vmem:[%s185] sm:$0xff] %v189
    // Predicated region
    $region36: #{reverse.1} parent=1 // pred_check
      _
    $region37: #{reverse.1} parent=1 // pred_check_branch
      %192 = sbr.rel (0) target = $region39
    $region38: #{reverse.1} parent=1 // pred_region
      // Predicated region
      $region40: #{reverse.1} parent=38 // pred_check
        _
      $region41: #{reverse.1} parent=38 // pred_check_branch
        %194 = sbr.rel (0) target = $region43
      $region42: #{reverse.1} parent=38 // pred_region
        // Predicated region
        $region55: #{reverse.1} parent=42 // pred_check
          _
        $region56: #{reverse.1} parent=42 // pred_check_branch
          %239 = sbr.rel (0) target = $region58
        $region57: #{reverse.1} parent=42 // pred_region
          loop: start=0, step=1, limit=1
          $region59: #{reverse.1} parent=57 // loop_pre_header
            _
          $region60: #{reverse.1} parent=57 // loop_header
            %s241 = sphi 0, %s245
            %p242 = scmp.ge.s32.totalorder %s241, 1
            %s246 = sphi [#allocation1], [#allocation1]
            %s247 = sphi %s1, %s1
          $region61: #{reverse.1} parent=57 // loop_header_branch
            %244 = sbr.rel (%p242) target = $region65
          $region62: #{reverse.1} parent=57 // loop_body
            %v248 = vld [vmem:[%s246] sm:$0xff]
            %249 = vst [vmem:[%s247] sm:$0xff] %v248
            %v250 = vld [vmem:[%s246 + $0x8] sm:$0xff]
            %251 = vst [vmem:[%s247 + $0x8] sm:$0xff] %v250
            %v252 = vld [vmem:[%s246 + $0x10] sm:$0xff]
            %253 = vst [vmem:[%s247 + $0x10] sm:$0xff] %v252
            %v254 = vld [vmem:[%s246 + $0x18] sm:$0xff]
            %255 = vst [vmem:[%s247 + $0x18] sm:$0xff] %v254
            %v256 = vld [vmem:[%s246 + $0x20] sm:$0xff]
            %257 = vst [vmem:[%s247 + $0x20] sm:$0xff] %v256
            %v258 = vld [vmem:[%s246 + $0x28] sm:$0xff]
            %259 = vst [vmem:[%s247 + $0x28] sm:$0xff] %v258
            %v260 = vld [vmem:[%s246 + $0x30] sm:$0xff]
            %261 = vst [vmem:[%s247 + $0x30] sm:$0xff] %v260
            %v262 = vld [vmem:[%s246 + $0x38] sm:$0xff]
            %263 = vst [vmem:[%s247 + $0x38] sm:$0xff] %v262
            %v264 = vld [vmem:[%s246 + $0x40] sm:$0xff]
            %265 = vst [vmem:[%s247 + $0x40] sm:$0xff] %v264
            %v266 = vld [vmem:[%s246 + $0x48] sm:$0xff]
            %267 = vst [vmem:[%s247 + $0x48] sm:$0xff] %v266
            %v268 = vld [vmem:[%s246 + $0x50] sm:$0xff]
            %269 = vst [vmem:[%s247 + $0x50] sm:$0xff] %v268
            %v270 = vld [vmem:[%s246 + $0x58] sm:$0xff]
            %271 = vst [vmem:[%s247 + $0x58] sm:$0xff] %v270
            %v272 = vld [vmem:[%s246 + $0x60] sm:$0xff]
            %273 = vst [vmem:[%s247 + $0x60] sm:$0xff] %v272
            %v274 = vld [vmem:[%s246 + $0x68] sm:$0xff]
            %275 = vst [vmem:[%s247 + $0x68] sm:$0xff] %v274
            %v276 = vld [vmem:[%s246 + $0x70] sm:$0xff]
            %277 = vst [vmem:[%s247 + $0x70] sm:$0xff] %v276
            %v278 = vld [vmem:[%s246 + $0x78] sm:$0xff]
            %279 = vst [vmem:[%s247 + $0x78] sm:$0xff] %v278
          $region63: #{reverse.1} parent=57 // loop_footer
            %s245 = sadd.s32 1, %s241
          $region64: #{reverse.1} parent=57 // loop_footer_branch
            %240 = sbr.rel target = $region60
          $region65: #{reverse.1} parent=57 // loop_exit
            _
        $region58: #{reverse.1} parent=42 // pred_fallthru
          _
        // Predicated region
        $region66: #{reverse.1} parent=42 // pred_check
          _
        $region67: #{reverse.1} parent=42 // pred_check_branch
          %281 = sbr.rel target = $region69
        $region68: #{reverse.1} parent=42 // pred_region
          _
        $region69: #{reverse.1} parent=42 // pred_fallthru
          _
      $region43: #{reverse.1} parent=38 // pred_fallthru
        _
      // Predicated region
      $region44: #{reverse.1} parent=38 // pred_check
        _
      $region45: #{reverse.1} parent=38 // pred_check_branch
        %196 = sbr.rel target = $region47
      $region46: #{reverse.1} parent=38 // pred_region
        loop: start=0, step=1, limit=1
        $region48: #{reverse.1} parent=46 // loop_pre_header
          _
        $region49: #{reverse.1} parent=46 // loop_header
          %s199 = sphi 0, %s203
          %p200 = scmp.ge.s32.totalorder %s199, 1
          %s204 = sphi [#allocation1], [#allocation1]
          %s205 = sphi %s1, %s1
        $region50: #{reverse.1} parent=46 // loop_header_branch
          %202 = sbr.rel (%p200) target = $region54
        $region51: #{reverse.1} parent=46 // loop_body
          %v206 = vld [vmem:[%s204] sm:$0xff]
          %207 = vst [vmem:[%s205] sm:$0xff] %v206
          %v208 = vld [vmem:[%s204 + $0x8] sm:$0xff]
          %209 = vst [vmem:[%s205 + $0x8] sm:$0xff] %v208
          %v210 = vld [vmem:[%s204 + $0x10] sm:$0xff]
          %211 = vst [vmem:[%s205 + $0x10] sm:$0xff] %v210
          %v212 = vld [vmem:[%s204 + $0x18] sm:$0xff]
          %213 = vst [vmem:[%s205 + $0x18] sm:$0xff] %v212
          %v214 = vld [vmem:[%s204 + $0x20] sm:$0xff]
          %215 = vst [vmem:[%s205 + $0x20] sm:$0xff] %v214
          %v216 = vld [vmem:[%s204 + $0x28] sm:$0xff]
          %217 = vst [vmem:[%s205 + $0x28] sm:$0xff] %v216
          %v218 = vld [vmem:[%s204 + $0x30] sm:$0xff]
          %219 = vst [vmem:[%s205 + $0x30] sm:$0xff] %v218
          %v220 = vld [vmem:[%s204 + $0x38] sm:$0xff]
          %221 = vst [vmem:[%s205 + $0x38] sm:$0xff] %v220
          %v222 = vld [vmem:[%s204 + $0x40] sm:$0xff]
          %223 = vst [vmem:[%s205 + $0x40] sm:$0xff] %v222
          %v224 = vld [vmem:[%s204 + $0x48] sm:$0xff]
          %225 = vst [vmem:[%s205 + $0x48] sm:$0xff] %v224
          %v226 = vld [vmem:[%s204 + $0x50] sm:$0xff]
          %227 = vst [vmem:[%s205 + $0x50] sm:$0xff] %v226
          %v228 = vld [vmem:[%s204 + $0x58] sm:$0xff]
          %229 = vst [vmem:[%s205 + $0x58] sm:$0xff] %v228
          %v230 = vld [vmem:[%s204 + $0x60] sm:$0xff]
          %231 = vst [vmem:[%s205 + $0x60] sm:$0xff] %v230
          %v232 = vld [vmem:[%s204 + $0x68] sm:$0xff]
          %233 = vst [vmem:[%s205 + $0x68] sm:$0xff] %v232
          %v234 = vld [vmem:[%s204 + $0x70] sm:$0xff]
          %235 = vst [vmem:[%s205 + $0x70] sm:$0xff] %v234
          %v236 = vld [vmem:[%s204 + $0x78] sm:$0xff]
          %237 = vst [vmem:[%s205 + $0x78] sm:$0xff] %v236
        $region52: #{reverse.1} parent=46 // loop_footer
          %s203 = sadd.s32 1, %s199
        $region53: #{reverse.1} parent=46 // loop_footer_branch
          %198 = sbr.rel target = $region49
        $region54: #{reverse.1} parent=46 // loop_exit
          _
      $region47: #{reverse.1} parent=38 // pred_fallthru
        _
    $region39: #{reverse.1} parent=1 // pred_fallthru
      _
    %282 = vnop

// kernel: spectral_filter_forward.1
$region0: #{spectral_filter_forward.1}
  #allocation0 [shape = 'u32[]', space=smem, size = 0x4, offset = 0x4, fixed_abs, tag = 'smem constant byte address 0x4 - core index']
  #allocation1 [shape = 'u32[144,128]{1,0:T(1,128)}', space=vmem, size = 0x12000, scoped, tag = 'internal scratch']
  %s0 = inlined_call_operand.vmem [shape: bf16[17,16,16], index: 0, kind: input, shape index: {}]
  %s1 = inlined_call_operand.vmem [shape: bf16[17,16,16], index: 1, kind: input, shape index: {}]
  %s2 = inlined_call_operand.vmem [shape: bf16[17,16,16], index: 2, kind: input, shape index: {}]
  %s3 = inlined_call_operand.vmem [shape: f32[4,16,8], index: 3, kind: input, shape index: {}]
  %s4 = inlined_call_operand.vmem [shape: f32[4,16,8], index: 4, kind: input, shape index: {}]
  %s5 = inlined_call_operand.vmem [shape: bf16[17,16,16], index: 5, kind: output, shape index: {}]
  %s6 = sld [smem:[#allocation0]]
  $region30: #{spectral_filter_forward.1} parent=0
    _
  %s8 = ssub.s32 1, %s6
  %s9 = scalar_select 0, %s8, %s6
  // Predicated region
  $region2: #{spectral_filter_forward.1} parent=0 // pred_check
    _
  $region3: #{spectral_filter_forward.1} parent=0 // pred_check_branch
    %11 = sbr.rel (0) target = $region5
  $region4: #{spectral_filter_forward.1} parent=0 // pred_region
    _
  $region5: #{spectral_filter_forward.1} parent=0 // pred_fallthru
    _
  // Predicated region
  $region6: #{spectral_filter_forward.1} parent=0 // pred_check
    _
  $region7: #{spectral_filter_forward.1} parent=0 // pred_check_branch
    %13 = sbr.rel (0) target = $region9
  $region8: #{spectral_filter_forward.1} parent=0 // pred_region
    _
  $region9: #{spectral_filter_forward.1} parent=0 // pred_fallthru
    _
  // Predicated region
  $region10: #{spectral_filter_forward.1} parent=0 // pred_check
    _
  $region11: #{spectral_filter_forward.1} parent=0 // pred_check_branch
    %15 = sbr.rel (0) target = $region13
  $region12: #{spectral_filter_forward.1} parent=0 // pred_region
    _
  $region13: #{spectral_filter_forward.1} parent=0 // pred_fallthru
    _
  // Predicated region
  $region14: #{spectral_filter_forward.1} parent=0 // pred_check
    _
  $region15: #{spectral_filter_forward.1} parent=0 // pred_check_branch
    %17 = sbr.rel (0) target = $region17
  $region16: #{spectral_filter_forward.1} parent=0 // pred_region
    _
  $region17: #{spectral_filter_forward.1} parent=0 // pred_fallthru
    _
  // Predicated region
  $region18: #{spectral_filter_forward.1} parent=0 // pred_check
    _
  $region19: #{spectral_filter_forward.1} parent=0 // pred_check_branch
    %19 = sbr.rel (0) target = $region21
  $region20: #{spectral_filter_forward.1} parent=0 // pred_region
    _
  $region21: #{spectral_filter_forward.1} parent=0 // pred_fallthru
    _
  %v21 = vld [vmem:[%s1] sm:$0xf]
  %v22 = vld [vmem:[%s1 + $0x4] sm:$0xf]
  %v23 = vld [vmem:[%s1 + $0x8] sm:$0xf]
  %v24 = vld [vmem:[%s1 + $0xc] sm:$0xf]
  %v25 = vld [vmem:[%s1 + $0x10] sm:$0xf]
  %v26 = vld [vmem:[%s1 + $0x14] sm:$0xf]
  %v27 = vld [vmem:[%s1 + $0x18] sm:$0xf]
  %v28 = vld [vmem:[%s1 + $0x1c] sm:$0xf]
  %v29 = vld [vmem:[%s1 + $0x20] sm:$0xf]
  %v30 = vld [vmem:[%s1 + $0x24] sm:$0xf]
  %v31 = vld [vmem:[%s1 + $0x28] sm:$0xf]
  %v32 = vld [vmem:[%s1 + $0x2c] sm:$0xf]
  %v33 = vld [vmem:[%s1 + $0x30] sm:$0xf]
  %v34 = vld [vmem:[%s1 + $0x34] sm:$0xf]
  %v35 = vld [vmem:[%s1 + $0x38] sm:$0xf]
  %v36 = vld [vmem:[%s1 + $0x3c] sm:$0xf]
  %v37 = vld [vmem:[%s1 + $0x40] sm:$0xf]
  %v38 = vld [vmem:[%s1 + $0x44] sm:$0xf]
  %v39 = vld [vmem:[%s1 + $0x48] sm:$0xf]
  %v40 = vld [vmem:[%s1 + $0x4c] sm:$0xf]
  %v41 = vld [vmem:[%s1 + $0x50] sm:$0xf]
  %v42 = vld [vmem:[%s1 + $0x54] sm:$0xf]
  %v43 = vld [vmem:[%s1 + $0x58] sm:$0xf]
  %v44 = vld [vmem:[%s1 + $0x5c] sm:$0xf]
  %v45 = vld [vmem:[%s1 + $0x60] sm:$0xf]
  %v46 = vld [vmem:[%s1 + $0x64] sm:$0xf]
  %v47 = vld [vmem:[%s1 + $0x68] sm:$0xf]
  %v48 = vld [vmem:[%s1 + $0x6c] sm:$0xf]
  %v49 = vld [vmem:[%s1 + $0x70] sm:$0xf]
  %v50 = vld [vmem:[%s1 + $0x74] sm:$0xf]
  %v51 = vld [vmem:[%s1 + $0x78] sm:$0xf]
  %v52 = vld [vmem:[%s1 + $0x7c] sm:$0xf]
  %v53 = vld [vmem:[%s1 + $0x80] sm:$0xf]
  %v54 = vld [vmem:[%s1 + $0x84] sm:$0xf]
  %v55 = vld [vmem:[%s0] sm:$0xf]
  %v56 = vld [vmem:[%s0 + $0x4] sm:$0xf]
  %v57 = vld [vmem:[%s0 + $0x8] sm:$0xf]
  %v58 = vld [vmem:[%s0 + $0xc] sm:$0xf]
  %v59 = vld [vmem:[%s0 + $0x10] sm:$0xf]
  %v60 = vld [vmem:[%s0 + $0x14] sm:$0xf]
  %v61 = vld [vmem:[%s0 + $0x18] sm:$0xf]
  %v62 = vld [vmem:[%s0 + $0x1c] sm:$0xf]
  %v63 = vld [vmem:[%s0 + $0x20] sm:$0xf]
  %v64 = vld [vmem:[%s0 + $0x24] sm:$0xf]
  %v65 = vld [vmem:[%s0 + $0x28] sm:$0xf]
  %v66 = vld [vmem:[%s0 + $0x2c] sm:$0xf]
  %v67 = vld [vmem:[%s0 + $0x30] sm:$0xf]
  %v68 = vld [vmem:[%s0 + $0x34] sm:$0xf]
  %v69 = vld [vmem:[%s0 + $0x38] sm:$0xf]
  %v70 = vld [vmem:[%s0 + $0x3c] sm:$0xf]
  %v71 = vld [vmem:[%s0 + $0x40] sm:$0xf]
  %v72 = vld [vmem:[%s0 + $0x44] sm:$0xf]
  %v73 = vld [vmem:[%s0 + $0x48] sm:$0xf]
  %v74 = vld [vmem:[%s0 + $0x4c] sm:$0xf]
  %v75 = vld [vmem:[%s0 + $0x50] sm:$0xf]
  %v76 = vld [vmem:[%s0 + $0x54] sm:$0xf]
  %v77 = vld [vmem:[%s0 + $0x58] sm:$0xf]
  %v78 = vld [vmem:[%s0 + $0x5c] sm:$0xf]
  %v79 = vld [vmem:[%s0 + $0x60] sm:$0xf]
  %v80 = vld [vmem:[%s0 + $0x64] sm:$0xf]
  %v81 = vld [vmem:[%s0 + $0x68] sm:$0xf]
  %v82 = vld [vmem:[%s0 + $0x6c] sm:$0xf]
  %v83 = vld [vmem:[%s0 + $0x70] sm:$0xf]
  %v84 = vld [vmem:[%s0 + $0x74] sm:$0xf]
  %v85 = vld [vmem:[%s0 + $0x78] sm:$0xf]
  %v86 = vld [vmem:[%s0 + $0x7c] sm:$0xf]
  %v87 = vld [vmem:[%s0 + $0x80] sm:$0xf]
  %v88 = vld [vmem:[%s0 + $0x84] sm:$0xf]
  %v91 = vunpack.c.l.b16 %v21
  %v92 = vunpack.c.l.b16 %v22
  %v93 = vpack.c.b16 %v92, %v91
  %v96 = vunpack.c.l.b16 %v55
  %v97 = vunpack.c.l.b16 %v56
  %v98 = vpack.c.b16 %v97, %v96
  %vm100 = vcmask 130048
  %v102 = vsel %vm100, %v93, 0
  %104 = vmatprep.subr.bf16.mxu0 0
  %105 = vmatpush1.bf16.msra.mxu0 %v98
  %106 = vmatprep.subr.bf16.mxu0 0
  %107 = vmatpush1.bf16.msra.mxu0 0
  %108 = vmatprep.subr.bf16.mxu0 0
  %109 = vmatpush1.bf16.msra.mxu0 0
  %110 = vmatprep.subr.bf16.mxu0 0
  %111 = vmatpush1.bf16.msra.mxu0 0
  %112 = vmatprep.subr.bf16.mxu0 0
  %113 = vmatpush1.bf16.msra.mxu0 0
  %114 = vmatprep.subr.bf16.mxu0 0
  %115 = vmatpush1.bf16.msra.mxu0 0
  %116 = vmatprep.subr.bf16.mxu0 0
  %117 = vmatpush1.bf16.msra.mxu0 0
  %118 = vmatprep.subr.bf16.mxu0 0
  %119 = vmatpush1.bf16.msra.mxu0 0
  %120 = vmatprep.subr.bf16.mxu0 0
  %121 = vmatpush1.bf16.msra.mxu0 0
  %122 = vmatprep.subr.bf16.mxu0 0
  %123 = vmatpush1.bf16.msra.mxu0 0
  %124 = vmatprep.subr.bf16.mxu0 0
  %125 = vmatpush1.bf16.msra.mxu0 0
  %126 = vmatprep.subr.bf16.mxu0 0
  %127 = vmatpush1.bf16.msra.mxu0 0
  %128 = vmatprep.subr.bf16.mxu0 0
  %129 = vmatpush1.bf16.msra.mxu0 0
  %130 = vmatprep.subr.bf16.mxu0 0
  %131 = vmatpush1.bf16.msra.mxu0 0
  %132 = vmatprep.subr.bf16.mxu0 0
  %133 = vmatpush1.bf16.msra.mxu0 0
  %134 = vmatprep.subr.bf16.mxu0 0
  %135 = vmatpush1.bf16.msra.mxu0 0
  %136 = vmatprep.mubr.bf16.mxu0 0
  %137 = vmatmul.mubr.bf16.gmra.mrb[0].mxu0 %v102
  %v138 = vpop.f32.mrb[0].mxu0
  %v139 = vadd.f32 0.0, %v138
  %v140 = vpop.f32.mrb[0].mxu0
  %v141 = vpop.f32.mrb[0].mxu0
  %v142 = vadd.f32 0.0, %v141
  %v143 = vpop.f32.mrb[0].mxu0
  %144 = vdwg.mxu0
  %v147 = vunpack.c.l.b16 %v23
  %v148 = vunpack.c.l.b16 %v24
  %v149 = vpack.c.b16 %v148, %v147
  %v152 = vunpack.c.l.b16 %v57
  %v153 = vunpack.c.l.b16 %v58
  %v154 = vpack.c.b16 %v153, %v152
  %v157 = vsel %vm100, %v149, 0
  %159 = vmatprep.subr.bf16.mxu0 0
  %160 = vmatpush1.bf16.msra.mxu0 %v154
  %161 = vmatprep.subr.bf16.mxu0 0
  %162 = vmatpush1.bf16.msra.mxu0 0
  %163 = vmatprep.subr.bf16.mxu0 0
  %164 = vmatpush1.bf16.msra.mxu0 0
  %165 = vmatprep.subr.bf16.mxu0 0
  %166 = vmatpush1.bf16.msra.mxu0 0
  %167 = vmatprep.subr.bf16.mxu0 0
  %168 = vmatpush1.bf16.msra.mxu0 0
  %169 = vmatprep.subr.bf16.mxu0 0
  %170 = vmatpush1.bf16.msra.mxu0 0
  %171 = vmatprep.subr.bf16.mxu0 0
  %172 = vmatpush1.bf16.msra.mxu0 0
  %173 = vmatprep.subr.bf16.mxu0 0
  %174 = vmatpush1.bf16.msra.mxu0 0
  %175 = vmatprep.subr.bf16.mxu0 0
  %176 = vmatpush1.bf16.msra.mxu0 0
  %177 = vmatprep.subr.bf16.mxu0 0
  %178 = vmatpush1.bf16.msra.mxu0 0
  %179 = vmatprep.subr.bf16.mxu0 0
  %180 = vmatpush1.bf16.msra.mxu0 0
  %181 = vmatprep.subr.bf16.mxu0 0
  %182 = vmatpush1.bf16.msra.mxu0 0
  %183 = vmatprep.subr.bf16.mxu0 0
  %184 = vmatpush1.bf16.msra.mxu0 0
  %185 = vmatprep.subr.bf16.mxu0 0
  %186 = vmatpush1.bf16.msra.mxu0 0
  %187 = vmatprep.subr.bf16.mxu0 0
  %188 = vmatpush1.bf16.msra.mxu0 0
  %189 = vmatprep.subr.bf16.mxu0 0
  %190 = vmatpush1.bf16.msra.mxu0 0
  %191 = vmatprep.mubr.bf16.mxu0 0
  %192 = vmatmul.mubr.bf16.gmra.mrb[0].mxu0 %v157
  %v193 = vpop.f32.mrb[0].mxu0
  %v194 = vadd.f32 0.0, %v193
  %v195 = vpop.f32.mrb[0].mxu0
  %v196 = vpop.f32.mrb[0].mxu0
  %v197 = vadd.f32 0.0, %v196
  %v198 = vpop.f32.mrb[0].mxu0
  %199 = vdwg.mxu0
  %v202 = vunpack.c.l.b16 %v25
  %v203 = vunpack.c.l.b16 %v26
  %v204 = vpack.c.b16 %v203, %v202
  %v207 = vunpack.c.l.b16 %v59
  %v208 = vunpack.c.l.b16 %v60
  %v209 = vpack.c.b16 %v208, %v207
  %v212 = vsel %vm100, %v204, 0
  %214 = vmatprep.subr.bf16.mxu0 0
  %215 = vmatpush1.bf16.msra.mxu0 %v209
  %216 = vmatprep.subr.bf16.mxu0 0
  %217 = vmatpush1.bf16.msra.mxu0 0
  %218 = vmatprep.subr.bf16.mxu0 0
  %219 = vmatpush1.bf16.msra.mxu0 0
  %220 = vmatprep.subr.bf16.mxu0 0
  %221 = vmatpush1.bf16.msra.mxu0 0
  %222 = vmatprep.subr.bf16.mxu0 0
  %223 = vmatpush1.bf16.msra.mxu0 0
  %224 = vmatprep.subr.bf16.mxu0 0
  %225 = vmatpush1.bf16.msra.mxu0 0
  %226 = vmatprep.subr.bf16.mxu0 0
  %227 = vmatpush1.bf16.msra.mxu0 0
  %228 = vmatprep.subr.bf16.mxu0 0
  %229 = vmatpush1.bf16.msra.mxu0 0
  %230 = vmatprep.subr.bf16.mxu0 0
  %231 = vmatpush1.bf16.msra.mxu0 0
  %232 = vmatprep.subr.bf16.mxu0 0
  %233 = vmatpush1.bf16.msra.mxu0 0
  %234 = vmatprep.subr.bf16.mxu0 0
  %235 = vmatpush1.bf16.msra.mxu0 0
  %236 = vmatprep.subr.bf16.mxu0 0
  %237 = vmatpush1.bf16.msra.mxu0 0
  %238 = vmatprep.subr.bf16.mxu0 0
  %239 = vmatpush1.bf16.msra.mxu0 0
  %240 = vmatprep.subr.bf16.mxu0 0
  %241 = vmatpush1.bf16.msra.mxu0 0
  %242 = vmatprep.subr.bf16.mxu0 0
  %243 = vmatpush1.bf16.msra.mxu0 0
  %244 = vmatprep.subr.bf16.mxu0 0
  %245 = vmatpush1.bf16.msra.mxu0 0
  %246 = vmatprep.mubr.bf16.mxu0 0
  %247 = vmatmul.mubr.bf16.gmra.mrb[0].mxu0 %v212
  %v248 = vpop.f32.mrb[0].mxu0
  %v249 = vadd.f32 0.0, %v248
  %v250 = vpop.f32.mrb[0].mxu0
  %v251 = vpop.f32.mrb[0].mxu0
  %v252 = vadd.f32 0.0, %v251
  %v253 = vpop.f32.mrb[0].mxu0
  %254 = vdwg.mxu0
  %v257 = vunpack.c.l.b16 %v27
  %v258 = vunpack.c.l.b16 %v28
  %v259 = vpack.c.b16 %v258, %v257
  %v262 = vunpack.c.l.b16 %v61
  %v263 = vunpack.c.l.b16 %v62
  %v264 = vpack.c.b16 %v263, %v262
  %v267 = vsel %vm100, %v259, 0
  %269 = vmatprep.subr.bf16.mxu0 0
  %270 = vmatpush1.bf16.msra.mxu0 %v264
  %271 = vmatprep.subr.bf16.mxu0 0
  %272 = vmatpush1.bf16.msra.mxu0 0
  %273 = vmatprep.subr.bf16.mxu0 0
  %274 = vmatpush1.bf16.msra.mxu0 0
  %275 = vmatprep.subr.bf16.mxu0 0
  %276 = vmatpush1.bf16.msra.mxu0 0
  %277 = vmatprep.subr.bf16.mxu0 0
  %278 = vmatpush1.bf16.msra.mxu0 0
  %279 = vmatprep.subr.bf16.mxu0 0
  %280 = vmatpush1.bf16.msra.mxu0 0
  %281 = vmatprep.subr.bf16.mxu0 0
  %282 = vmatpush1.bf16.msra.mxu0 0
  %283 = vmatprep.subr.bf16.mxu0 0
  %284 = vmatpush1.bf16.msra.mxu0 0
  %285 = vmatprep.subr.bf16.mxu0 0
  %286 = vmatpush1.bf16.msra.mxu0 0
  %287 = vmatprep.subr.bf16.mxu0 0
  %288 = vmatpush1.bf16.msra.mxu0 0
  %289 = vmatprep.subr.bf16.mxu0 0
  %290 = vmatpush1.bf16.msra.mxu0 0
  %291 = vmatprep.subr.bf16.mxu0 0
  %292 = vmatpush1.bf16.msra.mxu0 0
  %293 = vmatprep.subr.bf16.mxu0 0
  %294 = vmatpush1.bf16.msra.mxu0 0
  %295 = vmatprep.subr.bf16.mxu0 0
  %296 = vmatpush1.bf16.msra.mxu0 0
  %297 = vmatprep.subr.bf16.mxu0 0
  %298 = vmatpush1.bf16.msra.mxu0 0
  %299 = vmatprep.subr.bf16.mxu0 0
  %300 = vmatpush1.bf16.msra.mxu0 0
  %301 = vmatprep.mubr.bf16.mxu0 0
  %302 = vmatmul.mubr.bf16.gmra.mrb[0].mxu0 %v267
  %v303 = vpop.f32.mrb[0].mxu0
  %v304 = vadd.f32 0.0, %v303
  %v305 = vpop.f32.mrb[0].mxu0
  %v306 = vpop.f32.mrb[0].mxu0
  %v307 = vadd.f32 0.0, %v306
  %v308 = vpop.f32.mrb[0].mxu0
  %309 = vdwg.mxu0
  %v312 = vunpack.c.l.b16 %v29
  %v313 = vunpack.c.l.b16 %v30
  %v314 = vpack.c.b16 %v313, %v312
  %v317 = vunpack.c.l.b16 %v63
  %v318 = vunpack.c.l.b16 %v64
  %v319 = vpack.c.b16 %v318, %v317
  %v322 = vsel %vm100, %v314, 0
  %324 = vmatprep.subr.bf16.mxu0 0
  %325 = vmatpush1.bf16.msra.mxu0 %v319
  %326 = vmatprep.subr.bf16.mxu0 0
  %327 = vmatpush1.bf16.msra.mxu0 0
  %328 = vmatprep.subr.bf16.mxu0 0
  %329 = vmatpush1.bf16.msra.mxu0 0
  %330 = vmatprep.subr.bf16.mxu0 0
  %331 = vmatpush1.bf16.msra.mxu0 0
  %332 = vmatprep.subr.bf16.mxu0 0
  %333 = vmatpush1.bf16.msra.mxu0 0
  %334 = vmatprep.subr.bf16.mxu0 0
  %335 = vmatpush1.bf16.msra.mxu0 0
  %336 = vmatprep.subr.bf16.mxu0 0
  %337 = vmatpush1.bf16.msra.mxu0 0
  %338 = vmatprep.subr.bf16.mxu0 0
  %339 = vmatpush1.bf16.msra.mxu0 0
  %340 = vmatprep.subr.bf16.mxu0 0
  %341 = vmatpush1.bf16.msra.mxu0 0
  %342 = vmatprep.subr.bf16.mxu0 0
  %343 = vmatpush1.bf16.msra.mxu0 0
  %344 = vmatprep.subr.bf16.mxu0 0
  %345 = vmatpush1.bf16.msra.mxu0 0
  %346 = vmatprep.subr.bf16.mxu0 0
  %347 = vmatpush1.bf16.msra.mxu0 0
  %348 = vmatprep.subr.bf16.mxu0 0
  %349 = vmatpush1.bf16.msra.mxu0 0
  %350 = vmatprep.subr.bf16.mxu0 0
  %351 = vmatpush1.bf16.msra.mxu0 0
  %352 = vmatprep.subr.bf16.mxu0 0
  %353 = vmatpush1.bf16.msra.mxu0 0
  %354 = vmatprep.subr.bf16.mxu0 0
  %355 = vmatpush1.bf16.msra.mxu0 0
  %356 = vmatprep.mubr.bf16.mxu0 0
  %357 = vmatmul.mubr.bf16.gmra.mrb[0].mxu0 %v322
  %v358 = vpop.f32.mrb[0].mxu0
  %v359 = vadd.f32 0.0, %v358
  %v360 = vpop.f32.mrb[0].mxu0
  %v361 = vpop.f32.mrb[0].mxu0
  %v362 = vadd.f32 0.0, %v361
  %v363 = vpop.f32.mrb[0].mxu0
  %364 = vdwg.mxu0
  %v367 = vunpack.c.l.b16 %v31
  %v368 = vunpack.c.l.b16 %v32
  %v369 = vpack.c.b16 %v368, %v367
  %v372 = vunpack.c.l.b16 %v65
  %v373 = vunpack.c.l.b16 %v66
  %v374 = vpack.c.b16 %v373, %v372
  %v377 = vsel %vm100, %v369, 0
  %379 = vmatprep.subr.bf16.mxu0 0
  %380 = vmatpush1.bf16.msra.mxu0 %v374
  %381 = vmatprep.subr.bf16.mxu0 0
  %382 = vmatpush1.bf16.msra.mxu0 0
  %383 = vmatprep.subr.bf16.mxu0 0
  %384 = vmatpush1.bf16.msra.mxu0 0
  %385 = vmatprep.subr.bf16.mxu0 0
  %386 = vmatpush1.bf16.msra.mxu0 0
  %387 = vmatprep.subr.bf16.mxu0 0
  %388 = vmatpush1.bf16.msra.mxu0 0
  %389 = vmatprep.subr.bf16.mxu0 0
  %390 = vmatpush1.bf16.msra.mxu0 0
  %391 = vmatprep.subr.bf16.mxu0 0
  %392 = vmatpush1.bf16.msra.mxu0 0
  %393 = vmatprep.subr.bf16.mxu0 0
  %394 = vmatpush1.bf16.msra.mxu0 0
  %395 = vmatprep.subr.bf16.mxu0 0
  %396 = vmatpush1.bf16.msra.mxu0 0
  %397 = vmatprep.subr.bf16.mxu0 0
  %398 = vmatpush1.bf16.msra.mxu0 0
  %399 = vmatprep.subr.bf16.mxu0 0
  %400 = vmatpush1.bf16.msra.mxu0 0
  %401 = vmatprep.subr.bf16.mxu0 0
  %402 = vmatpush1.bf16.msra.mxu0 0
  %403 = vmatprep.subr.bf16.mxu0 0
  %404 = vmatpush1.bf16.msra.mxu0 0
  %405 = vmatprep.subr.bf16.mxu0 0
  %406 = vmatpush1.bf16.msra.mxu0 0
  %407 = vmatprep.subr.bf16.mxu0 0
  %408 = vmatpush1.bf16.msra.mxu0 0
  %409 = vmatprep.subr.bf16.mxu0 0
  %410 = vmatpush1.bf16.msra.mxu0 0
  %411 = vmatprep.mubr.bf16.mxu0 0
  %412 = vmatmul.mubr.bf16.gmra.mrb[0].mxu0 %v377
  %v413 = vpop.f32.mrb[0].mxu0
  %v414 = vadd.f32 0.0, %v413
  %v415 = vpop.f32.mrb[0].mxu0
  %v416 = vpop.f32.mrb[0].mxu0
  %v417 = vadd.f32 0.0, %v416
  %v418 = vpop.f32.mrb[0].mxu0
  %419 = vdwg.mxu0
  %v422 = vunpack.c.l.b16 %v33
  %v423 = vunpack.c.l.b16 %v34
  %v424 = vpack.c.b16 %v423, %v422
  %v427 = vunpack.c.l.b16 %v67
  %v428 = vunpack.c.l.b16 %v68
  %v429 = vpack.c.b16 %v428, %v427
  %v432 = vsel %vm100, %v424, 0
  %434 = vmatprep.subr.bf16.mxu0 0
  %435 = vmatpush1.bf16.msra.mxu0 %v429
  %436 = vmatprep.subr.bf16.mxu0 0
  %437 = vmatpush1.bf16.msra.mxu0 0
  %438 = vmatprep.subr.bf16.mxu0 0
  %439 = vmatpush1.bf16.msra.mxu0 0
  %440 = vmatprep.subr.bf16.mxu0 0
  %441 = vmatpush1.bf16.msra.mxu0 0
  %442 = vmatprep.subr.bf16.mxu0 0
  %443 = vmatpush1.bf16.msra.mxu0 0
  %444 = vmatprep.subr.bf16.mxu0 0
  %445 = vmatpush1.bf16.msra.mxu0 0
  %446 = vmatprep.subr.bf16.mxu0 0
  %447 = vmatpush1.bf16.msra.mxu0 0
  %448 = vmatprep.subr.bf16.mxu0 0
  %449 = vmatpush1.bf16.msra.mxu0 0
  %450 = vmatprep.subr.bf16.mxu0 0
  %451 = vmatpush1.bf16.msra.mxu0 0
  %452 = vmatprep.subr.bf16.mxu0 0
  %453 = vmatpush1.bf16.msra.mxu0 0
  %454 = vmatprep.subr.bf16.mxu0 0
  %455 = vmatpush1.bf16.msra.mxu0 0
  %456 = vmatprep.subr.bf16.mxu0 0
  %457 = vmatpush1.bf16.msra.mxu0 0
  %458 = vmatprep.subr.bf16.mxu0 0
  %459 = vmatpush1.bf16.msra.mxu0 0
  %460 = vmatprep.subr.bf16.mxu0 0
  %461 = vmatpush1.bf16.msra.mxu0 0
  %462 = vmatprep.subr.bf16.mxu0 0
  %463 = vmatpush1.bf16.msra.mxu0 0
  %464 = vmatprep.subr.bf16.mxu0 0
  %465 = vmatpush1.bf16.msra.mxu0 0
  %466 = vmatprep.mubr.bf16.mxu0 0
  %467 = vmatmul.mubr.bf16.gmra.mrb[0].mxu0 %v432
  %v468 = vpop.f32.mrb[0].mxu0
  %v469 = vadd.f32 0.0, %v468
  %v470 = vpop.f32.mrb[0].mxu0
  %v471 = vpop.f32.mrb[0].mxu0
  %v472 = vadd.f32 0.0, %v471
  %v473 = vpop.f32.mrb[0].mxu0
  %474 = vdwg.mxu0
  %v477 = vunpack.c.l.b16 %v35
  %v478 = vunpack.c.l.b16 %v36
  %v479 = vpack.c.b16 %v478, %v477
  %v482 = vunpack.c.l.b16 %v69
  %v483 = vunpack.c.l.b16 %v70
  %v484 = vpack.c.b16 %v483, %v482
  %v487 = vsel %vm100, %v479, 0
  %489 = vmatprep.subr.bf16.mxu0 0
  %490 = vmatpush1.bf16.msra.mxu0 %v484
  %491 = vmatprep.subr.bf16.mxu0 0
  %492 = vmatpush1.bf16.msra.mxu0 0
  %493 = vmatprep.subr.bf16.mxu0 0
  %494 = vmatpush1.bf16.msra.mxu0 0
  %495 = vmatprep.subr.bf16.mxu0 0
  %496 = vmatpush1.bf16.msra.mxu0 0
  %497 = vmatprep.subr.bf16.mxu0 0
  %498 = vmatpush1.bf16.msra.mxu0 0
  %499 = vmatprep.subr.bf16.mxu0 0
  %500 = vmatpush1.bf16.msra.mxu0 0
  %501 = vmatprep.subr.bf16.mxu0 0
  %502 = vmatpush1.bf16.msra.mxu0 0
  %503 = vmatprep.subr.bf16.mxu0 0
  %504 = vmatpush1.bf16.msra.mxu0 0
  %505 = vmatprep.subr.bf16.mxu0 0
  %506 = vmatpush1.bf16.msra.mxu0 0
  %507 = vmatprep.subr.bf16.mxu0 0
  %508 = vmatpush1.bf16.msra.mxu0 0
  %509 = vmatprep.subr.bf16.mxu0 0
  %510 = vmatpush1.bf16.msra.mxu0 0
  %511 = vmatprep.subr.bf16.mxu0 0
  %512 = vmatpush1.bf16.msra.mxu0 0
  %513 = vmatprep.subr.bf16.mxu0 0
  %514 = vmatpush1.bf16.msra.mxu0 0
  %515 = vmatprep.subr.bf16.mxu0 0
  %516 = vmatpush1.bf16.msra.mxu0 0
  %517 = vmatprep.subr.bf16.mxu0 0
  %518 = vmatpush1.bf16.msra.mxu0 0
  %519 = vmatprep.subr.bf16.mxu0 0
  %520 = vmatpush1.bf16.msra.mxu0 0
  %521 = vmatprep.mubr.bf16.mxu0 0
  %522 = vmatmul.mubr.bf16.gmra.mrb[0].mxu0 %v487
  %v523 = vpop.f32.mrb[0].mxu0
  %v524 = vadd.f32 0.0, %v523
  %v525 = vpop.f32.mrb[0].mxu0
  %v526 = vpop.f32.mrb[0].mxu0
  %v527 = vadd.f32 0.0, %v526
  %v528 = vpop.f32.mrb[0].mxu0
  %529 = vdwg.mxu0
  %v532 = vunpack.c.l.b16 %v37
  %v533 = vunpack.c.l.b16 %v38
  %v534 = vpack.c.b16 %v533, %v532
  %v537 = vunpack.c.l.b16 %v71
  %v538 = vunpack.c.l.b16 %v72
  %v539 = vpack.c.b16 %v538, %v537
  %v542 = vsel %vm100, %v534, 0
  %544 = vmatprep.subr.bf16.mxu0 0
  %545 = vmatpush1.bf16.msra.mxu0 %v539
  %546 = vmatprep.subr.bf16.mxu0 0
  %547 = vmatpush1.bf16.msra.mxu0 0
  %548 = vmatprep.subr.bf16.mxu0 0
  %549 = vmatpush1.bf16.msra.mxu0 0
  %550 = vmatprep.subr.bf16.mxu0 0
  %551 = vmatpush1.bf16.msra.mxu0 0
  %552 = vmatprep.subr.bf16.mxu0 0
  %553 = vmatpush1.bf16.msra.mxu0 0
  %554 = vmatprep.subr.bf16.mxu0 0
  %555 = vmatpush1.bf16.msra.mxu0 0
  %556 = vmatprep.subr.bf16.mxu0 0
  %557 = vmatpush1.bf16.msra.mxu0 0
  %558 = vmatprep.subr.bf16.mxu0 0
  %559 = vmatpush1.bf16.msra.mxu0 0
  %560 = vmatprep.subr.bf16.mxu0 0
  %561 = vmatpush1.bf16.msra.mxu0 0
  %562 = vmatprep.subr.bf16.mxu0 0
  %563 = vmatpush1.bf16.msra.mxu0 0
  %564 = vmatprep.subr.bf16.mxu0 0
  %565 = vmatpush1.bf16.msra.mxu0 0
  %566 = vmatprep.subr.bf16.mxu0 0
  %567 = vmatpush1.bf16.msra.mxu0 0
  %568 = vmatprep.subr.bf16.mxu0 0
  %569 = vmatpush1.bf16.msra.mxu0 0
  %570 = vmatprep.subr.bf16.mxu0 0
  %571 = vmatpush1.bf16.msra.mxu0 0
  %572 = vmatprep.subr.bf16.mxu0 0
  %573 = vmatpush1.bf16.msra.mxu0 0
  %574 = vmatprep.subr.bf16.mxu0 0
  %575 = vmatpush1.bf16.msra.mxu0 0
  %576 = vmatprep.mubr.bf16.mxu0 0
  %577 = vmatmul.mubr.bf16.gmra.mrb[0].mxu0 %v542
  %v578 = vpop.f32.mrb[0].mxu0
  %v579 = vadd.f32 0.0, %v578
  %v580 = vpop.f32.mrb[0].mxu0
  %v581 = vpop.f32.mrb[0].mxu0
  %v582 = vadd.f32 0.0, %v581
  %v583 = vpop.f32.mrb[0].mxu0
  %584 = vdwg.mxu0
  %v587 = vunpack.c.l.b16 %v39
  %v588 = vunpack.c.l.b16 %v40
  %v589 = vpack.c.b16 %v588, %v587
  %v592 = vunpack.c.l.b16 %v73
  %v593 = vunpack.c.l.b16 %v74
  %v594 = vpack.c.b16 %v593, %v592
  %v597 = vsel %vm100, %v589, 0
  %599 = vmatprep.subr.bf16.mxu0 0
  %600 = vmatpush1.bf16.msra.mxu0 %v594
  %601 = vmatprep.subr.bf16.mxu0 0
  %602 = vmatpush1.bf16.msra.mxu0 0
  %603 = vmatprep.subr.bf16.mxu0 0
  %604 = vmatpush1.bf16.msra.mxu0 0
  %605 = vmatprep.subr.bf16.mxu0 0
  %606 = vmatpush1.bf16.msra.mxu0 0
  %607 = vmatprep.subr.bf16.mxu0 0
  %608 = vmatpush1.bf16.msra.mxu0 0
  %609 = vmatprep.subr.bf16.mxu0 0
  %610 = vmatpush1.bf16.msra.mxu0 0
  %611 = vmatprep.subr.bf16.mxu0 0
  %612 = vmatpush1.bf16.msra.mxu0 0
  %613 = vmatprep.subr.bf16.mxu0 0
  %614 = vmatpush1.bf16.msra.mxu0 0
  %615 = vmatprep.subr.bf16.mxu0 0
  %616 = vmatpush1.bf16.msra.mxu0 0
  %617 = vmatprep.subr.bf16.mxu0 0
  %618 = vmatpush1.bf16.msra.mxu0 0
  %619 = vmatprep.subr.bf16.mxu0 0
  %620 = vmatpush1.bf16.msra.mxu0 0
  %621 = vmatprep.subr.bf16.mxu0 0
  %622 = vmatpush1.bf16.msra.mxu0 0
  %623 = vmatprep.subr.bf16.mxu0 0
  %624 = vmatpush1.bf16.msra.mxu0 0
  %625 = vmatprep.subr.bf16.mxu0 0
  %626 = vmatpush1.bf16.msra.mxu0 0
  %627 = vmatprep.subr.bf16.mxu0 0
  %628 = vmatpush1.bf16.msra.mxu0 0
  %629 = vmatprep.subr.bf16.mxu0 0
  %630 = vmatpush1.bf16.msra.mxu0 0
  %631 = vmatprep.mubr.bf16.mxu0 0
  %632 = vmatmul.mubr.bf16.gmra.mrb[0].mxu0 %v597
  %v633 = vpop.f32.mrb[0].mxu0
  %v634 = vadd.f32 0.0, %v633
  %v635 = vpop.f32.mrb[0].mxu0
  %v636 = vpop.f32.mrb[0].mxu0
  %v637 = vadd.f32 0.0, %v636
  %v638 = vpop.f32.mrb[0].mxu0
  %639 = vdwg.mxu0
  %v642 = vunpack.c.l.b16 %v41
  %v643 = vunpack.c.l.b16 %v42
  %v644 = vpack.c.b16 %v643, %v642
  %v647 = vunpack.c.l.b16 %v75
  %v648 = vunpack.c.l.b16 %v76
  %v649 = vpack.c.b16 %v648, %v647
  %v652 = vsel %vm100, %v644, 0
  %654 = vmatprep.subr.bf16.mxu0 0
  %655 = vmatpush1.bf16.msra.mxu0 %v649
  %656 = vmatprep.subr.bf16.mxu0 0
  %657 = vmatpush1.bf16.msra.mxu0 0
  %658 = vmatprep.subr.bf16.mxu0 0
  %659 = vmatpush1.bf16.msra.mxu0 0
  %660 = vmatprep.subr.bf16.mxu0 0
  %661 = vmatpush1.bf16.msra.mxu0 0
  %662 = vmatprep.subr.bf16.mxu0 0
  %663 = vmatpush1.bf16.msra.mxu0 0
  %664 = vmatprep.subr.bf16.mxu0 0
  %665 = vmatpush1.bf16.msra.mxu0 0
  %666 = vmatprep.subr.bf16.mxu0 0
  %667 = vmatpush1.bf16.msra.mxu0 0
  %668 = vmatprep.subr.bf16.mxu0 0
  %669 = vmatpush1.bf16.msra.mxu0 0
  %670 = vmatprep.subr.bf16.mxu0 0
  %671 = vmatpush1.bf16.msra.mxu0 0
  %672 = vmatprep.subr.bf16.mxu0 0
  %673 = vmatpush1.bf16.msra.mxu0 0
  %674 = vmatprep.subr.bf16.mxu0 0
  %675 = vmatpush1.bf16.msra.mxu0 0
  %676 = vmatprep.subr.bf16.mxu0 0
  %677 = vmatpush1.bf16.msra.mxu0 0
  %678 = vmatprep.subr.bf16.mxu0 0
  %679 = vmatpush1.bf16.msra.mxu0 0
  %680 = vmatprep.subr.bf16.mxu0 0
  %681 = vmatpush1.bf16.msra.mxu0 0
  %682 = vmatprep.subr.bf16.mxu0 0
  %683 = vmatpush1.bf16.msra.mxu0 0
  %684 = vmatprep.subr.bf16.mxu0 0
  %685 = vmatpush1.bf16.msra.mxu0 0
  %686 = vmatprep.mubr.bf16.mxu0 0
  %687 = vmatmul.mubr.bf16.gmra.mrb[0].mxu0 %v652
  %v688 = vpop.f32.mrb[0].mxu0
  %v689 = vadd.f32 0.0, %v688
  %v690 = vpop.f32.mrb[0].mxu0
  %v691 = vpop.f32.mrb[0].mxu0
  %v692 = vadd.f32 0.0, %v691
  %v693 = vpop.f32.mrb[0].mxu0
  %694 = vdwg.mxu0
  %v697 = vunpack.c.l.b16 %v43
  %v698 = vunpack.c.l.b16 %v44
  %v699 = vpack.c.b16 %v698, %v697
  %v702 = vunpack.c.l.b16 %v77
  %v703 = vunpack.c.l.b16 %v78
  %v704 = vpack.c.b16 %v703, %v702
  %v707 = vsel %vm100, %v699, 0
  %709 = vmatprep.subr.bf16.mxu0 0
  %710 = vmatpush1.bf16.msra.mxu0 %v704
  %711 = vmatprep.subr.bf16.mxu0 0
  %712 = vmatpush1.bf16.msra.mxu0 0
  %713 = vmatprep.subr.bf16.mxu0 0
  %714 = vmatpush1.bf16.msra.mxu0 0
  %715 = vmatprep.subr.bf16.mxu0 0
  %716 = vmatpush1.bf16.msra.mxu0 0
  %717 = vmatprep.subr.bf16.mxu0 0
  %718 = vmatpush1.bf16.msra.mxu0 0
  %719 = vmatprep.subr.bf16.mxu0 0
  %720 = vmatpush1.bf16.msra.mxu0 0
  %721 = vmatprep.subr.bf16.mxu0 0
  %722 = vmatpush1.bf16.msra.mxu0 0
  %723 = vmatprep.subr.bf16.mxu0 0
  %724 = vmatpush1.bf16.msra.mxu0 0
  %725 = vmatprep.subr.bf16.mxu0 0
  %726 = vmatpush1.bf16.msra.mxu0 0
  %727 = vmatprep.subr.bf16.mxu0 0
  %728 = vmatpush1.bf16.msra.mxu0 0
  %729 = vmatprep.subr.bf16.mxu0 0
  %730 = vmatpush1.bf16.msra.mxu0 0
  %731 = vmatprep.subr.bf16.mxu0 0
  %732 = vmatpush1.bf16.msra.mxu0 0
  %733 = vmatprep.subr.bf16.mxu0 0
  %734 = vmatpush1.bf16.msra.mxu0 0
  %735 = vmatprep.subr.bf16.mxu0 0
  %736 = vmatpush1.bf16.msra.mxu0 0
  %737 = vmatprep.subr.bf16.mxu0 0
  %738 = vmatpush1.bf16.msra.mxu0 0
  %739 = vmatprep.subr.bf16.mxu0 0
  %740 = vmatpush1.bf16.msra.mxu0 0
  %741 = vmatprep.mubr.bf16.mxu0 0
  %742 = vmatmul.mubr.bf16.gmra.mrb[0].mxu0 %v707
  %v743 = vpop.f32.mrb[0].mxu0
  %v744 = vadd.f32 0.0, %v743
  %v745 = vpop.f32.mrb[0].mxu0
  %v746 = vpop.f32.mrb[0].mxu0
  %v747 = vadd.f32 0.0, %v746
  %v748 = vpop.f32.mrb[0].mxu0
  %749 = vdwg.mxu0
  %v752 = vunpack.c.l.b16 %v45
  %v753 = vunpack.c.l.b16 %v46
  %v754 = vpack.c.b16 %v753, %v752
  %v757 = vunpack.c.l.b16 %v79
  %v758 = vunpack.c.l.b16 %v80
  %v759 = vpack.c.b16 %v758, %v757
  %v762 = vsel %vm100, %v754, 0
  %764 = vmatprep.subr.bf16.mxu0 0
  %765 = vmatpush1.bf16.msra.mxu0 %v759
  %766 = vmatprep.subr.bf16.mxu0 0
  %767 = vmatpush1.bf16.msra.mxu0 0
  %768 = vmatprep.subr.bf16.mxu0 0
  %769 = vmatpush1.bf16.msra.mxu0 0
  %770 = vmatprep.subr.bf16.mxu0 0
  %771 = vmatpush1.bf16.msra.mxu0 0
  %772 = vmatprep.subr.bf16.mxu0 0
  %773 = vmatpush1.bf16.msra.mxu0 0
  %774 = vmatprep.subr.bf16.mxu0 0
  %775 = vmatpush1.bf16.msra.mxu0 0
  %776 = vmatprep.subr.bf16.mxu0 0
  %777 = vmatpush1.bf16.msra.mxu0 0
  %778 = vmatprep.subr.bf16.mxu0 0
  %779 = vmatpush1.bf16.msra.mxu0 0
  %780 = vmatprep.subr.bf16.mxu0 0
  %781 = vmatpush1.bf16.msra.mxu0 0
  %782 = vmatprep.subr.bf16.mxu0 0
  %783 = vmatpush1.bf16.msra.mxu0 0
  %784 = vmatprep.subr.bf16.mxu0 0
  %785 = vmatpush1.bf16.msra.mxu0 0
  %786 = vmatprep.subr.bf16.mxu0 0
  %787 = vmatpush1.bf16.msra.mxu0 0
  %788 = vmatprep.subr.bf16.mxu0 0
  %789 = vmatpush1.bf16.msra.mxu0 0
  %790 = vmatprep.subr.bf16.mxu0 0
  %791 = vmatpush1.bf16.msra.mxu0 0
  %792 = vmatprep.subr.bf16.mxu0 0
  %793 = vmatpush1.bf16.msra.mxu0 0
  %794 = vmatprep.subr.bf16.mxu0 0
  %795 = vmatpush1.bf16.msra.mxu0 0
  %796 = vmatprep.mubr.bf16.mxu0 0
  %797 = vmatmul.mubr.bf16.gmra.mrb[0].mxu0 %v762
  %v798 = vpop.f32.mrb[0].mxu0
  %v799 = vadd.f32 0.0, %v798
  %v800 = vpop.f32.mrb[0].mxu0
  %v801 = vpop.f32.mrb[0].mxu0
  %v802 = vadd.f32 0.0, %v801
  %v803 = vpop.f32.mrb[0].mxu0
  %804 = vdwg.mxu0
  %v807 = vunpack.c.l.b16 %v47
  %v808 = vunpack.c.l.b16 %v48
  %v809 = vpack.c.b16 %v808, %v807
  %v812 = vunpack.c.l.b16 %v81
  %v813 = vunpack.c.l.b16 %v82
  %v814 = vpack.c.b16 %v813, %v812
  %v817 = vsel %vm100, %v809, 0
  %819 = vmatprep.subr.bf16.mxu0 0
  %820 = vmatpush1.bf16.msra.mxu0 %v814
  %821 = vmatprep.subr.bf16.mxu0 0
  %822 = vmatpush1.bf16.msra.mxu0 0
  %823 = vmatprep.subr.bf16.mxu0 0
  %824 = vmatpush1.bf16.msra.mxu0 0
  %825 = vmatprep.subr.bf16.mxu0 0
  %826 = vmatpush1.bf16.msra.mxu0 0
  %827 = vmatprep.subr.bf16.mxu0 0
  %828 = vmatpush1.bf16.msra.mxu0 0
  %829 = vmatprep.subr.bf16.mxu0 0
  %830 = vmatpush1.bf16.msra.mxu0 0
  %831 = vmatprep.subr.bf16.mxu0 0
  %832 = vmatpush1.bf16.msra.mxu0 0
  %833 = vmatprep.subr.bf16.mxu0 0
  %834 = vmatpush1.bf16.msra.mxu0 0
  %835 = vmatprep.subr.bf16.mxu0 0
  %836 = vmatpush1.bf16.msra.mxu0 0
  %837 = vmatprep.subr.bf16.mxu0 0
  %838 = vmatpush1.bf16.msra.mxu0 0
  %839 = vmatprep.subr.bf16.mxu0 0
  %840 = vmatpush1.bf16.msra.mxu0 0
  %841 = vmatprep.subr.bf16.mxu0 0
  %842 = vmatpush1.bf16.msra.mxu0 0
  %843 = vmatprep.subr.bf16.mxu0 0
  %844 = vmatpush1.bf16.msra.mxu0 0
  %845 = vmatprep.subr.bf16.mxu0 0
  %846 = vmatpush1.bf16.msra.mxu0 0
  %847 = vmatprep.subr.bf16.mxu0 0
  %848 = vmatpush1.bf16.msra.mxu0 0
  %849 = vmatprep.subr.bf16.mxu0 0
  %850 = vmatpush1.bf16.msra.mxu0 0
  %851 = vmatprep.mubr.bf16.mxu0 0
  %852 = vmatmul.mubr.bf16.gmra.mrb[0].mxu0 %v817
  %v853 = vpop.f32.mrb[0].mxu0
  %v854 = vadd.f32 0.0, %v853
  %v855 = vpop.f32.mrb[0].mxu0
  %v856 = vpop.f32.mrb[0].mxu0
  %v857 = vadd.f32 0.0, %v856
  %v858 = vpop.f32.mrb[0].mxu0
  %859 = vdwg.mxu0
  %v862 = vunpack.c.l.b16 %v49
  %v863 = vunpack.c.l.b16 %v50
  %v864 = vpack.c.b16 %v863, %v862
  %v867 = vunpack.c.l.b16 %v83
  %v868 = vunpack.c.l.b16 %v84
  %v869 = vpack.c.b16 %v868, %v867
  %v872 = vsel %vm100, %v864, 0
  %874 = vmatprep.subr.bf16.mxu0 0
  %875 = vmatpush1.bf16.msra.mxu0 %v869
  %876 = vmatprep.subr.bf16.mxu0 0
  %877 = vmatpush1.bf16.msra.mxu0 0
  %878 = vmatprep.subr.bf16.mxu0 0
  %879 = vmatpush1.bf16.msra.mxu0 0
  %880 = vmatprep.subr.bf16.mxu0 0
  %881 = vmatpush1.bf16.msra.mxu0 0
  %882 = vmatprep.subr.bf16.mxu0 0
  %883 = vmatpush1.bf16.msra.mxu0 0
  %884 = vmatprep.subr.bf16.mxu0 0
  %885 = vmatpush1.bf16.msra.mxu0 0
  %886 = vmatprep.subr.bf16.mxu0 0
  %887 = vmatpush1.bf16.msra.mxu0 0
  %888 = vmatprep.subr.bf16.mxu0 0
  %889 = vmatpush1.bf16.msra.mxu0 0
  %890 = vmatprep.subr.bf16.mxu0 0
  %891 = vmatpush1.bf16.msra.mxu0 0
  %892 = vmatprep.subr.bf16.mxu0 0
  %893 = vmatpush1.bf16.msra.mxu0 0
  %894 = vmatprep.subr.bf16.mxu0 0
  %895 = vmatpush1.bf16.msra.mxu0 0
  %896 = vmatprep.subr.bf16.mxu0 0
  %897 = vmatpush1.bf16.msra.mxu0 0
  %898 = vmatprep.subr.bf16.mxu0 0
  %899 = vmatpush1.bf16.msra.mxu0 0
  %900 = vmatprep.subr.bf16.mxu0 0
  %901 = vmatpush1.bf16.msra.mxu0 0
  %902 = vmatprep.subr.bf16.mxu0 0
  %903 = vmatpush1.bf16.msra.mxu0 0
  %904 = vmatprep.subr.bf16.mxu0 0
  %905 = vmatpush1.bf16.msra.mxu0 0
  %906 = vmatprep.mubr.bf16.mxu0 0
  %907 = vmatmul.mubr.bf16.gmra.mrb[0].mxu0 %v872
  %v908 = vpop.f32.mrb[0].mxu0
  %v909 = vadd.f32 0.0, %v908
  %v910 = vpop.f32.mrb[0].mxu0
  %v911 = vpop.f32.mrb[0].mxu0
  %v912 = vadd.f32 0.0, %v911
  %v913 = vpop.f32.mrb[0].mxu0
  %914 = vdwg.mxu0
  %v917 = vunpack.c.l.b16 %v51
  %v918 = vunpack.c.l.b16 %v52
  %v919 = vpack.c.b16 %v918, %v917
  %v922 = vunpack.c.l.b16 %v85
  %v923 = vunpack.c.l.b16 %v86
  %v924 = vpack.c.b16 %v923, %v922
  %v927 = vsel %vm100, %v919, 0
  %929 = vmatprep.subr.bf16.mxu0 0
  %930 = vmatpush1.bf16.msra.mxu0 %v924
  %931 = vmatprep.subr.bf16.mxu0 0
  %932 = vmatpush1.bf16.msra.mxu0 0
  %933 = vmatprep.subr.bf16.mxu0 0
  %934 = vmatpush1.bf16.msra.mxu0 0
  %935 = vmatprep.subr.bf16.mxu0 0
  %936 = vmatpush1.bf16.msra.mxu0 0
  %937 = vmatprep.subr.bf16.mxu0 0
  %938 = vmatpush1.bf16.msra.mxu0 0
  %939 = vmatprep.subr.bf16.mxu0 0
  %940 = vmatpush1.bf16.msra.mxu0 0
  %941 = vmatprep.subr.bf16.mxu0 0
  %942 = vmatpush1.bf16.msra.mxu0 0
  %943 = vmatprep.subr.bf16.mxu0 0
  %944 = vmatpush1.bf16.msra.mxu0 0
  %945 = vmatprep.subr.bf16.mxu0 0
  %946 = vmatpush1.bf16.msra.mxu0 0
  %947 = vmatprep.subr.bf16.mxu0 0
  %948 = vmatpush1.bf16.msra.mxu0 0
  %949 = vmatprep.subr.bf16.mxu0 0
  %950 = vmatpush1.bf16.msra.mxu0 0
  %951 = vmatprep.subr.bf16.mxu0 0
  %952 = vmatpush1.bf16.msra.mxu0 0
  %953 = vmatprep.subr.bf16.mxu0 0
  %954 = vmatpush1.bf16.msra.mxu0 0
  %955 = vmatprep.subr.bf16.mxu0 0
  %956 = vmatpush1.bf16.msra.mxu0 0
  %957 = vmatprep.subr.bf16.mxu0 0
  %958 = vmatpush1.bf16.msra.mxu0 0
  %959 = vmatprep.subr.bf16.mxu0 0
  %960 = vmatpush1.bf16.msra.mxu0 0
  %961 = vmatprep.mubr.bf16.mxu0 0
  %962 = vmatmul.mubr.bf16.gmra.mrb[0].mxu0 %v927
  %v963 = vpop.f32.mrb[0].mxu0
  %v964 = vadd.f32 0.0, %v963
  %v965 = vpop.f32.mrb[0].mxu0
  %v966 = vpop.f32.mrb[0].mxu0
  %v967 = vadd.f32 0.0, %v966
  %v968 = vpop.f32.mrb[0].mxu0
  %969 = vdwg.mxu0
  %v972 = vunpack.c.l.b16 %v53
  %v973 = vunpack.c.l.b16 %v54
  %v974 = vpack.c.b16 %v973, %v972
  %v977 = vunpack.c.l.b16 %v87
  %v978 = vunpack.c.l.b16 %v88
  %v979 = vpack.c.b16 %v978, %v977
  %v982 = vsel %vm100, %v974, 0
  %984 = vmatprep.subr.bf16.mxu0 0
  %985 = vmatpush1.bf16.msra.mxu0 %v979
  %986 = vmatprep.subr.bf16.mxu0 0
  %987 = vmatpush1.bf16.msra.mxu0 0
  %988 = vmatprep.subr.bf16.mxu0 0
  %989 = vmatpush1.bf16.msra.mxu0 0
  %990 = vmatprep.subr.bf16.mxu0 0
  %991 = vmatpush1.bf16.msra.mxu0 0
  %992 = vmatprep.subr.bf16.mxu0 0
  %993 = vmatpush1.bf16.msra.mxu0 0
  %994 = vmatprep.subr.bf16.mxu0 0
  %995 = vmatpush1.bf16.msra.mxu0 0
  %996 = vmatprep.subr.bf16.mxu0 0
  %997 = vmatpush1.bf16.msra.mxu0 0
  %998 = vmatprep.subr.bf16.mxu0 0
  %999 = vmatpush1.bf16.msra.mxu0 0
  %1000 = vmatprep.subr.bf16.mxu0 0
  %1001 = vmatpush1.bf16.msra.mxu0 0
  %1002 = vmatprep.subr.bf16.mxu0 0
  %1003 = vmatpush1.bf16.msra.mxu0 0
  %1004 = vmatprep.subr.bf16.mxu0 0
  %1005 = vmatpush1.bf16.msra.mxu0 0
  %1006 = vmatprep.subr.bf16.mxu0 0
  %1007 = vmatpush1.bf16.msra.mxu0 0
  %1008 = vmatprep.subr.bf16.mxu0 0
  %1009 = vmatpush1.bf16.msra.mxu0 0
  %1010 = vmatprep.subr.bf16.mxu0 0
  %1011 = vmatpush1.bf16.msra.mxu0 0
  %1012 = vmatprep.subr.bf16.mxu0 0
  %1013 = vmatpush1.bf16.msra.mxu0 0
  %1014 = vmatprep.subr.bf16.mxu0 0
  %1015 = vmatpush1.bf16.msra.mxu0 0
  %1016 = vmatprep.mubr.bf16.mxu0 0
  %1017 = vmatmul.mubr.bf16.gmra.mrb[0].mxu0 %v982
  %v1018 = vpop.f32.mrb[0].mxu0
  %v1019 = vadd.f32 0.0, %v1018
  %v1020 = vpop.f32.mrb[0].mxu0
  %v1021 = vpop.f32.mrb[0].mxu0
  %v1022 = vadd.f32 0.0, %v1021
  %v1023 = vpop.f32.mrb[0].mxu0
  %1024 = vdwg.mxu0
  %1059 = vrot.lane.b32.xlu0 %v139, 2
  %v1060 = vpop.permute.xlu0 %1059
  %1061 = vrot.lane.b32.xlu0 %v142, 2
  %v1062 = vpop.permute.xlu0 %1061
  %1063 = vrot.lane.b32.xlu0 %v194, 2
  %v1064 = vpop.permute.xlu0 %1063
  %1065 = vrot.lane.b32.xlu0 %v197, 2
  %v1066 = vpop.permute.xlu0 %1065
  %1067 = vrot.lane.b32.xlu0 %v249, 2
  %v1068 = vpop.permute.xlu0 %1067
  %1069 = vrot.lane.b32.xlu0 %v252, 2
  %v1070 = vpop.permute.xlu0 %1069
  %1071 = vrot.lane.b32.xlu0 %v304, 2
  %v1072 = vpop.permute.xlu0 %1071
  %1073 = vrot.lane.b32.xlu0 %v307, 2
  %v1074 = vpop.permute.xlu0 %1073
  %1075 = vrot.lane.b32.xlu0 %v359, 2
  %v1076 = vpop.permute.xlu0 %1075
  %1077 = vrot.lane.b32.xlu0 %v362, 2
  %v1078 = vpop.permute.xlu0 %1077
  %1079 = vrot.lane.b32.xlu0 %v414, 2
  %v1080 = vpop.permute.xlu0 %1079
  %1081 = vrot.lane.b32.xlu0 %v417, 2
  %v1082 = vpop.permute.xlu0 %1081
  %1083 = vrot.lane.b32.xlu0 %v469, 2
  %v1084 = vpop.permute.xlu0 %1083
  %1085 = vrot.lane.b32.xlu0 %v472, 2
  %v1086 = vpop.permute.xlu0 %1085
  %1087 = vrot.lane.b32.xlu0 %v524, 2
  %v1088 = vpop.permute.xlu0 %1087
  %1089 = vrot.lane.b32.xlu0 %v527, 2
  %v1090 = vpop.permute.xlu0 %1089
  %1091 = vrot.lane.b32.xlu0 %v579, 2
  %v1092 = vpop.permute.xlu0 %1091
  %1093 = vrot.lane.b32.xlu0 %v582, 2
  %v1094 = vpop.permute.xlu0 %1093
  %1095 = vrot.lane.b32.xlu0 %v634, 2
  %v1096 = vpop.permute.xlu0 %1095
  %1097 = vrot.lane.b32.xlu0 %v637, 2
  %v1098 = vpop.permute.xlu0 %1097
  %1099 = vrot.lane.b32.xlu0 %v689, 2
  %v1100 = vpop.permute.xlu0 %1099
  %1101 = vrot.lane.b32.xlu0 %v692, 2
  %v1102 = vpop.permute.xlu0 %1101
  %1103 = vrot.lane.b32.xlu0 %v744, 2
  %v1104 = vpop.permute.xlu0 %1103
  %1105 = vrot.lane.b32.xlu0 %v747, 2
  %v1106 = vpop.permute.xlu0 %1105
  %1107 = vrot.lane.b32.xlu0 %v799, 2
  %v1108 = vpop.permute.xlu0 %1107
  %1109 = vrot.lane.b32.xlu0 %v802, 2
  %v1110 = vpop.permute.xlu0 %1109
  %1111 = vrot.lane.b32.xlu0 %v854, 2
  %v1112 = vpop.permute.xlu0 %1111
  %1113 = vrot.lane.b32.xlu0 %v857, 2
  %v1114 = vpop.permute.xlu0 %1113
  %1115 = vrot.lane.b32.xlu0 %v909, 2
  %v1116 = vpop.permute.xlu0 %1115
  %1117 = vrot.lane.b32.xlu0 %v912, 2
  %v1118 = vpop.permute.xlu0 %1117
  %1119 = vrot.lane.b32.xlu0 %v964, 2
  %v1120 = vpop.permute.xlu0 %1119
  %1121 = vrot.lane.b32.xlu0 %v967, 2
  %v1122 = vpop.permute.xlu0 %1121
  %1123 = vrot.lane.b32.xlu0 %v1019, 2
  %v1124 = vpop.permute.xlu0 %1123
  %1125 = vrot.lane.b32.xlu0 %v1022, 2
  %v1126 = vpop.permute.xlu0 %1125
  %1161 = vrot.lane.b32.xlu0 %v139, 4
  %v1162 = vpop.permute.xlu0 %1161
  %1163 = vrot.lane.b32.xlu0 %v142, 4
  %v1164 = vpop.permute.xlu0 %1163
  %1165 = vrot.lane.b32.xlu0 %v194, 4
  %v1166 = vpop.permute.xlu0 %1165
  %1167 = vrot.lane.b32.xlu0 %v197, 4
  %v1168 = vpop.permute.xlu0 %1167
  %1169 = vrot.lane.b32.xlu0 %v249, 4
  %v1170 = vpop.permute.xlu0 %1169
  %1171 = vrot.lane.b32.xlu0 %v252, 4
  %v1172 = vpop.permute.xlu0 %1171
  %1173 = vrot.lane.b32.xlu0 %v304, 4
  %v1174 = vpop.permute.xlu0 %1173
  %1175 = vrot.lane.b32.xlu0 %v307, 4
  %v1176 = vpop.permute.xlu0 %1175
  %1177 = vrot.lane.b32.xlu0 %v359, 4
  %v1178 = vpop.permute.xlu0 %1177
  %1179 = vrot.lane.b32.xlu0 %v362, 4
  %v1180 = vpop.permute.xlu0 %1179
  %1181 = vrot.lane.b32.xlu0 %v414, 4
  %v1182 = vpop.permute.xlu0 %1181
  %1183 = vrot.lane.b32.xlu0 %v417, 4
  %v1184 = vpop.permute.xlu0 %1183
  %1185 = vrot.lane.b32.xlu0 %v469, 4
  %v1186 = vpop.permute.xlu0 %1185
  %1187 = vrot.lane.b32.xlu0 %v472, 4
  %v1188 = vpop.permute.xlu0 %1187
  %1189 = vrot.lane.b32.xlu0 %v524, 4
  %v1190 = vpop.permute.xlu0 %1189
  %1191 = vrot.lane.b32.xlu0 %v527, 4
  %v1192 = vpop.permute.xlu0 %1191
  %1193 = vrot.lane.b32.xlu0 %v579, 4
  %v1194 = vpop.permute.xlu0 %1193
  %1195 = vrot.lane.b32.xlu0 %v582, 4
  %v1196 = vpop.permute.xlu0 %1195
  %1197 = vrot.lane.b32.xlu0 %v634, 4
  %v1198 = vpop.permute.xlu0 %1197
  %1199 = vrot.lane.b32.xlu0 %v637, 4
  %v1200 = vpop.permute.xlu0 %1199
  %1201 = vrot.lane.b32.xlu0 %v689, 4
  %v1202 = vpop.permute.xlu0 %1201
  %1203 = vrot.lane.b32.xlu0 %v692, 4
  %v1204 = vpop.permute.xlu0 %1203
  %1205 = vrot.lane.b32.xlu0 %v744, 4
  %v1206 = vpop.permute.xlu0 %1205
  %1207 = vrot.lane.b32.xlu0 %v747, 4
  %v1208 = vpop.permute.xlu0 %1207
  %1209 = vrot.lane.b32.xlu0 %v799, 4
  %v1210 = vpop.permute.xlu0 %1209
  %1211 = vrot.lane.b32.xlu0 %v802, 4
  %v1212 = vpop.permute.xlu0 %1211
  %1213 = vrot.lane.b32.xlu0 %v854, 4
  %v1214 = vpop.permute.xlu0 %1213
  %1215 = vrot.lane.b32.xlu0 %v857, 4
  %v1216 = vpop.permute.xlu0 %1215
  %1217 = vrot.lane.b32.xlu0 %v909, 4
  %v1218 = vpop.permute.xlu0 %1217
  %1219 = vrot.lane.b32.xlu0 %v912, 4
  %v1220 = vpop.permute.xlu0 %1219
  %1221 = vrot.lane.b32.xlu0 %v964, 4
  %v1222 = vpop.permute.xlu0 %1221
  %1223 = vrot.lane.b32.xlu0 %v967, 4
  %v1224 = vpop.permute.xlu0 %1223
  %1225 = vrot.lane.b32.xlu0 %v1019, 4
  %v1226 = vpop.permute.xlu0 %1225
  %1227 = vrot.lane.b32.xlu0 %v1022, 4
  %v1228 = vpop.permute.xlu0 %1227
  %1263 = vrot.lane.b32.xlu0 %v139, 6
  %v1264 = vpop.permute.xlu0 %1263
  %1265 = vrot.lane.b32.xlu0 %v142, 6
  %v1266 = vpop.permute.xlu0 %1265
  %1267 = vrot.lane.b32.xlu0 %v194, 6
  %v1268 = vpop.permute.xlu0 %1267
  %1269 = vrot.lane.b32.xlu0 %v197, 6
  %v1270 = vpop.permute.xlu0 %1269
  %1271 = vrot.lane.b32.xlu0 %v249, 6
  %v1272 = vpop.permute.xlu0 %1271
  %1273 = vrot.lane.b32.xlu0 %v252, 6
  %v1274 = vpop.permute.xlu0 %1273
  %1275 = vrot.lane.b32.xlu0 %v304, 6
  %v1276 = vpop.permute.xlu0 %1275
  %1277 = vrot.lane.b32.xlu0 %v307, 6
  %v1278 = vpop.permute.xlu0 %1277
  %1279 = vrot.lane.b32.xlu0 %v359, 6
  %v1280 = vpop.permute.xlu0 %1279
  %1281 = vrot.lane.b32.xlu0 %v362, 6
  %v1282 = vpop.permute.xlu0 %1281
  %1283 = vrot.lane.b32.xlu0 %v414, 6
  %v1284 = vpop.permute.xlu0 %1283
  %1285 = vrot.lane.b32.xlu0 %v417, 6
  %v1286 = vpop.permute.xlu0 %1285
  %1287 = vrot.lane.b32.xlu0 %v469, 6
  %v1288 = vpop.permute.xlu0 %1287
  %1289 = vrot.lane.b32.xlu0 %v472, 6
  %v1290 = vpop.permute.xlu0 %1289
  %1291 = vrot.lane.b32.xlu0 %v524, 6
  %v1292 = vpop.permute.xlu0 %1291
  %1293 = vrot.lane.b32.xlu0 %v527, 6
  %v1294 = vpop.permute.xlu0 %1293
  %1295 = vrot.lane.b32.xlu0 %v579, 6
  %v1296 = vpop.permute.xlu0 %1295
  %1297 = vrot.lane.b32.xlu0 %v582, 6
  %v1298 = vpop.permute.xlu0 %1297
  %1299 = vrot.lane.b32.xlu0 %v634, 6
  %v1300 = vpop.permute.xlu0 %1299
  %1301 = vrot.lane.b32.xlu0 %v637, 6
  %v1302 = vpop.permute.xlu0 %1301
  %1303 = vrot.lane.b32.xlu0 %v689, 6
  %v1304 = vpop.permute.xlu0 %1303
  %1305 = vrot.lane.b32.xlu0 %v692, 6
  %v1306 = vpop.permute.xlu0 %1305
  %1307 = vrot.lane.b32.xlu0 %v744, 6
  %v1308 = vpop.permute.xlu0 %1307
  %1309 = vrot.lane.b32.xlu0 %v747, 6
  %v1310 = vpop.permute.xlu0 %1309
  %1311 = vrot.lane.b32.xlu0 %v799, 6
  %v1312 = vpop.permute.xlu0 %1311
  %1313 = vrot.lane.b32.xlu0 %v802, 6
  %v1314 = vpop.permute.xlu0 %1313
  %1315 = vrot.lane.b32.xlu0 %v854, 6
  %v1316 = vpop.permute.xlu0 %1315
  %1317 = vrot.lane.b32.xlu0 %v857, 6
  %v1318 = vpop.permute.xlu0 %1317
  %1319 = vrot.lane.b32.xlu0 %v909, 6
  %v1320 = vpop.permute.xlu0 %1319
  %1321 = vrot.lane.b32.xlu0 %v912, 6
  %v1322 = vpop.permute.xlu0 %1321
  %1323 = vrot.lane.b32.xlu0 %v964, 6
  %v1324 = vpop.permute.xlu0 %1323
  %1325 = vrot.lane.b32.xlu0 %v967, 6
  %v1326 = vpop.permute.xlu0 %1325
  %1327 = vrot.lane.b32.xlu0 %v1019, 6
  %v1328 = vpop.permute.xlu0 %1327
  %1329 = vrot.lane.b32.xlu0 %v1022, 6
  %v1330 = vpop.permute.xlu0 %1329
  %vm1365 = vcmask 15360
  %v1366 = vsel %vm1365, %v139, %v1060
  %v1367 = vsel %vm1365, %v142, %v1062
  %v1368 = vsel %vm1365, %v194, %v1064
  %v1369 = vsel %vm1365, %v197, %v1066
  %v1370 = vsel %vm1365, %v249, %v1068
  %v1371 = vsel %vm1365, %v252, %v1070
  %v1372 = vsel %vm1365, %v304, %v1072
  %v1373 = vsel %vm1365, %v307, %v1074
  %v1374 = vsel %vm1365, %v359, %v1076
  %v1375 = vsel %vm1365, %v362, %v1078
  %v1376 = vsel %vm1365, %v414, %v1080
  %v1377 = vsel %vm1365, %v417, %v1082
  %v1378 = vsel %vm1365, %v469, %v1084
  %v1379 = vsel %vm1365, %v472, %v1086
  %v1380 = vsel %vm1365, %v524, %v1088
  %v1381 = vsel %vm1365, %v527, %v1090
  %v1382 = vsel %vm1365, %v579, %v1092
  %v1383 = vsel %vm1365, %v582, %v1094
  %v1384 = vsel %vm1365, %v634, %v1096
  %v1385 = vsel %vm1365, %v637, %v1098
  %v1386 = vsel %vm1365, %v689, %v1100
  %v1387 = vsel %vm1365, %v692, %v1102
  %v1388 = vsel %vm1365, %v744, %v1104
  %v1389 = vsel %vm1365, %v747, %v1106
  %v1390 = vsel %vm1365, %v799, %v1108
  %v1391 = vsel %vm1365, %v802, %v1110
  %v1392 = vsel %vm1365, %v854, %v1112
  %v1393 = vsel %vm1365, %v857, %v1114
  %v1394 = vsel %vm1365, %v909, %v1116
  %v1395 = vsel %vm1365, %v912, %v1118
  %v1396 = vsel %vm1365, %v964, %v1120
  %v1397 = vsel %vm1365, %v967, %v1122
  %v1398 = vsel %vm1365, %v1019, %v1124
  %v1399 = vsel %vm1365, %v1022, %v1126
  %vm1400 = vcmask 31744
  %v1401 = vsel %vm1400, %v1366, %v1162
  %v1402 = vsel %vm1400, %v1367, %v1164
  %v1403 = vsel %vm1400, %v1368, %v1166
  %v1404 = vsel %vm1400, %v1369, %v1168
  %v1405 = vsel %vm1400, %v1370, %v1170
  %v1406 = vsel %vm1400, %v1371, %v1172
  %v1407 = vsel %vm1400, %v1372, %v1174
  %v1408 = vsel %vm1400, %v1373, %v1176
  %v1409 = vsel %vm1400, %v1374, %v1178
  %v1410 = vsel %vm1400, %v1375, %v1180
  %v1411 = vsel %vm1400, %v1376, %v1182
  %v1412 = vsel %vm1400, %v1377, %v1184
  %v1413 = vsel %vm1400, %v1378, %v1186
  %v1414 = vsel %vm1400, %v1379, %v1188
  %v1415 = vsel %vm1400, %v1380, %v1190
  %v1416 = vsel %vm1400, %v1381, %v1192
  %v1417 = vsel %vm1400, %v1382, %v1194
  %v1418 = vsel %vm1400, %v1383, %v1196
  %v1419 = vsel %vm1400, %v1384, %v1198
  %v1420 = vsel %vm1400, %v1385, %v1200
  %v1421 = vsel %vm1400, %v1386, %v1202
  %v1422 = vsel %vm1400, %v1387, %v1204
  %v1423 = vsel %vm1400, %v1388, %v1206
  %v1424 = vsel %vm1400, %v1389, %v1208
  %v1425 = vsel %vm1400, %v1390, %v1210
  %v1426 = vsel %vm1400, %v1391, %v1212
  %v1427 = vsel %vm1400, %v1392, %v1214
  %v1428 = vsel %vm1400, %v1393, %v1216
  %v1429 = vsel %vm1400, %v1394, %v1218
  %v1430 = vsel %vm1400, %v1395, %v1220
  %v1431 = vsel %vm1400, %v1396, %v1222
  %v1432 = vsel %vm1400, %v1397, %v1224
  %v1433 = vsel %vm1400, %v1398, %v1226
  %v1434 = vsel %vm1400, %v1399, %v1228
  %vm1435 = vcmask 48128
  %v1436 = vsel %vm1435, %v1401, %v1264
  %v1437 = vsel %vm1435, %v1402, %v1266
  %v1438 = vsel %vm1435, %v1403, %v1268
  %v1439 = vsel %vm1435, %v1404, %v1270
  %v1440 = vsel %vm1435, %v1405, %v1272
  %v1441 = vsel %vm1435, %v1406, %v1274
  %v1442 = vsel %vm1435, %v1407, %v1276
  %v1443 = vsel %vm1435, %v1408, %v1278
  %v1444 = vsel %vm1435, %v1409, %v1280
  %v1445 = vsel %vm1435, %v1410, %v1282
  %v1446 = vsel %vm1435, %v1411, %v1284
  %v1447 = vsel %vm1435, %v1412, %v1286
  %v1448 = vsel %vm1435, %v1413, %v1288
  %v1449 = vsel %vm1435, %v1414, %v1290
  %v1450 = vsel %vm1435, %v1415, %v1292
  %v1451 = vsel %vm1435, %v1416, %v1294
  %v1452 = vsel %vm1435, %v1417, %v1296
  %v1453 = vsel %vm1435, %v1418, %v1298
  %v1454 = vsel %vm1435, %v1419, %v1300
  %v1455 = vsel %vm1435, %v1420, %v1302
  %v1456 = vsel %vm1435, %v1421, %v1304
  %v1457 = vsel %vm1435, %v1422, %v1306
  %v1458 = vsel %vm1435, %v1423, %v1308
  %v1459 = vsel %vm1435, %v1424, %v1310
  %v1460 = vsel %vm1435, %v1425, %v1312
  %v1461 = vsel %vm1435, %v1426, %v1314
  %v1462 = vsel %vm1435, %v1427, %v1316
  %v1463 = vsel %vm1435, %v1428, %v1318
  %v1464 = vsel %vm1435, %v1429, %v1320
  %v1465 = vsel %vm1435, %v1430, %v1322
  %v1466 = vsel %vm1435, %v1431, %v1324
  %v1467 = vsel %vm1435, %v1432, %v1326
  %v1468 = vsel %vm1435, %v1433, %v1328
  %v1469 = vsel %vm1435, %v1434, %v1330
  %1470 = vrot.lane.b32.xlu0 %v139, 120
  %v1471 = vpop.permute.xlu0 %1470
  %1472 = vrot.lane.b32.xlu0 %v142, 120
  %v1473 = vpop.permute.xlu0 %1472
  %1474 = vrot.lane.b32.xlu0 %v194, 120
  %v1475 = vpop.permute.xlu0 %1474
  %1476 = vrot.lane.b32.xlu0 %v197, 120
  %v1477 = vpop.permute.xlu0 %1476
  %1478 = vrot.lane.b32.xlu0 %v249, 120
  %v1479 = vpop.permute.xlu0 %1478
  %1480 = vrot.lane.b32.xlu0 %v252, 120
  %v1481 = vpop.permute.xlu0 %1480
  %1482 = vrot.lane.b32.xlu0 %v304, 120
  %v1483 = vpop.permute.xlu0 %1482
  %1484 = vrot.lane.b32.xlu0 %v307, 120
  %v1485 = vpop.permute.xlu0 %1484
  %1486 = vrot.lane.b32.xlu0 %v359, 120
  %v1487 = vpop.permute.xlu0 %1486
  %1488 = vrot.lane.b32.xlu0 %v362, 120
  %v1489 = vpop.permute.xlu0 %1488
  %1490 = vrot.lane.b32.xlu0 %v414, 120
  %v1491 = vpop.permute.xlu0 %1490
  %1492 = vrot.lane.b32.xlu0 %v417, 120
  %v1493 = vpop.permute.xlu0 %1492
  %1494 = vrot.lane.b32.xlu0 %v469, 120
  %v1495 = vpop.permute.xlu0 %1494
  %1496 = vrot.lane.b32.xlu0 %v472, 120
  %v1497 = vpop.permute.xlu0 %1496
  %1498 = vrot.lane.b32.xlu0 %v524, 120
  %v1499 = vpop.permute.xlu0 %1498
  %1500 = vrot.lane.b32.xlu0 %v527, 120
  %v1501 = vpop.permute.xlu0 %1500
  %1502 = vrot.lane.b32.xlu0 %v579, 120
  %v1503 = vpop.permute.xlu0 %1502
  %1504 = vrot.lane.b32.xlu0 %v582, 120
  %v1505 = vpop.permute.xlu0 %1504
  %1506 = vrot.lane.b32.xlu0 %v634, 120
  %v1507 = vpop.permute.xlu0 %1506
  %1508 = vrot.lane.b32.xlu0 %v637, 120
  %v1509 = vpop.permute.xlu0 %1508
  %1510 = vrot.lane.b32.xlu0 %v689, 120
  %v1511 = vpop.permute.xlu0 %1510
  %1512 = vrot.lane.b32.xlu0 %v692, 120
  %v1513 = vpop.permute.xlu0 %1512
  %1514 = vrot.lane.b32.xlu0 %v744, 120
  %v1515 = vpop.permute.xlu0 %1514
  %1516 = vrot.lane.b32.xlu0 %v747, 120
  %v1517 = vpop.permute.xlu0 %1516
  %1518 = vrot.lane.b32.xlu0 %v799, 120
  %v1519 = vpop.permute.xlu0 %1518
  %1520 = vrot.lane.b32.xlu0 %v802, 120
  %v1521 = vpop.permute.xlu0 %1520
  %1522 = vrot.lane.b32.xlu0 %v854, 120
  %v1523 = vpop.permute.xlu0 %1522
  %1524 = vrot.lane.b32.xlu0 %v857, 120
  %v1525 = vpop.permute.xlu0 %1524
  %1526 = vrot.lane.b32.xlu0 %v909, 120
  %v1527 = vpop.permute.xlu0 %1526
  %1528 = vrot.lane.b32.xlu0 %v912, 120
  %v1529 = vpop.permute.xlu0 %1528
  %1530 = vrot.lane.b32.xlu0 %v964, 120
  %v1531 = vpop.permute.xlu0 %1530
  %1532 = vrot.lane.b32.xlu0 %v967, 120
  %v1533 = vpop.permute.xlu0 %1532
  %1534 = vrot.lane.b32.xlu0 %v1019, 120
  %v1535 = vpop.permute.xlu0 %1534
  %1536 = vrot.lane.b32.xlu0 %v1022, 120
  %v1537 = vpop.permute.xlu0 %1536
  %1572 = vrot.lane.b32.xlu0 %v139, 122
  %v1573 = vpop.permute.xlu0 %1572
  %1574 = vrot.lane.b32.xlu0 %v142, 122
  %v1575 = vpop.permute.xlu0 %1574
  %1576 = vrot.lane.b32.xlu0 %v194, 122
  %v1577 = vpop.permute.xlu0 %1576
  %1578 = vrot.lane.b32.xlu0 %v197, 122
  %v1579 = vpop.permute.xlu0 %1578
  %1580 = vrot.lane.b32.xlu0 %v249, 122
  %v1581 = vpop.permute.xlu0 %1580
  %1582 = vrot.lane.b32.xlu0 %v252, 122
  %v1583 = vpop.permute.xlu0 %1582
  %1584 = vrot.lane.b32.xlu0 %v304, 122
  %v1585 = vpop.permute.xlu0 %1584
  %1586 = vrot.lane.b32.xlu0 %v307, 122
  %v1587 = vpop.permute.xlu0 %1586
  %1588 = vrot.lane.b32.xlu0 %v359, 122
  %v1589 = vpop.permute.xlu0 %1588
  %1590 = vrot.lane.b32.xlu0 %v362, 122
  %v1591 = vpop.permute.xlu0 %1590
  %1592 = vrot.lane.b32.xlu0 %v414, 122
  %v1593 = vpop.permute.xlu0 %1592
  %1594 = vrot.lane.b32.xlu0 %v417, 122
  %v1595 = vpop.permute.xlu0 %1594
  %1596 = vrot.lane.b32.xlu0 %v469, 122
  %v1597 = vpop.permute.xlu0 %1596
  %1598 = vrot.lane.b32.xlu0 %v472, 122
  %v1599 = vpop.permute.xlu0 %1598
  %1600 = vrot.lane.b32.xlu0 %v524, 122
  %v1601 = vpop.permute.xlu0 %1600
  %1602 = vrot.lane.b32.xlu0 %v527, 122
  %v1603 = vpop.permute.xlu0 %1602
  %1604 = vrot.lane.b32.xlu0 %v579, 122
  %v1605 = vpop.permute.xlu0 %1604
  %1606 = vrot.lane.b32.xlu0 %v582, 122
  %v1607 = vpop.permute.xlu0 %1606
  %1608 = vrot.lane.b32.xlu0 %v634, 122
  %v1609 = vpop.permute.xlu0 %1608
  %1610 = vrot.lane.b32.xlu0 %v637, 122
  %v1611 = vpop.permute.xlu0 %1610
  %1612 = vrot.lane.b32.xlu0 %v689, 122
  %v1613 = vpop.permute.xlu0 %1612
  %1614 = vrot.lane.b32.xlu0 %v692, 122
  %v1615 = vpop.permute.xlu0 %1614
  %1616 = vrot.lane.b32.xlu0 %v744, 122
  %v1617 = vpop.permute.xlu0 %1616
  %1618 = vrot.lane.b32.xlu0 %v747, 122
  %v1619 = vpop.permute.xlu0 %1618
  %1620 = vrot.lane.b32.xlu0 %v799, 122
  %v1621 = vpop.permute.xlu0 %1620
  %1622 = vrot.lane.b32.xlu0 %v802, 122
  %v1623 = vpop.permute.xlu0 %1622
  %1624 = vrot.lane.b32.xlu0 %v854, 122
  %v1625 = vpop.permute.xlu0 %1624
  %1626 = vrot.lane.b32.xlu0 %v857, 122
  %v1627 = vpop.permute.xlu0 %1626
  %1628 = vrot.lane.b32.xlu0 %v909, 122
  %v1629 = vpop.permute.xlu0 %1628
  %1630 = vrot.lane.b32.xlu0 %v912, 122
  %v1631 = vpop.permute.xlu0 %1630
  %1632 = vrot.lane.b32.xlu0 %v964, 122
  %v1633 = vpop.permute.xlu0 %1632
  %1634 = vrot.lane.b32.xlu0 %v967, 122
  %v1635 = vpop.permute.xlu0 %1634
  %1636 = vrot.lane.b32.xlu0 %v1019, 122
  %v1637 = vpop.permute.xlu0 %1636
  %1638 = vrot.lane.b32.xlu0 %v1022, 122
  %v1639 = vpop.permute.xlu0 %1638
  %1674 = vrot.lane.b32.xlu0 %v139, 124
  %v1675 = vpop.permute.xlu0 %1674
  %1676 = vrot.lane.b32.xlu0 %v142, 124
  %v1677 = vpop.permute.xlu0 %1676
  %1678 = vrot.lane.b32.xlu0 %v194, 124
  %v1679 = vpop.permute.xlu0 %1678
  %1680 = vrot.lane.b32.xlu0 %v197, 124
  %v1681 = vpop.permute.xlu0 %1680
  %1682 = vrot.lane.b32.xlu0 %v249, 124
  %v1683 = vpop.permute.xlu0 %1682
  %1684 = vrot.lane.b32.xlu0 %v252, 124
  %v1685 = vpop.permute.xlu0 %1684
  %1686 = vrot.lane.b32.xlu0 %v304, 124
  %v1687 = vpop.permute.xlu0 %1686
  %1688 = vrot.lane.b32.xlu0 %v307, 124
  %v1689 = vpop.permute.xlu0 %1688
  %1690 = vrot.lane.b32.xlu0 %v359, 124
  %v1691 = vpop.permute.xlu0 %1690
  %1692 = vrot.lane.b32.xlu0 %v362, 124
  %v1693 = vpop.permute.xlu0 %1692
  %1694 = vrot.lane.b32.xlu0 %v414, 124
  %v1695 = vpop.permute.xlu0 %1694
  %1696 = vrot.lane.b32.xlu0 %v417, 124
  %v1697 = vpop.permute.xlu0 %1696
  %1698 = vrot.lane.b32.xlu0 %v469, 124
  %v1699 = vpop.permute.xlu0 %1698
  %1700 = vrot.lane.b32.xlu0 %v472, 124
  %v1701 = vpop.permute.xlu0 %1700
  %1702 = vrot.lane.b32.xlu0 %v524, 124
  %v1703 = vpop.permute.xlu0 %1702
  %1704 = vrot.lane.b32.xlu0 %v527, 124
  %v1705 = vpop.permute.xlu0 %1704
  %1706 = vrot.lane.b32.xlu0 %v579, 124
  %v1707 = vpop.permute.xlu0 %1706
  %1708 = vrot.lane.b32.xlu0 %v582, 124
  %v1709 = vpop.permute.xlu0 %1708
  %1710 = vrot.lane.b32.xlu0 %v634, 124
  %v1711 = vpop.permute.xlu0 %1710
  %1712 = vrot.lane.b32.xlu0 %v637, 124
  %v1713 = vpop.permute.xlu0 %1712
  %1714 = vrot.lane.b32.xlu0 %v689, 124
  %v1715 = vpop.permute.xlu0 %1714
  %1716 = vrot.lane.b32.xlu0 %v692, 124
  %v1717 = vpop.permute.xlu0 %1716
  %1718 = vrot.lane.b32.xlu0 %v744, 124
  %v1719 = vpop.permute.xlu0 %1718
  %1720 = vrot.lane.b32.xlu0 %v747, 124
  %v1721 = vpop.permute.xlu0 %1720
  %1722 = vrot.lane.b32.xlu0 %v799, 124
  %v1723 = vpop.permute.xlu0 %1722
  %1724 = vrot.lane.b32.xlu0 %v802, 124
  %v1725 = vpop.permute.xlu0 %1724
  %1726 = vrot.lane.b32.xlu0 %v854, 124
  %v1727 = vpop.permute.xlu0 %1726
  %1728 = vrot.lane.b32.xlu0 %v857, 124
  %v1729 = vpop.permute.xlu0 %1728
  %1730 = vrot.lane.b32.xlu0 %v909, 124
  %v1731 = vpop.permute.xlu0 %1730
  %1732 = vrot.lane.b32.xlu0 %v912, 124
  %v1733 = vpop.permute.xlu0 %1732
  %1734 = vrot.lane.b32.xlu0 %v964, 124
  %v1735 = vpop.permute.xlu0 %1734
  %1736 = vrot.lane.b32.xlu0 %v967, 124
  %v1737 = vpop.permute.xlu0 %1736
  %1738 = vrot.lane.b32.xlu0 %v1019, 124
  %v1739 = vpop.permute.xlu0 %1738
  %1740 = vrot.lane.b32.xlu0 %v1022, 124
  %v1741 = vpop.permute.xlu0 %1740
  %1776 = vrot.lane.b32.xlu0 %v139, 126
  %v1777 = vpop.permute.xlu0 %1776
  %1778 = vrot.lane.b32.xlu0 %v142, 126
  %v1779 = vpop.permute.xlu0 %1778
  %1780 = vrot.lane.b32.xlu0 %v194, 126
  %v1781 = vpop.permute.xlu0 %1780
  %1782 = vrot.lane.b32.xlu0 %v197, 126
  %v1783 = vpop.permute.xlu0 %1782
  %1784 = vrot.lane.b32.xlu0 %v249, 126
  %v1785 = vpop.permute.xlu0 %1784
  %1786 = vrot.lane.b32.xlu0 %v252, 126
  %v1787 = vpop.permute.xlu0 %1786
  %1788 = vrot.lane.b32.xlu0 %v304, 126
  %v1789 = vpop.permute.xlu0 %1788
  %1790 = vrot.lane.b32.xlu0 %v307, 126
  %v1791 = vpop.permute.xlu0 %1790
  %1792 = vrot.lane.b32.xlu0 %v359, 126
  %v1793 = vpop.permute.xlu0 %1792
  %1794 = vrot.lane.b32.xlu0 %v362, 126
  %v1795 = vpop.permute.xlu0 %1794
  %1796 = vrot.lane.b32.xlu0 %v414, 126
  %v1797 = vpop.permute.xlu0 %1796
  %1798 = vrot.lane.b32.xlu0 %v417, 126
  %v1799 = vpop.permute.xlu0 %1798
  %1800 = vrot.lane.b32.xlu0 %v469, 126
  %v1801 = vpop.permute.xlu0 %1800
  %1802 = vrot.lane.b32.xlu0 %v472, 126
  %v1803 = vpop.permute.xlu0 %1802
  %1804 = vrot.lane.b32.xlu0 %v524, 126
  %v1805 = vpop.permute.xlu0 %1804
  %1806 = vrot.lane.b32.xlu0 %v527, 126
  %v1807 = vpop.permute.xlu0 %1806
  %1808 = vrot.lane.b32.xlu0 %v579, 126
  %v1809 = vpop.permute.xlu0 %1808
  %1810 = vrot.lane.b32.xlu0 %v582, 126
  %v1811 = vpop.permute.xlu0 %1810
  %1812 = vrot.lane.b32.xlu0 %v634, 126
  %v1813 = vpop.permute.xlu0 %1812
  %1814 = vrot.lane.b32.xlu0 %v637, 126
  %v1815 = vpop.permute.xlu0 %1814
  %1816 = vrot.lane.b32.xlu0 %v689, 126
  %v1817 = vpop.permute.xlu0 %1816
  %1818 = vrot.lane.b32.xlu0 %v692, 126
  %v1819 = vpop.permute.xlu0 %1818
  %1820 = vrot.lane.b32.xlu0 %v744, 126
  %v1821 = vpop.permute.xlu0 %1820
  %1822 = vrot.lane.b32.xlu0 %v747, 126
  %v1823 = vpop.permute.xlu0 %1822
  %1824 = vrot.lane.b32.xlu0 %v799, 126
  %v1825 = vpop.permute.xlu0 %1824
  %1826 = vrot.lane.b32.xlu0 %v802, 126
  %v1827 = vpop.permute.xlu0 %1826
  %1828 = vrot.lane.b32.xlu0 %v854, 126
  %v1829 = vpop.permute.xlu0 %1828
  %1830 = vrot.lane.b32.xlu0 %v857, 126
  %v1831 = vpop.permute.xlu0 %1830
  %1832 = vrot.lane.b32.xlu0 %v909, 126
  %v1833 = vpop.permute.xlu0 %1832
  %1834 = vrot.lane.b32.xlu0 %v912, 126
  %v1835 = vpop.permute.xlu0 %1834
  %1836 = vrot.lane.b32.xlu0 %v964, 126
  %v1837 = vpop.permute.xlu0 %1836
  %1838 = vrot.lane.b32.xlu0 %v967, 126
  %v1839 = vpop.permute.xlu0 %1838
  %1840 = vrot.lane.b32.xlu0 %v1019, 126
  %v1841 = vpop.permute.xlu0 %1840
  %1842 = vrot.lane.b32.xlu0 %v1022, 126
  %v1843 = vpop.permute.xlu0 %1842
  %v1878 = vsel %vm1365, %v1471, %v1573
  %v1879 = vsel %vm1365, %v1473, %v1575
  %v1880 = vsel %vm1365, %v1475, %v1577
  %v1881 = vsel %vm1365, %v1477, %v1579
  %v1882 = vsel %vm1365, %v1479, %v1581
  %v1883 = vsel %vm1365, %v1481, %v1583
  %v1884 = vsel %vm1365, %v1483, %v1585
  %v1885 = vsel %vm1365, %v1485, %v1587
  %v1886 = vsel %vm1365, %v1487, %v1589
  %v1887 = vsel %vm1365, %v1489, %v1591
  %v1888 = vsel %vm1365, %v1491, %v1593
  %v1889 = vsel %vm1365, %v1493, %v1595
  %v1890 = vsel %vm1365, %v1495, %v1597
  %v1891 = vsel %vm1365, %v1497, %v1599
  %v1892 = vsel %vm1365, %v1499, %v1601
  %v1893 = vsel %vm1365, %v1501, %v1603
  %v1894 = vsel %vm1365, %v1503, %v1605
  %v1895 = vsel %vm1365, %v1505, %v1607
  %v1896 = vsel %vm1365, %v1507, %v1609
  %v1897 = vsel %vm1365, %v1509, %v1611
  %v1898 = vsel %vm1365, %v1511, %v1613
  %v1899 = vsel %vm1365, %v1513, %v1615
  %v1900 = vsel %vm1365, %v1515, %v1617
  %v1901 = vsel %vm1365, %v1517, %v1619
  %v1902 = vsel %vm1365, %v1519, %v1621
  %v1903 = vsel %vm1365, %v1521, %v1623
  %v1904 = vsel %vm1365, %v1523, %v1625
  %v1905 = vsel %vm1365, %v1525, %v1627
  %v1906 = vsel %vm1365, %v1527, %v1629
  %v1907 = vsel %vm1365, %v1529, %v1631
  %v1908 = vsel %vm1365, %v1531, %v1633
  %v1909 = vsel %vm1365, %v1533, %v1635
  %v1910 = vsel %vm1365, %v1535, %v1637
  %v1911 = vsel %vm1365, %v1537, %v1639
  %v1912 = vsel %vm1400, %v1878, %v1675
  %v1913 = vsel %vm1400, %v1879, %v1677
  %v1914 = vsel %vm1400, %v1880, %v1679
  %v1915 = vsel %vm1400, %v1881, %v1681
  %v1916 = vsel %vm1400, %v1882, %v1683
  %v1917 = vsel %vm1400, %v1883, %v1685
  %v1918 = vsel %vm1400, %v1884, %v1687
  %v1919 = vsel %vm1400, %v1885, %v1689
  %v1920 = vsel %vm1400, %v1886, %v1691
  %v1921 = vsel %vm1400, %v1887, %v1693
  %v1922 = vsel %vm1400, %v1888, %v1695
  %v1923 = vsel %vm1400, %v1889, %v1697
  %v1924 = vsel %vm1400, %v1890, %v1699
  %v1925 = vsel %vm1400, %v1891, %v1701
  %v1926 = vsel %vm1400, %v1892, %v1703
  %v1927 = vsel %vm1400, %v1893, %v1705
  %v1928 = vsel %vm1400, %v1894, %v1707
  %v1929 = vsel %vm1400, %v1895, %v1709
  %v1930 = vsel %vm1400, %v1896, %v1711
  %v1931 = vsel %vm1400, %v1897, %v1713
  %v1932 = vsel %vm1400, %v1898, %v1715
  %v1933 = vsel %vm1400, %v1899, %v1717
  %v1934 = vsel %vm1400, %v1900, %v1719
  %v1935 = vsel %vm1400, %v1901, %v1721
  %v1936 = vsel %vm1400, %v1902, %v1723
  %v1937 = vsel %vm1400, %v1903, %v1725
  %v1938 = vsel %vm1400, %v1904, %v1727
  %v1939 = vsel %vm1400, %v1905, %v1729
  %v1940 = vsel %vm1400, %v1906, %v1731
  %v1941 = vsel %vm1400, %v1907, %v1733
  %v1942 = vsel %vm1400, %v1908, %v1735
  %v1943 = vsel %vm1400, %v1909, %v1737
  %v1944 = vsel %vm1400, %v1910, %v1739
  %v1945 = vsel %vm1400, %v1911, %v1741
  %v1946 = vsel %vm1435, %v1912, %v1777
  %v1947 = vsel %vm1435, %v1913, %v1779
  %v1948 = vsel %vm1435, %v1914, %v1781
  %v1949 = vsel %vm1435, %v1915, %v1783
  %v1950 = vsel %vm1435, %v1916, %v1785
  %v1951 = vsel %vm1435, %v1917, %v1787
  %v1952 = vsel %vm1435, %v1918, %v1789
  %v1953 = vsel %vm1435, %v1919, %v1791
  %v1954 = vsel %vm1435, %v1920, %v1793
  %v1955 = vsel %vm1435, %v1921, %v1795
  %v1956 = vsel %vm1435, %v1922, %v1797
  %v1957 = vsel %vm1435, %v1923, %v1799
  %v1958 = vsel %vm1435, %v1924, %v1801
  %v1959 = vsel %vm1435, %v1925, %v1803
  %v1960 = vsel %vm1435, %v1926, %v1805
  %v1961 = vsel %vm1435, %v1927, %v1807
  %v1962 = vsel %vm1435, %v1928, %v1809
  %v1963 = vsel %vm1435, %v1929, %v1811
  %v1964 = vsel %vm1435, %v1930, %v1813
  %v1965 = vsel %vm1435, %v1931, %v1815
  %v1966 = vsel %vm1435, %v1932, %v1817
  %v1967 = vsel %vm1435, %v1933, %v1819
  %v1968 = vsel %vm1435, %v1934, %v1821
  %v1969 = vsel %vm1435, %v1935, %v1823
  %v1970 = vsel %vm1435, %v1936, %v1825
  %v1971 = vsel %vm1435, %v1937, %v1827
  %v1972 = vsel %vm1435, %v1938, %v1829
  %v1973 = vsel %vm1435, %v1939, %v1831
  %v1974 = vsel %vm1435, %v1940, %v1833
  %v1975 = vsel %vm1435, %v1941, %v1835
  %v1976 = vsel %vm1435, %v1942, %v1837
  %v1977 = vsel %vm1435, %v1943, %v1839
  %v1978 = vsel %vm1435, %v1944, %v1841
  %v1979 = vsel %vm1435, %v1945, %v1843
  %v1980 = vld [vmem:[%s3] sm:$0xff]
  %v1981 = vld [vmem:[%s3 + $0x8] sm:$0xff]
  %v1982 = vld [vmem:[%s4] sm:$0xff]
  %v1983 = vld [vmem:[%s4 + $0x8] sm:$0xff]
  %v1984 = vmul.f32 %v1436, %v1980
  %v1985 = vmul.f32 %v1437, %v1981
  %v1986 = vmul.f32 %v1438, %v1980
  %v1987 = vmul.f32 %v1439, %v1981
  %v1988 = vmul.f32 %v1440, %v1980
  %v1989 = vmul.f32 %v1441, %v1981
  %v1990 = vmul.f32 %v1442, %v1980
  %v1991 = vmul.f32 %v1443, %v1981
  %v1992 = vmul.f32 %v1444, %v1980
  %v1993 = vmul.f32 %v1445, %v1981
  %v1994 = vmul.f32 %v1446, %v1980
  %v1995 = vmul.f32 %v1447, %v1981
  %v1996 = vmul.f32 %v1448, %v1980
  %v1997 = vmul.f32 %v1449, %v1981
  %v1998 = vmul.f32 %v1450, %v1980
  %v1999 = vmul.f32 %v1451, %v1981
  %v2000 = vmul.f32 %v1452, %v1980
  %v2001 = vmul.f32 %v1453, %v1981
  %v2002 = vmul.f32 %v1454, %v1980
  %v2003 = vmul.f32 %v1455, %v1981
  %v2004 = vmul.f32 %v1456, %v1980
  %v2005 = vmul.f32 %v1457, %v1981
  %v2006 = vmul.f32 %v1458, %v1980
  %v2007 = vmul.f32 %v1459, %v1981
  %v2008 = vmul.f32 %v1460, %v1980
  %v2009 = vmul.f32 %v1461, %v1981
  %v2010 = vmul.f32 %v1462, %v1980
  %v2011 = vmul.f32 %v1463, %v1981
  %v2012 = vmul.f32 %v1464, %v1980
  %v2013 = vmul.f32 %v1465, %v1981
  %v2014 = vmul.f32 %v1466, %v1980
  %v2015 = vmul.f32 %v1467, %v1981
  %v2016 = vmul.f32 %v1468, %v1980
  %v2017 = vmul.f32 %v1469, %v1981
  %v2018 = vmul.f32 %v1946, %v1982
  %v2019 = vmul.f32 %v1947, %v1983
  %v2020 = vmul.f32 %v1948, %v1982
  %v2021 = vmul.f32 %v1949, %v1983
  %v2022 = vmul.f32 %v1950, %v1982
  %v2023 = vmul.f32 %v1951, %v1983
  %v2024 = vmul.f32 %v1952, %v1982
  %v2025 = vmul.f32 %v1953, %v1983
  %v2026 = vmul.f32 %v1954, %v1982
  %v2027 = vmul.f32 %v1955, %v1983
  %v2028 = vmul.f32 %v1956, %v1982
  %v2029 = vmul.f32 %v1957, %v1983
  %v2030 = vmul.f32 %v1958, %v1982
  %v2031 = vmul.f32 %v1959, %v1983
  %v2032 = vmul.f32 %v1960, %v1982
  %v2033 = vmul.f32 %v1961, %v1983
  %v2034 = vmul.f32 %v1962, %v1982
  %v2035 = vmul.f32 %v1963, %v1983
  %v2036 = vmul.f32 %v1964, %v1982
  %v2037 = vmul.f32 %v1965, %v1983
  %v2038 = vmul.f32 %v1966, %v1982
  %v2039 = vmul.f32 %v1967, %v1983
  %v2040 = vmul.f32 %v1968, %v1982
  %v2041 = vmul.f32 %v1969, %v1983
  %v2042 = vmul.f32 %v1970, %v1982
  %v2043 = vmul.f32 %v1971, %v1983
  %v2044 = vmul.f32 %v1972, %v1982
  %v2045 = vmul.f32 %v1973, %v1983
  %v2046 = vmul.f32 %v1974, %v1982
  %v2047 = vmul.f32 %v1975, %v1983
  %v2048 = vmul.f32 %v1976, %v1982
  %v2049 = vmul.f32 %v1977, %v1983
  %v2050 = vmul.f32 %v1978, %v1982
  %v2051 = vmul.f32 %v1979, %v1983
  %v2052 = vsub.f32 %v1984, %v2018
  %v2053 = vsub.f32 %v1985, %v2019
  %v2054 = vsub.f32 %v1986, %v2020
  %v2055 = vsub.f32 %v1987, %v2021
  %v2056 = vsub.f32 %v1988, %v2022
  %v2057 = vsub.f32 %v1989, %v2023
  %v2058 = vsub.f32 %v1990, %v2024
  %v2059 = vsub.f32 %v1991, %v2025
  %v2060 = vsub.f32 %v1992, %v2026
  %v2061 = vsub.f32 %v1993, %v2027
  %v2062 = vsub.f32 %v1994, %v2028
  %v2063 = vsub.f32 %v1995, %v2029
  %v2064 = vsub.f32 %v1996, %v2030
  %v2065 = vsub.f32 %v1997, %v2031
  %v2066 = vsub.f32 %v1998, %v2032
  %v2067 = vsub.f32 %v1999, %v2033
  %v2068 = vsub.f32 %v2000, %v2034
  %v2069 = vsub.f32 %v2001, %v2035
  %v2070 = vsub.f32 %v2002, %v2036
  %v2071 = vsub.f32 %v2003, %v2037
  %v2072 = vsub.f32 %v2004, %v2038
  %v2073 = vsub.f32 %v2005, %v2039
  %v2074 = vsub.f32 %v2006, %v2040
  %v2075 = vsub.f32 %v2007, %v2041
  %v2076 = vsub.f32 %v2008, %v2042
  %v2077 = vsub.f32 %v2009, %v2043
  %v2078 = vsub.f32 %v2010, %v2044
  %v2079 = vsub.f32 %v2011, %v2045
  %v2080 = vsub.f32 %v2012, %v2046
  %v2081 = vsub.f32 %v2013, %v2047
  %v2082 = vsub.f32 %v2014, %v2048
  %v2083 = vsub.f32 %v2015, %v2049
  %v2084 = vsub.f32 %v2016, %v2050
  %v2085 = vsub.f32 %v2017, %v2051
  %v2086 = vmul.f32 %v1436, %v1982
  %v2087 = vmul.f32 %v1437, %v1983
  %v2088 = vmul.f32 %v1438, %v1982
  %v2089 = vmul.f32 %v1439, %v1983
  %v2090 = vmul.f32 %v1440, %v1982
  %v2091 = vmul.f32 %v1441, %v1983
  %v2092 = vmul.f32 %v1442, %v1982
  %v2093 = vmul.f32 %v1443, %v1983
  %v2094 = vmul.f32 %v1444, %v1982
  %v2095 = vmul.f32 %v1445, %v1983
  %v2096 = vmul.f32 %v1446, %v1982
  %v2097 = vmul.f32 %v1447, %v1983
  %v2098 = vmul.f32 %v1448, %v1982
  %v2099 = vmul.f32 %v1449, %v1983
  %v2100 = vmul.f32 %v1450, %v1982
  %v2101 = vmul.f32 %v1451, %v1983
  %v2102 = vmul.f32 %v1452, %v1982
  %v2103 = vmul.f32 %v1453, %v1983
  %v2104 = vmul.f32 %v1454, %v1982
  %v2105 = vmul.f32 %v1455, %v1983
  %v2106 = vmul.f32 %v1456, %v1982
  %v2107 = vmul.f32 %v1457, %v1983
  %v2108 = vmul.f32 %v1458, %v1982
  %v2109 = vmul.f32 %v1459, %v1983
  %v2110 = vmul.f32 %v1460, %v1982
  %v2111 = vmul.f32 %v1461, %v1983
  %v2112 = vmul.f32 %v1462, %v1982
  %v2113 = vmul.f32 %v1463, %v1983
  %v2114 = vmul.f32 %v1464, %v1982
  %v2115 = vmul.f32 %v1465, %v1983
  %v2116 = vmul.f32 %v1466, %v1982
  %v2117 = vmul.f32 %v1467, %v1983
  %v2118 = vmul.f32 %v1468, %v1982
  %v2119 = vmul.f32 %v1469, %v1983
  %v2120 = vmul.f32 %v1946, %v1980
  %v2121 = vmul.f32 %v1947, %v1981
  %v2122 = vmul.f32 %v1948, %v1980
  %v2123 = vmul.f32 %v1949, %v1981
  %v2124 = vmul.f32 %v1950, %v1980
  %v2125 = vmul.f32 %v1951, %v1981
  %v2126 = vmul.f32 %v1952, %v1980
  %v2127 = vmul.f32 %v1953, %v1981
  %v2128 = vmul.f32 %v1954, %v1980
  %v2129 = vmul.f32 %v1955, %v1981
  %v2130 = vmul.f32 %v1956, %v1980
  %v2131 = vmul.f32 %v1957, %v1981
  %v2132 = vmul.f32 %v1958, %v1980
  %v2133 = vmul.f32 %v1959, %v1981
  %v2134 = vmul.f32 %v1960, %v1980
  %v2135 = vmul.f32 %v1961, %v1981
  %v2136 = vmul.f32 %v1962, %v1980
  %v2137 = vmul.f32 %v1963, %v1981
  %v2138 = vmul.f32 %v1964, %v1980
  %v2139 = vmul.f32 %v1965, %v1981
  %v2140 = vmul.f32 %v1966, %v1980
  %v2141 = vmul.f32 %v1967, %v1981
  %v2142 = vmul.f32 %v1968, %v1980
  %v2143 = vmul.f32 %v1969, %v1981
  %v2144 = vmul.f32 %v1970, %v1980
  %v2145 = vmul.f32 %v1971, %v1981
  %v2146 = vmul.f32 %v1972, %v1980
  %v2147 = vmul.f32 %v1973, %v1981
  %v2148 = vmul.f32 %v1974, %v1980
  %v2149 = vmul.f32 %v1975, %v1981
  %v2150 = vmul.f32 %v1976, %v1980
  %v2151 = vmul.f32 %v1977, %v1981
  %v2152 = vmul.f32 %v1978, %v1980
  %v2153 = vmul.f32 %v1979, %v1981
  %v2154 = vadd.f32 %v2086, %v2120
  %v2155 = vadd.f32 %v2087, %v2121
  %v2156 = vadd.f32 %v2088, %v2122
  %v2157 = vadd.f32 %v2089, %v2123
  %v2158 = vadd.f32 %v2090, %v2124
  %v2159 = vadd.f32 %v2091, %v2125
  %v2160 = vadd.f32 %v2092, %v2126
  %v2161 = vadd.f32 %v2093, %v2127
  %v2162 = vadd.f32 %v2094, %v2128
  %v2163 = vadd.f32 %v2095, %v2129
  %v2164 = vadd.f32 %v2096, %v2130
  %v2165 = vadd.f32 %v2097, %v2131
  %v2166 = vadd.f32 %v2098, %v2132
  %v2167 = vadd.f32 %v2099, %v2133
  %v2168 = vadd.f32 %v2100, %v2134
  %v2169 = vadd.f32 %v2101, %v2135
  %v2170 = vadd.f32 %v2102, %v2136
  %v2171 = vadd.f32 %v2103, %v2137
  %v2172 = vadd.f32 %v2104, %v2138
  %v2173 = vadd.f32 %v2105, %v2139
  %v2174 = vadd.f32 %v2106, %v2140
  %v2175 = vadd.f32 %v2107, %v2141
  %v2176 = vadd.f32 %v2108, %v2142
  %v2177 = vadd.f32 %v2109, %v2143
  %v2178 = vadd.f32 %v2110, %v2144
  %v2179 = vadd.f32 %v2111, %v2145
  %v2180 = vadd.f32 %v2112, %v2146
  %v2181 = vadd.f32 %v2113, %v2147
  %v2182 = vadd.f32 %v2114, %v2148
  %v2183 = vadd.f32 %v2115, %v2149
  %v2184 = vadd.f32 %v2116, %v2150
  %v2185 = vadd.f32 %v2117, %v2151
  %v2186 = vadd.f32 %v2118, %v2152
  %v2187 = vadd.f32 %v2119, %v2153
  %v2188 = vsel %vm1365, %v1777, %v139
  %v2189 = vsel %vm1365, %v1779, %v142
  %v2190 = vsel %vm1365, %v1781, %v194
  %v2191 = vsel %vm1365, %v1783, %v197
  %v2192 = vsel %vm1365, %v1785, %v249
  %v2193 = vsel %vm1365, %v1787, %v252
  %v2194 = vsel %vm1365, %v1789, %v304
  %v2195 = vsel %vm1365, %v1791, %v307
  %v2196 = vsel %vm1365, %v1793, %v359
  %v2197 = vsel %vm1365, %v1795, %v362
  %v2198 = vsel %vm1365, %v1797, %v414
  %v2199 = vsel %vm1365, %v1799, %v417
  %v2200 = vsel %vm1365, %v1801, %v469
  %v2201 = vsel %vm1365, %v1803, %v472
  %v2202 = vsel %vm1365, %v1805, %v524
  %v2203 = vsel %vm1365, %v1807, %v527
  %v2204 = vsel %vm1365, %v1809, %v579
  %v2205 = vsel %vm1365, %v1811, %v582
  %v2206 = vsel %vm1365, %v1813, %v634
  %v2207 = vsel %vm1365, %v1815, %v637
  %v2208 = vsel %vm1365, %v1817, %v689
  %v2209 = vsel %vm1365, %v1819, %v692
  %v2210 = vsel %vm1365, %v1821, %v744
  %v2211 = vsel %vm1365, %v1823, %v747
  %v2212 = vsel %vm1365, %v1825, %v799
  %v2213 = vsel %vm1365, %v1827, %v802
  %v2214 = vsel %vm1365, %v1829, %v854
  %v2215 = vsel %vm1365, %v1831, %v857
  %v2216 = vsel %vm1365, %v1833, %v909
  %v2217 = vsel %vm1365, %v1835, %v912
  %v2218 = vsel %vm1365, %v1837, %v964
  %v2219 = vsel %vm1365, %v1839, %v967
  %v2220 = vsel %vm1365, %v1841, %v1019
  %v2221 = vsel %vm1365, %v1843, %v1022
  %v2222 = vsel %vm1400, %v2188, %v1060
  %v2223 = vsel %vm1400, %v2189, %v1062
  %v2224 = vsel %vm1400, %v2190, %v1064
  %v2225 = vsel %vm1400, %v2191, %v1066
  %v2226 = vsel %vm1400, %v2192, %v1068
  %v2227 = vsel %vm1400, %v2193, %v1070
  %v2228 = vsel %vm1400, %v2194, %v1072
  %v2229 = vsel %vm1400, %v2195, %v1074
  %v2230 = vsel %vm1400, %v2196, %v1076
  %v2231 = vsel %vm1400, %v2197, %v1078
  %v2232 = vsel %vm1400, %v2198, %v1080
  %v2233 = vsel %vm1400, %v2199, %v1082
  %v2234 = vsel %vm1400, %v2200, %v1084
  %v2235 = vsel %vm1400, %v2201, %v1086
  %v2236 = vsel %vm1400, %v2202, %v1088
  %v2237 = vsel %vm1400, %v2203, %v1090
  %v2238 = vsel %vm1400, %v2204, %v1092
  %v2239 = vsel %vm1400, %v2205, %v1094
  %v2240 = vsel %vm1400, %v2206, %v1096
  %v2241 = vsel %vm1400, %v2207, %v1098
  %v2242 = vsel %vm1400, %v2208, %v1100
  %v2243 = vsel %vm1400, %v2209, %v1102
  %v2244 = vsel %vm1400, %v2210, %v1104
  %v2245 = vsel %vm1400, %v2211, %v1106
  %v2246 = vsel %vm1400, %v2212, %v1108
  %v2247 = vsel %vm1400, %v2213, %v1110
  %v2248 = vsel %vm1400, %v2214, %v1112
  %v2249 = vsel %vm1400, %v2215, %v1114
  %v2250 = vsel %vm1400, %v2216, %v1116
  %v2251 = vsel %vm1400, %v2217, %v1118
  %v2252 = vsel %vm1400, %v2218, %v1120
  %v2253 = vsel %vm1400, %v2219, %v1122
  %v2254 = vsel %vm1400, %v2220, %v1124
  %v2255 = vsel %vm1400, %v2221, %v1126
  %v2256 = vsel %vm1435, %v2222, %v1162
  %v2257 = vsel %vm1435, %v2223, %v1164
  %v2258 = vsel %vm1435, %v2224, %v1166
  %v2259 = vsel %vm1435, %v2225, %v1168
  %v2260 = vsel %vm1435, %v2226, %v1170
  %v2261 = vsel %vm1435, %v2227, %v1172
  %v2262 = vsel %vm1435, %v2228, %v1174
  %v2263 = vsel %vm1435, %v2229, %v1176
  %v2264 = vsel %vm1435, %v2230, %v1178
  %v2265 = vsel %vm1435, %v2231, %v1180
  %v2266 = vsel %vm1435, %v2232, %v1182
  %v2267 = vsel %vm1435, %v2233, %v1184
  %v2268 = vsel %vm1435, %v2234, %v1186
  %v2269 = vsel %vm1435, %v2235, %v1188
  %v2270 = vsel %vm1435, %v2236, %v1190
  %v2271 = vsel %vm1435, %v2237, %v1192
  %v2272 = vsel %vm1435, %v2238, %v1194
  %v2273 = vsel %vm1435, %v2239, %v1196
  %v2274 = vsel %vm1435, %v2240, %v1198
  %v2275 = vsel %vm1435, %v2241, %v1200
  %v2276 = vsel %vm1435, %v2242, %v1202
  %v2277 = vsel %vm1435, %v2243, %v1204
  %v2278 = vsel %vm1435, %v2244, %v1206
  %v2279 = vsel %vm1435, %v2245, %v1208
  %v2280 = vsel %vm1435, %v2246, %v1210
  %v2281 = vsel %vm1435, %v2247, %v1212
  %v2282 = vsel %vm1435, %v2248, %v1214
  %v2283 = vsel %vm1435, %v2249, %v1216
  %v2284 = vsel %vm1435, %v2250, %v1218
  %v2285 = vsel %vm1435, %v2251, %v1220
  %v2286 = vsel %vm1435, %v2252, %v1222
  %v2287 = vsel %vm1435, %v2253, %v1224
  %v2288 = vsel %vm1435, %v2254, %v1226
  %v2289 = vsel %vm1435, %v2255, %v1228
  %2290 = vrot.lane.b32.xlu0 %v139, 118
  %v2291 = vpop.permute.xlu0 %2290
  %2292 = vrot.lane.b32.xlu0 %v142, 118
  %v2293 = vpop.permute.xlu0 %2292
  %2294 = vrot.lane.b32.xlu0 %v194, 118
  %v2295 = vpop.permute.xlu0 %2294
  %2296 = vrot.lane.b32.xlu0 %v197, 118
  %v2297 = vpop.permute.xlu0 %2296
  %2298 = vrot.lane.b32.xlu0 %v249, 118
  %v2299 = vpop.permute.xlu0 %2298
  %2300 = vrot.lane.b32.xlu0 %v252, 118
  %v2301 = vpop.permute.xlu0 %2300
  %2302 = vrot.lane.b32.xlu0 %v304, 118
  %v2303 = vpop.permute.xlu0 %2302
  %2304 = vrot.lane.b32.xlu0 %v307, 118
  %v2305 = vpop.permute.xlu0 %2304
  %2306 = vrot.lane.b32.xlu0 %v359, 118
  %v2307 = vpop.permute.xlu0 %2306
  %2308 = vrot.lane.b32.xlu0 %v362, 118
  %v2309 = vpop.permute.xlu0 %2308
  %2310 = vrot.lane.b32.xlu0 %v414, 118
  %v2311 = vpop.permute.xlu0 %2310
  %2312 = vrot.lane.b32.xlu0 %v417, 118
  %v2313 = vpop.permute.xlu0 %2312
  %2314 = vrot.lane.b32.xlu0 %v469, 118
  %v2315 = vpop.permute.xlu0 %2314
  %2316 = vrot.lane.b32.xlu0 %v472, 118
  %v2317 = vpop.permute.xlu0 %2316
  %2318 = vrot.lane.b32.xlu0 %v524, 118
  %v2319 = vpop.permute.xlu0 %2318
  %2320 = vrot.lane.b32.xlu0 %v527, 118
  %v2321 = vpop.permute.xlu0 %2320
  %2322 = vrot.lane.b32.xlu0 %v579, 118
  %v2323 = vpop.permute.xlu0 %2322
  %2324 = vrot.lane.b32.xlu0 %v582, 118
  %v2325 = vpop.permute.xlu0 %2324
  %2326 = vrot.lane.b32.xlu0 %v634, 118
  %v2327 = vpop.permute.xlu0 %2326
  %2328 = vrot.lane.b32.xlu0 %v637, 118
  %v2329 = vpop.permute.xlu0 %2328
  %2330 = vrot.lane.b32.xlu0 %v689, 118
  %v2331 = vpop.permute.xlu0 %2330
  %2332 = vrot.lane.b32.xlu0 %v692, 118
  %v2333 = vpop.permute.xlu0 %2332
  %2334 = vrot.lane.b32.xlu0 %v744, 118
  %v2335 = vpop.permute.xlu0 %2334
  %2336 = vrot.lane.b32.xlu0 %v747, 118
  %v2337 = vpop.permute.xlu0 %2336
  %2338 = vrot.lane.b32.xlu0 %v799, 118
  %v2339 = vpop.permute.xlu0 %2338
  %2340 = vrot.lane.b32.xlu0 %v802, 118
  %v2341 = vpop.permute.xlu0 %2340
  %2342 = vrot.lane.b32.xlu0 %v854, 118
  %v2343 = vpop.permute.xlu0 %2342
  %2344 = vrot.lane.b32.xlu0 %v857, 118
  %v2345 = vpop.permute.xlu0 %2344
  %2346 = vrot.lane.b32.xlu0 %v909, 118
  %v2347 = vpop.permute.xlu0 %2346
  %2348 = vrot.lane.b32.xlu0 %v912, 118
  %v2349 = vpop.permute.xlu0 %2348
  %2350 = vrot.lane.b32.xlu0 %v964, 118
  %v2351 = vpop.permute.xlu0 %2350
  %2352 = vrot.lane.b32.xlu0 %v967, 118
  %v2353 = vpop.permute.xlu0 %2352
  %2354 = vrot.lane.b32.xlu0 %v1019, 118
  %v2355 = vpop.permute.xlu0 %2354
  %2356 = vrot.lane.b32.xlu0 %v1022, 118
  %v2357 = vpop.permute.xlu0 %2356
  %v2392 = vsel %vm1365, %v2291, %v1471
  %v2393 = vsel %vm1365, %v2293, %v1473
  %v2394 = vsel %vm1365, %v2295, %v1475
  %v2395 = vsel %vm1365, %v2297, %v1477
  %v2396 = vsel %vm1365, %v2299, %v1479
  %v2397 = vsel %vm1365, %v2301, %v1481
  %v2398 = vsel %vm1365, %v2303, %v1483
  %v2399 = vsel %vm1365, %v2305, %v1485
  %v2400 = vsel %vm1365, %v2307, %v1487
  %v2401 = vsel %vm1365, %v2309, %v1489
  %v2402 = vsel %vm1365, %v2311, %v1491
  %v2403 = vsel %vm1365, %v2313, %v1493
  %v2404 = vsel %vm1365, %v2315, %v1495
  %v2405 = vsel %vm1365, %v2317, %v1497
  %v2406 = vsel %vm1365, %v2319, %v1499
  %v2407 = vsel %vm1365, %v2321, %v1501
  %v2408 = vsel %vm1365, %v2323, %v1503
  %v2409 = vsel %vm1365, %v2325, %v1505
  %v2410 = vsel %vm1365, %v2327, %v1507
  %v2411 = vsel %vm1365, %v2329, %v1509
  %v2412 = vsel %vm1365, %v2331, %v1511
  %v2413 = vsel %vm1365, %v2333, %v1513
  %v2414 = vsel %vm1365, %v2335, %v1515
  %v2415 = vsel %vm1365, %v2337, %v1517
  %v2416 = vsel %vm1365, %v2339, %v1519
  %v2417 = vsel %vm1365, %v2341, %v1521
  %v2418 = vsel %vm1365, %v2343, %v1523
  %v2419 = vsel %vm1365, %v2345, %v1525
  %v2420 = vsel %vm1365, %v2347, %v1527
  %v2421 = vsel %vm1365, %v2349, %v1529
  %v2422 = vsel %vm1365, %v2351, %v1531
  %v2423 = vsel %vm1365, %v2353, %v1533
  %v2424 = vsel %vm1365, %v2355, %v1535
  %v2425 = vsel %vm1365, %v2357, %v1537
  %v2426 = vsel %vm1400, %v2392, %v1573
  %v2427 = vsel %vm1400, %v2393, %v1575
  %v2428 = vsel %vm1400, %v2394, %v1577
  %v2429 = vsel %vm1400, %v2395, %v1579
  %v2430 = vsel %vm1400, %v2396, %v1581
  %v2431 = vsel %vm1400, %v2397, %v1583
  %v2432 = vsel %vm1400, %v2398, %v1585
  %v2433 = vsel %vm1400, %v2399, %v1587
  %v2434 = vsel %vm1400, %v2400, %v1589
  %v2435 = vsel %vm1400, %v2401, %v1591
  %v2436 = vsel %vm1400, %v2402, %v1593
  %v2437 = vsel %vm1400, %v2403, %v1595
  %v2438 = vsel %vm1400, %v2404, %v1597
  %v2439 = vsel %vm1400, %v2405, %v1599
  %v2440 = vsel %vm1400, %v2406, %v1601
  %v2441 = vsel %vm1400, %v2407, %v1603
  %v2442 = vsel %vm1400, %v2408, %v1605
  %v2443 = vsel %vm1400, %v2409, %v1607
  %v2444 = vsel %vm1400, %v2410, %v1609
  %v2445 = vsel %vm1400, %v2411, %v1611
  %v2446 = vsel %vm1400, %v2412, %v1613
  %v2447 = vsel %vm1400, %v2413, %v1615
  %v2448 = vsel %vm1400, %v2414, %v1617
  %v2449 = vsel %vm1400, %v2415, %v1619
  %v2450 = vsel %vm1400, %v2416, %v1621
  %v2451 = vsel %vm1400, %v2417, %v1623
  %v2452 = vsel %vm1400, %v2418, %v1625
  %v2453 = vsel %vm1400, %v2419, %v1627
  %v2454 = vsel %vm1400, %v2420, %v1629
  %v2455 = vsel %vm1400, %v2421, %v1631
  %v2456 = vsel %vm1400, %v2422, %v1633
  %v2457 = vsel %vm1400, %v2423, %v1635
  %v2458 = vsel %vm1400, %v2424, %v1637
  %v2459 = vsel %vm1400, %v2425, %v1639
  %v2460 = vsel %vm1435, %v2426, %v1675
  %v2461 = vsel %vm1435, %v2427, %v1677
  %v2462 = vsel %vm1435, %v2428, %v1679
  %v2463 = vsel %vm1435, %v2429, %v1681
  %v2464 = vsel %vm1435, %v2430, %v1683
  %v2465 = vsel %vm1435, %v2431, %v1685
  %v2466 = vsel %vm1435, %v2432, %v1687
  %v2467 = vsel %vm1435, %v2433, %v1689
  %v2468 = vsel %vm1435, %v2434, %v1691
  %v2469 = vsel %vm1435, %v2435, %v1693
  %v2470 = vsel %vm1435, %v2436, %v1695
  %v2471 = vsel %vm1435, %v2437, %v1697
  %v2472 = vsel %vm1435, %v2438, %v1699
  %v2473 = vsel %vm1435, %v2439, %v1701
  %v2474 = vsel %vm1435, %v2440, %v1703
  %v2475 = vsel %vm1435, %v2441, %v1705
  %v2476 = vsel %vm1435, %v2442, %v1707
  %v2477 = vsel %vm1435, %v2443, %v1709
  %v2478 = vsel %vm1435, %v2444, %v1711
  %v2479 = vsel %vm1435, %v2445, %v1713
  %v2480 = vsel %vm1435, %v2446, %v1715
  %v2481 = vsel %vm1435, %v2447, %v1717
  %v2482 = vsel %vm1435, %v2448, %v1719
  %v2483 = vsel %vm1435, %v2449, %v1721
  %v2484 = vsel %vm1435, %v2450, %v1723
  %v2485 = vsel %vm1435, %v2451, %v1725
  %v2486 = vsel %vm1435, %v2452, %v1727
  %v2487 = vsel %vm1435, %v2453, %v1729
  %v2488 = vsel %vm1435, %v2454, %v1731
  %v2489 = vsel %vm1435, %v2455, %v1733
  %v2490 = vsel %vm1435, %v2456, %v1735
  %v2491 = vsel %vm1435, %v2457, %v1737
  %v2492 = vsel %vm1435, %v2458, %v1739
  %v2493 = vsel %vm1435, %v2459, %v1741
  %s2494 = scalar_lea.vmem %s3, 16
  %v2495 = vld [vmem:[%s2494] sm:$0xff]
  %v2496 = vld [vmem:[%s2494 + $0x8] sm:$0xff]
  %s2497 = scalar_lea.vmem %s4, 16
  %v2498 = vld [vmem:[%s2497] sm:$0xff]
  %v2499 = vld [vmem:[%s2497 + $0x8] sm:$0xff]
  %v2500 = vmul.f32 %v2256, %v2495
  %v2501 = vmul.f32 %v2257, %v2496
  %v2502 = vmul.f32 %v2258, %v2495
  %v2503 = vmul.f32 %v2259, %v2496
  %v2504 = vmul.f32 %v2260, %v2495
  %v2505 = vmul.f32 %v2261, %v2496
  %v2506 = vmul.f32 %v2262, %v2495
  %v2507 = vmul.f32 %v2263, %v2496
  %v2508 = vmul.f32 %v2264, %v2495
  %v2509 = vmul.f32 %v2265, %v2496
  %v2510 = vmul.f32 %v2266, %v2495
  %v2511 = vmul.f32 %v2267, %v2496
  %v2512 = vmul.f32 %v2268, %v2495
  %v2513 = vmul.f32 %v2269, %v2496
  %v2514 = vmul.f32 %v2270, %v2495
  %v2515 = vmul.f32 %v2271, %v2496
  %v2516 = vmul.f32 %v2272, %v2495
  %v2517 = vmul.f32 %v2273, %v2496
  %v2518 = vmul.f32 %v2274, %v2495
  %v2519 = vmul.f32 %v2275, %v2496
  %v2520 = vmul.f32 %v2276, %v2495
  %v2521 = vmul.f32 %v2277, %v2496
  %v2522 = vmul.f32 %v2278, %v2495
  %v2523 = vmul.f32 %v2279, %v2496
  %v2524 = vmul.f32 %v2280, %v2495
  %v2525 = vmul.f32 %v2281, %v2496
  %v2526 = vmul.f32 %v2282, %v2495
  %v2527 = vmul.f32 %v2283, %v2496
  %v2528 = vmul.f32 %v2284, %v2495
  %v2529 = vmul.f32 %v2285, %v2496
  %v2530 = vmul.f32 %v2286, %v2495
  %v2531 = vmul.f32 %v2287, %v2496
  %v2532 = vmul.f32 %v2288, %v2495
  %v2533 = vmul.f32 %v2289, %v2496
  %v2534 = vmul.f32 %v2460, %v2498
  %v2535 = vmul.f32 %v2461, %v2499
  %v2536 = vmul.f32 %v2462, %v2498
  %v2537 = vmul.f32 %v2463, %v2499
  %v2538 = vmul.f32 %v2464, %v2498
  %v2539 = vmul.f32 %v2465, %v2499
  %v2540 = vmul.f32 %v2466, %v2498
  %v2541 = vmul.f32 %v2467, %v2499
  %v2542 = vmul.f32 %v2468, %v2498
  %v2543 = vmul.f32 %v2469, %v2499
  %v2544 = vmul.f32 %v2470, %v2498
  %v2545 = vmul.f32 %v2471, %v2499
  %v2546 = vmul.f32 %v2472, %v2498
  %v2547 = vmul.f32 %v2473, %v2499
  %v2548 = vmul.f32 %v2474, %v2498
  %v2549 = vmul.f32 %v2475, %v2499
  %v2550 = vmul.f32 %v2476, %v2498
  %v2551 = vmul.f32 %v2477, %v2499
  %v2552 = vmul.f32 %v2478, %v2498
  %v2553 = vmul.f32 %v2479, %v2499
  %v2554 = vmul.f32 %v2480, %v2498
  %v2555 = vmul.f32 %v2481, %v2499
  %v2556 = vmul.f32 %v2482, %v2498
  %v2557 = vmul.f32 %v2483, %v2499
  %v2558 = vmul.f32 %v2484, %v2498
  %v2559 = vmul.f32 %v2485, %v2499
  %v2560 = vmul.f32 %v2486, %v2498
  %v2561 = vmul.f32 %v2487, %v2499
  %v2562 = vmul.f32 %v2488, %v2498
  %v2563 = vmul.f32 %v2489, %v2499
  %v2564 = vmul.f32 %v2490, %v2498
  %v2565 = vmul.f32 %v2491, %v2499
  %v2566 = vmul.f32 %v2492, %v2498
  %v2567 = vmul.f32 %v2493, %v2499
  %v2568 = vsub.f32 %v2500, %v2534
  %v2569 = vsub.f32 %v2501, %v2535
  %v2570 = vsub.f32 %v2502, %v2536
  %v2571 = vsub.f32 %v2503, %v2537
  %v2572 = vsub.f32 %v2504, %v2538
  %v2573 = vsub.f32 %v2505, %v2539
  %v2574 = vsub.f32 %v2506, %v2540
  %v2575 = vsub.f32 %v2507, %v2541
  %v2576 = vsub.f32 %v2508, %v2542
  %v2577 = vsub.f32 %v2509, %v2543
  %v2578 = vsub.f32 %v2510, %v2544
  %v2579 = vsub.f32 %v2511, %v2545
  %v2580 = vsub.f32 %v2512, %v2546
  %v2581 = vsub.f32 %v2513, %v2547
  %v2582 = vsub.f32 %v2514, %v2548
  %v2583 = vsub.f32 %v2515, %v2549
  %v2584 = vsub.f32 %v2516, %v2550
  %v2585 = vsub.f32 %v2517, %v2551
  %v2586 = vsub.f32 %v2518, %v2552
  %v2587 = vsub.f32 %v2519, %v2553
  %v2588 = vsub.f32 %v2520, %v2554
  %v2589 = vsub.f32 %v2521, %v2555
  %v2590 = vsub.f32 %v2522, %v2556
  %v2591 = vsub.f32 %v2523, %v2557
  %v2592 = vsub.f32 %v2524, %v2558
  %v2593 = vsub.f32 %v2525, %v2559
  %v2594 = vsub.f32 %v2526, %v2560
  %v2595 = vsub.f32 %v2527, %v2561
  %v2596 = vsub.f32 %v2528, %v2562
  %v2597 = vsub.f32 %v2529, %v2563
  %v2598 = vsub.f32 %v2530, %v2564
  %v2599 = vsub.f32 %v2531, %v2565
  %v2600 = vsub.f32 %v2532, %v2566
  %v2601 = vsub.f32 %v2533, %v2567
  %v2602 = vmul.f32 %v2256, %v2498
  %v2603 = vmul.f32 %v2257, %v2499
  %v2604 = vmul.f32 %v2258, %v2498
  %v2605 = vmul.f32 %v2259, %v2499
  %v2606 = vmul.f32 %v2260, %v2498
  %v2607 = vmul.f32 %v2261, %v2499
  %v2608 = vmul.f32 %v2262, %v2498
  %v2609 = vmul.f32 %v2263, %v2499
  %v2610 = vmul.f32 %v2264, %v2498
  %v2611 = vmul.f32 %v2265, %v2499
  %v2612 = vmul.f32 %v2266, %v2498
  %v2613 = vmul.f32 %v2267, %v2499
  %v2614 = vmul.f32 %v2268, %v2498
  %v2615 = vmul.f32 %v2269, %v2499
  %v2616 = vmul.f32 %v2270, %v2498
  %v2617 = vmul.f32 %v2271, %v2499
  %v2618 = vmul.f32 %v2272, %v2498
  %v2619 = vmul.f32 %v2273, %v2499
  %v2620 = vmul.f32 %v2274, %v2498
  %v2621 = vmul.f32 %v2275, %v2499
  %v2622 = vmul.f32 %v2276, %v2498
  %v2623 = vmul.f32 %v2277, %v2499
  %v2624 = vmul.f32 %v2278, %v2498
  %v2625 = vmul.f32 %v2279, %v2499
  %v2626 = vmul.f32 %v2280, %v2498
  %v2627 = vmul.f32 %v2281, %v2499
  %v2628 = vmul.f32 %v2282, %v2498
  %v2629 = vmul.f32 %v2283, %v2499
  %v2630 = vmul.f32 %v2284, %v2498
  %v2631 = vmul.f32 %v2285, %v2499
  %v2632 = vmul.f32 %v2286, %v2498
  %v2633 = vmul.f32 %v2287, %v2499
  %v2634 = vmul.f32 %v2288, %v2498
  %v2635 = vmul.f32 %v2289, %v2499
  %v2636 = vmul.f32 %v2460, %v2495
  %v2637 = vmul.f32 %v2461, %v2496
  %v2638 = vmul.f32 %v2462, %v2495
  %v2639 = vmul.f32 %v2463, %v2496
  %v2640 = vmul.f32 %v2464, %v2495
  %v2641 = vmul.f32 %v2465, %v2496
  %v2642 = vmul.f32 %v2466, %v2495
  %v2643 = vmul.f32 %v2467, %v2496
  %v2644 = vmul.f32 %v2468, %v2495
  %v2645 = vmul.f32 %v2469, %v2496
  %v2646 = vmul.f32 %v2470, %v2495
  %v2647 = vmul.f32 %v2471, %v2496
  %v2648 = vmul.f32 %v2472, %v2495
  %v2649 = vmul.f32 %v2473, %v2496
  %v2650 = vmul.f32 %v2474, %v2495
  %v2651 = vmul.f32 %v2475, %v2496
  %v2652 = vmul.f32 %v2476, %v2495
  %v2653 = vmul.f32 %v2477, %v2496
  %v2654 = vmul.f32 %v2478, %v2495
  %v2655 = vmul.f32 %v2479, %v2496
  %v2656 = vmul.f32 %v2480, %v2495
  %v2657 = vmul.f32 %v2481, %v2496
  %v2658 = vmul.f32 %v2482, %v2495
  %v2659 = vmul.f32 %v2483, %v2496
  %v2660 = vmul.f32 %v2484, %v2495
  %v2661 = vmul.f32 %v2485, %v2496
  %v2662 = vmul.f32 %v2486, %v2495
  %v2663 = vmul.f32 %v2487, %v2496
  %v2664 = vmul.f32 %v2488, %v2495
  %v2665 = vmul.f32 %v2489, %v2496
  %v2666 = vmul.f32 %v2490, %v2495
  %v2667 = vmul.f32 %v2491, %v2496
  %v2668 = vmul.f32 %v2492, %v2495
  %v2669 = vmul.f32 %v2493, %v2496
  %v2670 = vadd.f32 %v2602, %v2636
  %v2671 = vadd.f32 %v2603, %v2637
  %v2672 = vadd.f32 %v2604, %v2638
  %v2673 = vadd.f32 %v2605, %v2639
  %v2674 = vadd.f32 %v2606, %v2640
  %v2675 = vadd.f32 %v2607, %v2641
  %v2676 = vadd.f32 %v2608, %v2642
  %v2677 = vadd.f32 %v2609, %v2643
  %v2678 = vadd.f32 %v2610, %v2644
  %v2679 = vadd.f32 %v2611, %v2645
  %v2680 = vadd.f32 %v2612, %v2646
  %v2681 = vadd.f32 %v2613, %v2647
  %v2682 = vadd.f32 %v2614, %v2648
  %v2683 = vadd.f32 %v2615, %v2649
  %v2684 = vadd.f32 %v2616, %v2650
  %v2685 = vadd.f32 %v2617, %v2651
  %v2686 = vadd.f32 %v2618, %v2652
  %v2687 = vadd.f32 %v2619, %v2653
  %v2688 = vadd.f32 %v2620, %v2654
  %v2689 = vadd.f32 %v2621, %v2655
  %v2690 = vadd.f32 %v2622, %v2656
  %v2691 = vadd.f32 %v2623, %v2657
  %v2692 = vadd.f32 %v2624, %v2658
  %v2693 = vadd.f32 %v2625, %v2659
  %v2694 = vadd.f32 %v2626, %v2660
  %v2695 = vadd.f32 %v2627, %v2661
  %v2696 = vadd.f32 %v2628, %v2662
  %v2697 = vadd.f32 %v2629, %v2663
  %v2698 = vadd.f32 %v2630, %v2664
  %v2699 = vadd.f32 %v2631, %v2665
  %v2700 = vadd.f32 %v2632, %v2666
  %v2701 = vadd.f32 %v2633, %v2667
  %v2702 = vadd.f32 %v2634, %v2668
  %v2703 = vadd.f32 %v2635, %v2669
  %v2704 = vadd.f32 %v2052, %v2568
  %v2705 = vadd.f32 %v2053, %v2569
  %v2706 = vadd.f32 %v2054, %v2570
  %v2707 = vadd.f32 %v2055, %v2571
  %v2708 = vadd.f32 %v2056, %v2572
  %v2709 = vadd.f32 %v2057, %v2573
  %v2710 = vadd.f32 %v2058, %v2574
  %v2711 = vadd.f32 %v2059, %v2575
  %v2712 = vadd.f32 %v2060, %v2576
  %v2713 = vadd.f32 %v2061, %v2577
  %v2714 = vadd.f32 %v2062, %v2578
  %v2715 = vadd.f32 %v2063, %v2579
  %v2716 = vadd.f32 %v2064, %v2580
  %v2717 = vadd.f32 %v2065, %v2581
  %v2718 = vadd.f32 %v2066, %v2582
  %v2719 = vadd.f32 %v2067, %v2583
  %v2720 = vadd.f32 %v2068, %v2584
  %v2721 = vadd.f32 %v2069, %v2585
  %v2722 = vadd.f32 %v2070, %v2586
  %v2723 = vadd.f32 %v2071, %v2587
  %v2724 = vadd.f32 %v2072, %v2588
  %v2725 = vadd.f32 %v2073, %v2589
  %v2726 = vadd.f32 %v2074, %v2590
  %v2727 = vadd.f32 %v2075, %v2591
  %v2728 = vadd.f32 %v2076, %v2592
  %v2729 = vadd.f32 %v2077, %v2593
  %v2730 = vadd.f32 %v2078, %v2594
  %v2731 = vadd.f32 %v2079, %v2595
  %v2732 = vadd.f32 %v2080, %v2596
  %v2733 = vadd.f32 %v2081, %v2597
  %v2734 = vadd.f32 %v2082, %v2598
  %v2735 = vadd.f32 %v2083, %v2599
  %v2736 = vadd.f32 %v2084, %v2600
  %v2737 = vadd.f32 %v2085, %v2601
  %v2738 = vadd.f32 %v2154, %v2670
  %v2739 = vadd.f32 %v2155, %v2671
  %v2740 = vadd.f32 %v2156, %v2672
  %v2741 = vadd.f32 %v2157, %v2673
  %v2742 = vadd.f32 %v2158, %v2674
  %v2743 = vadd.f32 %v2159, %v2675
  %v2744 = vadd.f32 %v2160, %v2676
  %v2745 = vadd.f32 %v2161, %v2677
  %v2746 = vadd.f32 %v2162, %v2678
  %v2747 = vadd.f32 %v2163, %v2679
  %v2748 = vadd.f32 %v2164, %v2680
  %v2749 = vadd.f32 %v2165, %v2681
  %v2750 = vadd.f32 %v2166, %v2682
  %v2751 = vadd.f32 %v2167, %v2683
  %v2752 = vadd.f32 %v2168, %v2684
  %v2753 = vadd.f32 %v2169, %v2685
  %v2754 = vadd.f32 %v2170, %v2686
  %v2755 = vadd.f32 %v2171, %v2687
  %v2756 = vadd.f32 %v2172, %v2688
  %v2757 = vadd.f32 %v2173, %v2689
  %v2758 = vadd.f32 %v2174, %v2690
  %v2759 = vadd.f32 %v2175, %v2691
  %v2760 = vadd.f32 %v2176, %v2692
  %v2761 = vadd.f32 %v2177, %v2693
  %v2762 = vadd.f32 %v2178, %v2694
  %v2763 = vadd.f32 %v2179, %v2695
  %v2764 = vadd.f32 %v2180, %v2696
  %v2765 = vadd.f32 %v2181, %v2697
  %v2766 = vadd.f32 %v2182, %v2698
  %v2767 = vadd.f32 %v2183, %v2699
  %v2768 = vadd.f32 %v2184, %v2700
  %v2769 = vadd.f32 %v2185, %v2701
  %v2770 = vadd.f32 %v2186, %v2702
  %v2771 = vadd.f32 %v2187, %v2703
  %v2772 = vsel %vm1365, %v1675, %v1777
  %v2773 = vsel %vm1365, %v1677, %v1779
  %v2774 = vsel %vm1365, %v1679, %v1781
  %v2775 = vsel %vm1365, %v1681, %v1783
  %v2776 = vsel %vm1365, %v1683, %v1785
  %v2777 = vsel %vm1365, %v1685, %v1787
  %v2778 = vsel %vm1365, %v1687, %v1789
  %v2779 = vsel %vm1365, %v1689, %v1791
  %v2780 = vsel %vm1365, %v1691, %v1793
  %v2781 = vsel %vm1365, %v1693, %v1795
  %v2782 = vsel %vm1365, %v1695, %v1797
  %v2783 = vsel %vm1365, %v1697, %v1799
  %v2784 = vsel %vm1365, %v1699, %v1801
  %v2785 = vsel %vm1365, %v1701, %v1803
  %v2786 = vsel %vm1365, %v1703, %v1805
  %v2787 = vsel %vm1365, %v1705, %v1807
  %v2788 = vsel %vm1365, %v1707, %v1809
  %v2789 = vsel %vm1365, %v1709, %v1811
  %v2790 = vsel %vm1365, %v1711, %v1813
  %v2791 = vsel %vm1365, %v1713, %v1815
  %v2792 = vsel %vm1365, %v1715, %v1817
  %v2793 = vsel %vm1365, %v1717, %v1819
  %v2794 = vsel %vm1365, %v1719, %v1821
  %v2795 = vsel %vm1365, %v1721, %v1823
  %v2796 = vsel %vm1365, %v1723, %v1825
  %v2797 = vsel %vm1365, %v1725, %v1827
  %v2798 = vsel %vm1365, %v1727, %v1829
  %v2799 = vsel %vm1365, %v1729, %v1831
  %v2800 = vsel %vm1365, %v1731, %v1833
  %v2801 = vsel %vm1365, %v1733, %v1835
  %v2802 = vsel %vm1365, %v1735, %v1837
  %v2803 = vsel %vm1365, %v1737, %v1839
  %v2804 = vsel %vm1365, %v1739, %v1841
  %v2805 = vsel %vm1365, %v1741, %v1843
  %v2806 = vsel %vm1400, %v2772, %v139
  %v2807 = vsel %vm1400, %v2773, %v142
  %v2808 = vsel %vm1400, %v2774, %v194
  %v2809 = vsel %vm1400, %v2775, %v197
  %v2810 = vsel %vm1400, %v2776, %v249
  %v2811 = vsel %vm1400, %v2777, %v252
  %v2812 = vsel %vm1400, %v2778, %v304
  %v2813 = vsel %vm1400, %v2779, %v307
  %v2814 = vsel %vm1400, %v2780, %v359
  %v2815 = vsel %vm1400, %v2781, %v362
  %v2816 = vsel %vm1400, %v2782, %v414
  %v2817 = vsel %vm1400, %v2783, %v417
  %v2818 = vsel %vm1400, %v2784, %v469
  %v2819 = vsel %vm1400, %v2785, %v472
  %v2820 = vsel %vm1400, %v2786, %v524
  %v2821 = vsel %vm1400, %v2787, %v527
  %v2822 = vsel %vm1400, %v2788, %v579
  %v2823 = vsel %vm1400, %v2789, %v582
  %v2824 = vsel %vm1400, %v2790, %v634
  %v2825 = vsel %vm1400, %v2791, %v637
  %v2826 = vsel %vm1400, %v2792, %v689
  %v2827 = vsel %vm1400, %v2793, %v692
  %v2828 = vsel %vm1400, %v2794, %v744
  %v2829 = vsel %vm1400, %v2795, %v747
  %v2830 = vsel %vm1400, %v2796, %v799
  %v2831 = vsel %vm1400, %v2797, %v802
  %v2832 = vsel %vm1400, %v2798, %v854
  %v2833 = vsel %vm1400, %v2799, %v857
  %v2834 = vsel %vm1400, %v2800, %v909
  %v2835 = vsel %vm1400, %v2801, %v912
  %v2836 = vsel %vm1400, %v2802, %v964
  %v2837 = vsel %vm1400, %v2803, %v967
  %v2838 = vsel %vm1400, %v2804, %v1019
  %v2839 = vsel %vm1400, %v2805, %v1022
  %v2840 = vsel %vm1435, %v2806, %v1060
  %v2841 = vsel %vm1435, %v2807, %v1062
  %v2842 = vsel %vm1435, %v2808, %v1064
  %v2843 = vsel %vm1435, %v2809, %v1066
  %v2844 = vsel %vm1435, %v2810, %v1068
  %v2845 = vsel %vm1435, %v2811, %v1070
  %v2846 = vsel %vm1435, %v2812, %v1072
  %v2847 = vsel %vm1435, %v2813, %v1074
  %v2848 = vsel %vm1435, %v2814, %v1076
  %v2849 = vsel %vm1435, %v2815, %v1078
  %v2850 = vsel %vm1435, %v2816, %v1080
  %v2851 = vsel %vm1435, %v2817, %v1082
  %v2852 = vsel %vm1435, %v2818, %v1084
  %v2853 = vsel %vm1435, %v2819, %v1086
  %v2854 = vsel %vm1435, %v2820, %v1088
  %v2855 = vsel %vm1435, %v2821, %v1090
  %v2856 = vsel %vm1435, %v2822, %v1092
  %v2857 = vsel %vm1435, %v2823, %v1094
  %v2858 = vsel %vm1435, %v2824, %v1096
  %v2859 = vsel %vm1435, %v2825, %v1098
  %v2860 = vsel %vm1435, %v2826, %v1100
  %v2861 = vsel %vm1435, %v2827, %v1102
  %v2862 = vsel %vm1435, %v2828, %v1104
  %v2863 = vsel %vm1435, %v2829, %v1106
  %v2864 = vsel %vm1435, %v2830, %v1108
  %v2865 = vsel %vm1435, %v2831, %v1110
  %v2866 = vsel %vm1435, %v2832, %v1112
  %v2867 = vsel %vm1435, %v2833, %v1114
  %v2868 = vsel %vm1435, %v2834, %v1116
  %v2869 = vsel %vm1435, %v2835, %v1118
  %v2870 = vsel %vm1435, %v2836, %v1120
  %v2871 = vsel %vm1435, %v2837, %v1122
  %v2872 = vsel %vm1435, %v2838, %v1124
  %v2873 = vsel %vm1435, %v2839, %v1126
  %2874 = vrot.lane.b32.xlu0 %v139, 116
  %v2875 = vpop.permute.xlu0 %2874
  %2876 = vrot.lane.b32.xlu0 %v142, 116
  %v2877 = vpop.permute.xlu0 %2876
  %2878 = vrot.lane.b32.xlu0 %v194, 116
  %v2879 = vpop.permute.xlu0 %2878
  %2880 = vrot.lane.b32.xlu0 %v197, 116
  %v2881 = vpop.permute.xlu0 %2880
  %2882 = vrot.lane.b32.xlu0 %v249, 116
  %v2883 = vpop.permute.xlu0 %2882
  %2884 = vrot.lane.b32.xlu0 %v252, 116
  %v2885 = vpop.permute.xlu0 %2884
  %2886 = vrot.lane.b32.xlu0 %v304, 116
  %v2887 = vpop.permute.xlu0 %2886
  %2888 = vrot.lane.b32.xlu0 %v307, 116
  %v2889 = vpop.permute.xlu0 %2888
  %2890 = vrot.lane.b32.xlu0 %v359, 116
  %v2891 = vpop.permute.xlu0 %2890
  %2892 = vrot.lane.b32.xlu0 %v362, 116
  %v2893 = vpop.permute.xlu0 %2892
  %2894 = vrot.lane.b32.xlu0 %v414, 116
  %v2895 = vpop.permute.xlu0 %2894
  %2896 = vrot.lane.b32.xlu0 %v417, 116
  %v2897 = vpop.permute.xlu0 %2896
  %2898 = vrot.lane.b32.xlu0 %v469, 116
  %v2899 = vpop.permute.xlu0 %2898
  %2900 = vrot.lane.b32.xlu0 %v472, 116
  %v2901 = vpop.permute.xlu0 %2900
  %2902 = vrot.lane.b32.xlu0 %v524, 116
  %v2903 = vpop.permute.xlu0 %2902
  %2904 = vrot.lane.b32.xlu0 %v527, 116
  %v2905 = vpop.permute.xlu0 %2904
  %2906 = vrot.lane.b32.xlu0 %v579, 116
  %v2907 = vpop.permute.xlu0 %2906
  %2908 = vrot.lane.b32.xlu0 %v582, 116
  %v2909 = vpop.permute.xlu0 %2908
  %2910 = vrot.lane.b32.xlu0 %v634, 116
  %v2911 = vpop.permute.xlu0 %2910
  %2912 = vrot.lane.b32.xlu0 %v637, 116
  %v2913 = vpop.permute.xlu0 %2912
  %2914 = vrot.lane.b32.xlu0 %v689, 116
  %v2915 = vpop.permute.xlu0 %2914
  %2916 = vrot.lane.b32.xlu0 %v692, 116
  %v2917 = vpop.permute.xlu0 %2916
  %2918 = vrot.lane.b32.xlu0 %v744, 116
  %v2919 = vpop.permute.xlu0 %2918
  %2920 = vrot.lane.b32.xlu0 %v747, 116
  %v2921 = vpop.permute.xlu0 %2920
  %2922 = vrot.lane.b32.xlu0 %v799, 116
  %v2923 = vpop.permute.xlu0 %2922
  %2924 = vrot.lane.b32.xlu0 %v802, 116
  %v2925 = vpop.permute.xlu0 %2924
  %2926 = vrot.lane.b32.xlu0 %v854, 116
  %v2927 = vpop.permute.xlu0 %2926
  %2928 = vrot.lane.b32.xlu0 %v857, 116
  %v2929 = vpop.permute.xlu0 %2928
  %2930 = vrot.lane.b32.xlu0 %v909, 116
  %v2931 = vpop.permute.xlu0 %2930
  %2932 = vrot.lane.b32.xlu0 %v912, 116
  %v2933 = vpop.permute.xlu0 %2932
  %2934 = vrot.lane.b32.xlu0 %v964, 116
  %v2935 = vpop.permute.xlu0 %2934
  %2936 = vrot.lane.b32.xlu0 %v967, 116
  %v2937 = vpop.permute.xlu0 %2936
  %2938 = vrot.lane.b32.xlu0 %v1019, 116
  %v2939 = vpop.permute.xlu0 %2938
  %2940 = vrot.lane.b32.xlu0 %v1022, 116
  %v2941 = vpop.permute.xlu0 %2940
  %v2976 = vsel %vm1365, %v2875, %v2291
  %v2977 = vsel %vm1365, %v2877, %v2293
  %v2978 = vsel %vm1365, %v2879, %v2295
  %v2979 = vsel %vm1365, %v2881, %v2297
  %v2980 = vsel %vm1365, %v2883, %v2299
  %v2981 = vsel %vm1365, %v2885, %v2301
  %v2982 = vsel %vm1365, %v2887, %v2303
  %v2983 = vsel %vm1365, %v2889, %v2305
  %v2984 = vsel %vm1365, %v2891, %v2307
  %v2985 = vsel %vm1365, %v2893, %v2309
  %v2986 = vsel %vm1365, %v2895, %v2311
  %v2987 = vsel %vm1365, %v2897, %v2313
  %v2988 = vsel %vm1365, %v2899, %v2315
  %v2989 = vsel %vm1365, %v2901, %v2317
  %v2990 = vsel %vm1365, %v2903, %v2319
  %v2991 = vsel %vm1365, %v2905, %v2321
  %v2992 = vsel %vm1365, %v2907, %v2323
  %v2993 = vsel %vm1365, %v2909, %v2325
  %v2994 = vsel %vm1365, %v2911, %v2327
  %v2995 = vsel %vm1365, %v2913, %v2329
  %v2996 = vsel %vm1365, %v2915, %v2331
  %v2997 = vsel %vm1365, %v2917, %v2333
  %v2998 = vsel %vm1365, %v2919, %v2335
  %v2999 = vsel %vm1365, %v2921, %v2337
  %v3000 = vsel %vm1365, %v2923, %v2339
  %v3001 = vsel %vm1365, %v2925, %v2341
  %v3002 = vsel %vm1365, %v2927, %v2343
  %v3003 = vsel %vm1365, %v2929, %v2345
  %v3004 = vsel %vm1365, %v2931, %v2347
  %v3005 = vsel %vm1365, %v2933, %v2349
  %v3006 = vsel %vm1365, %v2935, %v2351
  %v3007 = vsel %vm1365, %v2937, %v2353
  %v3008 = vsel %vm1365, %v2939, %v2355
  %v3009 = vsel %vm1365, %v2941, %v2357
  %v3010 = vsel %vm1400, %v2976, %v1471
  %v3011 = vsel %vm1400, %v2977, %v1473
  %v3012 = vsel %vm1400, %v2978, %v1475
  %v3013 = vsel %vm1400, %v2979, %v1477
  %v3014 = vsel %vm1400, %v2980, %v1479
  %v3015 = vsel %vm1400, %v2981, %v1481
  %v3016 = vsel %vm1400, %v2982, %v1483
  %v3017 = vsel %vm1400, %v2983, %v1485
  %v3018 = vsel %vm1400, %v2984, %v1487
  %v3019 = vsel %vm1400, %v2985, %v1489
  %v3020 = vsel %vm1400, %v2986, %v1491
  %v3021 = vsel %vm1400, %v2987, %v1493
  %v3022 = vsel %vm1400, %v2988, %v1495
  %v3023 = vsel %vm1400, %v2989, %v1497
  %v3024 = vsel %vm1400, %v2990, %v1499
  %v3025 = vsel %vm1400, %v2991, %v1501
  %v3026 = vsel %vm1400, %v2992, %v1503
  %v3027 = vsel %vm1400, %v2993, %v1505
  %v3028 = vsel %vm1400, %v2994, %v1507
  %v3029 = vsel %vm1400, %v2995, %v1509
  %v3030 = vsel %vm1400, %v2996, %v1511
  %v3031 = vsel %vm1400, %v2997, %v1513
  %v3032 = vsel %vm1400, %v2998, %v1515
  %v3033 = vsel %vm1400, %v2999, %v1517
  %v3034 = vsel %vm1400, %v3000, %v1519
  %v3035 = vsel %vm1400, %v3001, %v1521
  %v3036 = vsel %vm1400, %v3002, %v1523
  %v3037 = vsel %vm1400, %v3003, %v1525
  %v3038 = vsel %vm1400, %v3004, %v1527
  %v3039 = vsel %vm1400, %v3005, %v1529
  %v3040 = vsel %vm1400, %v3006, %v1531
  %v3041 = vsel %vm1400, %v3007, %v1533
  %v3042 = vsel %vm1400, %v3008, %v1535
  %v3043 = vsel %vm1400, %v3009, %v1537
  %v3044 = vsel %vm1435, %v3010, %v1573
  %v3045 = vsel %vm1435, %v3011, %v1575
  %v3046 = vsel %vm1435, %v3012, %v1577
  %v3047 = vsel %vm1435, %v3013, %v1579
  %v3048 = vsel %vm1435, %v3014, %v1581
  %v3049 = vsel %vm1435, %v3015, %v1583
  %v3050 = vsel %vm1435, %v3016, %v1585
  %v3051 = vsel %vm1435, %v3017, %v1587
  %v3052 = vsel %vm1435, %v3018, %v1589
  %v3053 = vsel %vm1435, %v3019, %v1591
  %v3054 = vsel %vm1435, %v3020, %v1593
  %v3055 = vsel %vm1435, %v3021, %v1595
  %v3056 = vsel %vm1435, %v3022, %v1597
  %v3057 = vsel %vm1435, %v3023, %v1599
  %v3058 = vsel %vm1435, %v3024, %v1601
  %v3059 = vsel %vm1435, %v3025, %v1603
  %v3060 = vsel %vm1435, %v3026, %v1605
  %v3061 = vsel %vm1435, %v3027, %v1607
  %v3062 = vsel %vm1435, %v3028, %v1609
  %v3063 = vsel %vm1435, %v3029, %v1611
  %v3064 = vsel %vm1435, %v3030, %v1613
  %v3065 = vsel %vm1435, %v3031, %v1615
  %v3066 = vsel %vm1435, %v3032, %v1617
  %v3067 = vsel %vm1435, %v3033, %v1619
  %v3068 = vsel %vm1435, %v3034, %v1621
  %v3069 = vsel %vm1435, %v3035, %v1623
  %v3070 = vsel %vm1435, %v3036, %v1625
  %v3071 = vsel %vm1435, %v3037, %v1627
  %v3072 = vsel %vm1435, %v3038, %v1629
  %v3073 = vsel %vm1435, %v3039, %v1631
  %v3074 = vsel %vm1435, %v3040, %v1633
  %v3075 = vsel %vm1435, %v3041, %v1635
  %v3076 = vsel %vm1435, %v3042, %v1637
  %v3077 = vsel %vm1435, %v3043, %v1639
  %s3078 = scalar_lea.vmem %s3, 32
  %v3079 = vld [vmem:[%s3078] sm:$0xff]
  %v3080 = vld [vmem:[%s3078 + $0x8] sm:$0xff]
  %s3081 = scalar_lea.vmem %s4, 32
  %v3082 = vld [vmem:[%s3081] sm:$0xff]
  %v3083 = vld [vmem:[%s3081 + $0x8] sm:$0xff]
  %v3084 = vmul.f32 %v2840, %v3079
  %v3085 = vmul.f32 %v2841, %v3080
  %v3086 = vmul.f32 %v2842, %v3079
  %v3087 = vmul.f32 %v2843, %v3080
  %v3088 = vmul.f32 %v2844, %v3079
  %v3089 = vmul.f32 %v2845, %v3080
  %v3090 = vmul.f32 %v2846, %v3079
  %v3091 = vmul.f32 %v2847, %v3080
  %v3092 = vmul.f32 %v2848, %v3079
  %v3093 = vmul.f32 %v2849, %v3080
  %v3094 = vmul.f32 %v2850, %v3079
  %v3095 = vmul.f32 %v2851, %v3080
  %v3096 = vmul.f32 %v2852, %v3079
  %v3097 = vmul.f32 %v2853, %v3080
  %v3098 = vmul.f32 %v2854, %v3079
  %v3099 = vmul.f32 %v2855, %v3080
  %v3100 = vmul.f32 %v2856, %v3079
  %v3101 = vmul.f32 %v2857, %v3080
  %v3102 = vmul.f32 %v2858, %v3079
  %v3103 = vmul.f32 %v2859, %v3080
  %v3104 = vmul.f32 %v2860, %v3079
  %v3105 = vmul.f32 %v2861, %v3080
  %v3106 = vmul.f32 %v2862, %v3079
  %v3107 = vmul.f32 %v2863, %v3080
  %v3108 = vmul.f32 %v2864, %v3079
  %v3109 = vmul.f32 %v2865, %v3080
  %v3110 = vmul.f32 %v2866, %v3079
  %v3111 = vmul.f32 %v2867, %v3080
  %v3112 = vmul.f32 %v2868, %v3079
  %v3113 = vmul.f32 %v2869, %v3080
  %v3114 = vmul.f32 %v2870, %v3079
  %v3115 = vmul.f32 %v2871, %v3080
  %v3116 = vmul.f32 %v2872, %v3079
  %v3117 = vmul.f32 %v2873, %v3080
  %v3118 = vmul.f32 %v3044, %v3082
  %v3119 = vmul.f32 %v3045, %v3083
  %v3120 = vmul.f32 %v3046, %v3082
  %v3121 = vmul.f32 %v3047, %v3083
  %v3122 = vmul.f32 %v3048, %v3082
  %v3123 = vmul.f32 %v3049, %v3083
  %v3124 = vmul.f32 %v3050, %v3082
  %v3125 = vmul.f32 %v3051, %v3083
  %v3126 = vmul.f32 %v3052, %v3082
  %v3127 = vmul.f32 %v3053, %v3083
  %v3128 = vmul.f32 %v3054, %v3082
  %v3129 = vmul.f32 %v3055, %v3083
  %v3130 = vmul.f32 %v3056, %v3082
  %v3131 = vmul.f32 %v3057, %v3083
  %v3132 = vmul.f32 %v3058, %v3082
  %v3133 = vmul.f32 %v3059, %v3083
  %v3134 = vmul.f32 %v3060, %v3082
  %v3135 = vmul.f32 %v3061, %v3083
  %v3136 = vmul.f32 %v3062, %v3082
  %v3137 = vmul.f32 %v3063, %v3083
  %v3138 = vmul.f32 %v3064, %v3082
  %v3139 = vmul.f32 %v3065, %v3083
  %v3140 = vmul.f32 %v3066, %v3082
  %v3141 = vmul.f32 %v3067, %v3083
  %v3142 = vmul.f32 %v3068, %v3082
  %v3143 = vmul.f32 %v3069, %v3083
  %v3144 = vmul.f32 %v3070, %v3082
  %v3145 = vmul.f32 %v3071, %v3083
  %v3146 = vmul.f32 %v3072, %v3082
  %v3147 = vmul.f32 %v3073, %v3083
  %v3148 = vmul.f32 %v3074, %v3082
  %v3149 = vmul.f32 %v3075, %v3083
  %v3150 = vmul.f32 %v3076, %v3082
  %v3151 = vmul.f32 %v3077, %v3083
  %v3152 = vsub.f32 %v3084, %v3118
  %v3153 = vsub.f32 %v3085, %v3119
  %v3154 = vsub.f32 %v3086, %v3120
  %v3155 = vsub.f32 %v3087, %v3121
  %v3156 = vsub.f32 %v3088, %v3122
  %v3157 = vsub.f32 %v3089, %v3123
  %v3158 = vsub.f32 %v3090, %v3124
  %v3159 = vsub.f32 %v3091, %v3125
  %v3160 = vsub.f32 %v3092, %v3126
  %v3161 = vsub.f32 %v3093, %v3127
  %v3162 = vsub.f32 %v3094, %v3128
  %v3163 = vsub.f32 %v3095, %v3129
  %v3164 = vsub.f32 %v3096, %v3130
  %v3165 = vsub.f32 %v3097, %v3131
  %v3166 = vsub.f32 %v3098, %v3132
  %v3167 = vsub.f32 %v3099, %v3133
  %v3168 = vsub.f32 %v3100, %v3134
  %v3169 = vsub.f32 %v3101, %v3135
  %v3170 = vsub.f32 %v3102, %v3136
  %v3171 = vsub.f32 %v3103, %v3137
  %v3172 = vsub.f32 %v3104, %v3138
  %v3173 = vsub.f32 %v3105, %v3139
  %v3174 = vsub.f32 %v3106, %v3140
  %v3175 = vsub.f32 %v3107, %v3141
  %v3176 = vsub.f32 %v3108, %v3142
  %v3177 = vsub.f32 %v3109, %v3143
  %v3178 = vsub.f32 %v3110, %v3144
  %v3179 = vsub.f32 %v3111, %v3145
  %v3180 = vsub.f32 %v3112, %v3146
  %v3181 = vsub.f32 %v3113, %v3147
  %v3182 = vsub.f32 %v3114, %v3148
  %v3183 = vsub.f32 %v3115, %v3149
  %v3184 = vsub.f32 %v3116, %v3150
  %v3185 = vsub.f32 %v3117, %v3151
  %v3186 = vmul.f32 %v2840, %v3082
  %v3187 = vmul.f32 %v2841, %v3083
  %v3188 = vmul.f32 %v2842, %v3082
  %v3189 = vmul.f32 %v2843, %v3083
  %v3190 = vmul.f32 %v2844, %v3082
  %v3191 = vmul.f32 %v2845, %v3083
  %v3192 = vmul.f32 %v2846, %v3082
  %v3193 = vmul.f32 %v2847, %v3083
  %v3194 = vmul.f32 %v2848, %v3082
  %v3195 = vmul.f32 %v2849, %v3083
  %v3196 = vmul.f32 %v2850, %v3082
  %v3197 = vmul.f32 %v2851, %v3083
  %v3198 = vmul.f32 %v2852, %v3082
  %v3199 = vmul.f32 %v2853, %v3083
  %v3200 = vmul.f32 %v2854, %v3082
  %v3201 = vmul.f32 %v2855, %v3083
  %v3202 = vmul.f32 %v2856, %v3082
  %v3203 = vmul.f32 %v2857, %v3083
  %v3204 = vmul.f32 %v2858, %v3082
  %v3205 = vmul.f32 %v2859, %v3083
  %v3206 = vmul.f32 %v2860, %v3082
  %v3207 = vmul.f32 %v2861, %v3083
  %v3208 = vmul.f32 %v2862, %v3082
  %v3209 = vmul.f32 %v2863, %v3083
  %v3210 = vmul.f32 %v2864, %v3082
  %v3211 = vmul.f32 %v2865, %v3083
  %v3212 = vmul.f32 %v2866, %v3082
  %v3213 = vmul.f32 %v2867, %v3083
  %v3214 = vmul.f32 %v2868, %v3082
  %v3215 = vmul.f32 %v2869, %v3083
  %v3216 = vmul.f32 %v2870, %v3082
  %v3217 = vmul.f32 %v2871, %v3083
  %v3218 = vmul.f32 %v2872, %v3082
  %v3219 = vmul.f32 %v2873, %v3083
  %v3220 = vmul.f32 %v3044, %v3079
  %v3221 = vmul.f32 %v3045, %v3080
  %v3222 = vmul.f32 %v3046, %v3079
  %v3223 = vmul.f32 %v3047, %v3080
  %v3224 = vmul.f32 %v3048, %v3079
  %v3225 = vmul.f32 %v3049, %v3080
  %v3226 = vmul.f32 %v3050, %v3079
  %v3227 = vmul.f32 %v3051, %v3080
  %v3228 = vmul.f32 %v3052, %v3079
  %v3229 = vmul.f32 %v3053, %v3080
  %v3230 = vmul.f32 %v3054, %v3079
  %v3231 = vmul.f32 %v3055, %v3080
  %v3232 = vmul.f32 %v3056, %v3079
  %v3233 = vmul.f32 %v3057, %v3080
  %v3234 = vmul.f32 %v3058, %v3079
  %v3235 = vmul.f32 %v3059, %v3080
  %v3236 = vmul.f32 %v3060, %v3079
  %v3237 = vmul.f32 %v3061, %v3080
  %v3238 = vmul.f32 %v3062, %v3079
  %v3239 = vmul.f32 %v3063, %v3080
  %v3240 = vmul.f32 %v3064, %v3079
  %v3241 = vmul.f32 %v3065, %v3080
  %v3242 = vmul.f32 %v3066, %v3079
  %v3243 = vmul.f32 %v3067, %v3080
  %v3244 = vmul.f32 %v3068, %v3079
  %v3245 = vmul.f32 %v3069, %v3080
  %v3246 = vmul.f32 %v3070, %v3079
  %v3247 = vmul.f32 %v3071, %v3080
  %v3248 = vmul.f32 %v3072, %v3079
  %v3249 = vmul.f32 %v3073, %v3080
  %v3250 = vmul.f32 %v3074, %v3079
  %v3251 = vmul.f32 %v3075, %v3080
  %v3252 = vmul.f32 %v3076, %v3079
  %v3253 = vmul.f32 %v3077, %v3080
  %v3254 = vadd.f32 %v3186, %v3220
  %v3255 = vadd.f32 %v3187, %v3221
  %v3256 = vadd.f32 %v3188, %v3222
  %v3257 = vadd.f32 %v3189, %v3223
  %v3258 = vadd.f32 %v3190, %v3224
  %v3259 = vadd.f32 %v3191, %v3225
  %v3260 = vadd.f32 %v3192, %v3226
  %v3261 = vadd.f32 %v3193, %v3227
  %v3262 = vadd.f32 %v3194, %v3228
  %v3263 = vadd.f32 %v3195, %v3229
  %v3264 = vadd.f32 %v3196, %v3230
  %v3265 = vadd.f32 %v3197, %v3231
  %v3266 = vadd.f32 %v3198, %v3232
  %v3267 = vadd.f32 %v3199, %v3233
  %v3268 = vadd.f32 %v3200, %v3234
  %v3269 = vadd.f32 %v3201, %v3235
  %v3270 = vadd.f32 %v3202, %v3236
  %v3271 = vadd.f32 %v3203, %v3237
  %v3272 = vadd.f32 %v3204, %v3238
  %v3273 = vadd.f32 %v3205, %v3239
  %v3274 = vadd.f32 %v3206, %v3240
  %v3275 = vadd.f32 %v3207, %v3241
  %v3276 = vadd.f32 %v3208, %v3242
  %v3277 = vadd.f32 %v3209, %v3243
  %v3278 = vadd.f32 %v3210, %v3244
  %v3279 = vadd.f32 %v3211, %v3245
  %v3280 = vadd.f32 %v3212, %v3246
  %v3281 = vadd.f32 %v3213, %v3247
  %v3282 = vadd.f32 %v3214, %v3248
  %v3283 = vadd.f32 %v3215, %v3249
  %v3284 = vadd.f32 %v3216, %v3250
  %v3285 = vadd.f32 %v3217, %v3251
  %v3286 = vadd.f32 %v3218, %v3252
  %v3287 = vadd.f32 %v3219, %v3253
  %v3288 = vadd.f32 %v2704, %v3152
  %v3289 = vadd.f32 %v2705, %v3153
  %v3290 = vadd.f32 %v2706, %v3154
  %v3291 = vadd.f32 %v2707, %v3155
  %v3292 = vadd.f32 %v2708, %v3156
  %v3293 = vadd.f32 %v2709, %v3157
  %v3294 = vadd.f32 %v2710, %v3158
  %v3295 = vadd.f32 %v2711, %v3159
  %v3296 = vadd.f32 %v2712, %v3160
  %v3297 = vadd.f32 %v2713, %v3161
  %v3298 = vadd.f32 %v2714, %v3162
  %v3299 = vadd.f32 %v2715, %v3163
  %v3300 = vadd.f32 %v2716, %v3164
  %v3301 = vadd.f32 %v2717, %v3165
  %v3302 = vadd.f32 %v2718, %v3166
  %v3303 = vadd.f32 %v2719, %v3167
  %v3304 = vadd.f32 %v2720, %v3168
  %v3305 = vadd.f32 %v2721, %v3169
  %v3306 = vadd.f32 %v2722, %v3170
  %v3307 = vadd.f32 %v2723, %v3171
  %v3308 = vadd.f32 %v2724, %v3172
  %v3309 = vadd.f32 %v2725, %v3173
  %v3310 = vadd.f32 %v2726, %v3174
  %v3311 = vadd.f32 %v2727, %v3175
  %v3312 = vadd.f32 %v2728, %v3176
  %v3313 = vadd.f32 %v2729, %v3177
  %v3314 = vadd.f32 %v2730, %v3178
  %v3315 = vadd.f32 %v2731, %v3179
  %v3316 = vadd.f32 %v2732, %v3180
  %v3317 = vadd.f32 %v2733, %v3181
  %v3318 = vadd.f32 %v2734, %v3182
  %v3319 = vadd.f32 %v2735, %v3183
  %v3320 = vadd.f32 %v2736, %v3184
  %v3321 = vadd.f32 %v2737, %v3185
  %v3322 = vadd.f32 %v2738, %v3254
  %v3323 = vadd.f32 %v2739, %v3255
  %v3324 = vadd.f32 %v2740, %v3256
  %v3325 = vadd.f32 %v2741, %v3257
  %v3326 = vadd.f32 %v2742, %v3258
  %v3327 = vadd.f32 %v2743, %v3259
  %v3328 = vadd.f32 %v2744, %v3260
  %v3329 = vadd.f32 %v2745, %v3261
  %v3330 = vadd.f32 %v2746, %v3262
  %v3331 = vadd.f32 %v2747, %v3263
  %v3332 = vadd.f32 %v2748, %v3264
  %v3333 = vadd.f32 %v2749, %v3265
  %v3334 = vadd.f32 %v2750, %v3266
  %v3335 = vadd.f32 %v2751, %v3267
  %v3336 = vadd.f32 %v2752, %v3268
  %v3337 = vadd.f32 %v2753, %v3269
  %v3338 = vadd.f32 %v2754, %v3270
  %v3339 = vadd.f32 %v2755, %v3271
  %v3340 = vadd.f32 %v2756, %v3272
  %v3341 = vadd.f32 %v2757, %v3273
  %v3342 = vadd.f32 %v2758, %v3274
  %v3343 = vadd.f32 %v2759, %v3275
  %v3344 = vadd.f32 %v2760, %v3276
  %v3345 = vadd.f32 %v2761, %v3277
  %v3346 = vadd.f32 %v2762, %v3278
  %v3347 = vadd.f32 %v2763, %v3279
  %v3348 = vadd.f32 %v2764, %v3280
  %v3349 = vadd.f32 %v2765, %v3281
  %v3350 = vadd.f32 %v2766, %v3282
  %v3351 = vadd.f32 %v2767, %v3283
  %v3352 = vadd.f32 %v2768, %v3284
  %v3353 = vadd.f32 %v2769, %v3285
  %v3354 = vadd.f32 %v2770, %v3286
  %v3355 = vadd.f32 %v2771, %v3287
  %v3356 = vsel %vm1365, %v1573, %v1675
  %v3357 = vsel %vm1365, %v1575, %v1677
  %v3358 = vsel %vm1365, %v1577, %v1679
  %v3359 = vsel %vm1365, %v1579, %v1681
  %v3360 = vsel %vm1365, %v1581, %v1683
  %v3361 = vsel %vm1365, %v1583, %v1685
  %v3362 = vsel %vm1365, %v1585, %v1687
  %v3363 = vsel %vm1365, %v1587, %v1689
  %v3364 = vsel %vm1365, %v1589, %v1691
  %v3365 = vsel %vm1365, %v1591, %v1693
  %v3366 = vsel %vm1365, %v1593, %v1695
  %v3367 = vsel %vm1365, %v1595, %v1697
  %v3368 = vsel %vm1365, %v1597, %v1699
  %v3369 = vsel %vm1365, %v1599, %v1701
  %v3370 = vsel %vm1365, %v1601, %v1703
  %v3371 = vsel %vm1365, %v1603, %v1705
  %v3372 = vsel %vm1365, %v1605, %v1707
  %v3373 = vsel %vm1365, %v1607, %v1709
  %v3374 = vsel %vm1365, %v1609, %v1711
  %v3375 = vsel %vm1365, %v1611, %v1713
  %v3376 = vsel %vm1365, %v1613, %v1715
  %v3377 = vsel %vm1365, %v1615, %v1717
  %v3378 = vsel %vm1365, %v1617, %v1719
  %v3379 = vsel %vm1365, %v1619, %v1721
  %v3380 = vsel %vm1365, %v1621, %v1723
  %v3381 = vsel %vm1365, %v1623, %v1725
  %v3382 = vsel %vm1365, %v1625, %v1727
  %v3383 = vsel %vm1365, %v1627, %v1729
  %v3384 = vsel %vm1365, %v1629, %v1731
  %v3385 = vsel %vm1365, %v1631, %v1733
  %v3386 = vsel %vm1365, %v1633, %v1735
  %v3387 = vsel %vm1365, %v1635, %v1737
  %v3388 = vsel %vm1365, %v1637, %v1739
  %v3389 = vsel %vm1365, %v1639, %v1741
  %v3390 = vsel %vm1400, %v3356, %v1777
  %v3391 = vsel %vm1400, %v3357, %v1779
  %v3392 = vsel %vm1400, %v3358, %v1781
  %v3393 = vsel %vm1400, %v3359, %v1783
  %v3394 = vsel %vm1400, %v3360, %v1785
  %v3395 = vsel %vm1400, %v3361, %v1787
  %v3396 = vsel %vm1400, %v3362, %v1789
  %v3397 = vsel %vm1400, %v3363, %v1791
  %v3398 = vsel %vm1400, %v3364, %v1793
  %v3399 = vsel %vm1400, %v3365, %v1795
  %v3400 = vsel %vm1400, %v3366, %v1797
  %v3401 = vsel %vm1400, %v3367, %v1799
  %v3402 = vsel %vm1400, %v3368, %v1801
  %v3403 = vsel %vm1400, %v3369, %v1803
  %v3404 = vsel %vm1400, %v3370, %v1805
  %v3405 = vsel %vm1400, %v3371, %v1807
  %v3406 = vsel %vm1400, %v3372, %v1809
  %v3407 = vsel %vm1400, %v3373, %v1811
  %v3408 = vsel %vm1400, %v3374, %v1813
  %v3409 = vsel %vm1400, %v3375, %v1815
  %v3410 = vsel %vm1400, %v3376, %v1817
  %v3411 = vsel %vm1400, %v3377, %v1819
  %v3412 = vsel %vm1400, %v3378, %v1821
  %v3413 = vsel %vm1400, %v3379, %v1823
  %v3414 = vsel %vm1400, %v3380, %v1825
  %v3415 = vsel %vm1400, %v3381, %v1827
  %v3416 = vsel %vm1400, %v3382, %v1829
  %v3417 = vsel %vm1400, %v3383, %v1831
  %v3418 = vsel %vm1400, %v3384, %v1833
  %v3419 = vsel %vm1400, %v3385, %v1835
  %v3420 = vsel %vm1400, %v3386, %v1837
  %v3421 = vsel %vm1400, %v3387, %v1839
  %v3422 = vsel %vm1400, %v3388, %v1841
  %v3423 = vsel %vm1400, %v3389, %v1843
  %v3424 = vsel %vm1435, %v3390, %v139
  %v3425 = vsel %vm1435, %v3391, %v142
  %v3426 = vsel %vm1435, %v3392, %v194
  %v3427 = vsel %vm1435, %v3393, %v197
  %v3428 = vsel %vm1435, %v3394, %v249
  %v3429 = vsel %vm1435, %v3395, %v252
  %v3430 = vsel %vm1435, %v3396, %v304
  %v3431 = vsel %vm1435, %v3397, %v307
  %v3432 = vsel %vm1435, %v3398, %v359
  %v3433 = vsel %vm1435, %v3399, %v362
  %v3434 = vsel %vm1435, %v3400, %v414
  %v3435 = vsel %vm1435, %v3401, %v417
  %v3436 = vsel %vm1435, %v3402, %v469
  %v3437 = vsel %vm1435, %v3403, %v472
  %v3438 = vsel %vm1435, %v3404, %v524
  %v3439 = vsel %vm1435, %v3405, %v527
  %v3440 = vsel %vm1435, %v3406, %v579
  %v3441 = vsel %vm1435, %v3407, %v582
  %v3442 = vsel %vm1435, %v3408, %v634
  %v3443 = vsel %vm1435, %v3409, %v637
  %v3444 = vsel %vm1435, %v3410, %v689
  %v3445 = vsel %vm1435, %v3411, %v692
  %v3446 = vsel %vm1435, %v3412, %v744
  %v3447 = vsel %vm1435, %v3413, %v747
  %v3448 = vsel %vm1435, %v3414, %v799
  %v3449 = vsel %vm1435, %v3415, %v802
  %v3450 = vsel %vm1435, %v3416, %v854
  %v3451 = vsel %vm1435, %v3417, %v857
  %v3452 = vsel %vm1435, %v3418, %v909
  %v3453 = vsel %vm1435, %v3419, %v912
  %v3454 = vsel %vm1435, %v3420, %v964
  %v3455 = vsel %vm1435, %v3421, %v967
  %v3456 = vsel %vm1435, %v3422, %v1019
  %v3457 = vsel %vm1435, %v3423, %v1022
  %3458 = vrot.lane.b32.xlu0 %v139, 114
  %v3459 = vpop.permute.xlu0 %3458
  %3460 = vrot.lane.b32.xlu0 %v142, 114
  %v3461 = vpop.permute.xlu0 %3460
  %3462 = vrot.lane.b32.xlu0 %v194, 114
  %v3463 = vpop.permute.xlu0 %3462
  %3464 = vrot.lane.b32.xlu0 %v197, 114
  %v3465 = vpop.permute.xlu0 %3464
  %3466 = vrot.lane.b32.xlu0 %v249, 114
  %v3467 = vpop.permute.xlu0 %3466
  %3468 = vrot.lane.b32.xlu0 %v252, 114
  %v3469 = vpop.permute.xlu0 %3468
  %3470 = vrot.lane.b32.xlu0 %v304, 114
  %v3471 = vpop.permute.xlu0 %3470
  %3472 = vrot.lane.b32.xlu0 %v307, 114
  %v3473 = vpop.permute.xlu0 %3472
  %3474 = vrot.lane.b32.xlu0 %v359, 114
  %v3475 = vpop.permute.xlu0 %3474
  %3476 = vrot.lane.b32.xlu0 %v362, 114
  %v3477 = vpop.permute.xlu0 %3476
  %3478 = vrot.lane.b32.xlu0 %v414, 114
  %v3479 = vpop.permute.xlu0 %3478
  %3480 = vrot.lane.b32.xlu0 %v417, 114
  %v3481 = vpop.permute.xlu0 %3480
  %3482 = vrot.lane.b32.xlu0 %v469, 114
  %v3483 = vpop.permute.xlu0 %3482
  %3484 = vrot.lane.b32.xlu0 %v472, 114
  %v3485 = vpop.permute.xlu0 %3484
  %3486 = vrot.lane.b32.xlu0 %v524, 114
  %v3487 = vpop.permute.xlu0 %3486
  %3488 = vrot.lane.b32.xlu0 %v527, 114
  %v3489 = vpop.permute.xlu0 %3488
  %3490 = vrot.lane.b32.xlu0 %v579, 114
  %v3491 = vpop.permute.xlu0 %3490
  %3492 = vrot.lane.b32.xlu0 %v582, 114
  %v3493 = vpop.permute.xlu0 %3492
  %3494 = vrot.lane.b32.xlu0 %v634, 114
  %v3495 = vpop.permute.xlu0 %3494
  %3496 = vrot.lane.b32.xlu0 %v637, 114
  %v3497 = vpop.permute.xlu0 %3496
  %3498 = vrot.lane.b32.xlu0 %v689, 114
  %v3499 = vpop.permute.xlu0 %3498
  %3500 = vrot.lane.b32.xlu0 %v692, 114
  %v3501 = vpop.permute.xlu0 %3500
  %3502 = vrot.lane.b32.xlu0 %v744, 114
  %v3503 = vpop.permute.xlu0 %3502
  %3504 = vrot.lane.b32.xlu0 %v747, 114
  %v3505 = vpop.permute.xlu0 %3504
  %3506 = vrot.lane.b32.xlu0 %v799, 114
  %v3507 = vpop.permute.xlu0 %3506
  %3508 = vrot.lane.b32.xlu0 %v802, 114
  %v3509 = vpop.permute.xlu0 %3508
  %3510 = vrot.lane.b32.xlu0 %v854, 114
  %v3511 = vpop.permute.xlu0 %3510
  %3512 = vrot.lane.b32.xlu0 %v857, 114
  %v3513 = vpop.permute.xlu0 %3512
  %3514 = vrot.lane.b32.xlu0 %v909, 114
  %v3515 = vpop.permute.xlu0 %3514
  %3516 = vrot.lane.b32.xlu0 %v912, 114
  %v3517 = vpop.permute.xlu0 %3516
  %3518 = vrot.lane.b32.xlu0 %v964, 114
  %v3519 = vpop.permute.xlu0 %3518
  %3520 = vrot.lane.b32.xlu0 %v967, 114
  %v3521 = vpop.permute.xlu0 %3520
  %3522 = vrot.lane.b32.xlu0 %v1019, 114
  %v3523 = vpop.permute.xlu0 %3522
  %3524 = vrot.lane.b32.xlu0 %v1022, 114
  %v3525 = vpop.permute.xlu0 %3524
  %v3560 = vsel %vm1365, %v3459, %v2875
  %v3561 = vsel %vm1365, %v3461, %v2877
  %v3562 = vsel %vm1365, %v3463, %v2879
  %v3563 = vsel %vm1365, %v3465, %v2881
  %v3564 = vsel %vm1365, %v3467, %v2883
  %v3565 = vsel %vm1365, %v3469, %v2885
  %v3566 = vsel %vm1365, %v3471, %v2887
  %v3567 = vsel %vm1365, %v3473, %v2889
  %v3568 = vsel %vm1365, %v3475, %v2891
  %v3569 = vsel %vm1365, %v3477, %v2893
  %v3570 = vsel %vm1365, %v3479, %v2895
  %v3571 = vsel %vm1365, %v3481, %v2897
  %v3572 = vsel %vm1365, %v3483, %v2899
  %v3573 = vsel %vm1365, %v3485, %v2901
  %v3574 = vsel %vm1365, %v3487, %v2903
  %v3575 = vsel %vm1365, %v3489, %v2905
  %v3576 = vsel %vm1365, %v3491, %v2907
  %v3577 = vsel %vm1365, %v3493, %v2909
  %v3578 = vsel %vm1365, %v3495, %v2911
  %v3579 = vsel %vm1365, %v3497, %v2913
  %v3580 = vsel %vm1365, %v3499, %v2915
  %v3581 = vsel %vm1365, %v3501, %v2917
  %v3582 = vsel %vm1365, %v3503, %v2919
  %v3583 = vsel %vm1365, %v3505, %v2921
  %v3584 = vsel %vm1365, %v3507, %v2923
  %v3585 = vsel %vm1365, %v3509, %v2925
  %v3586 = vsel %vm1365, %v3511, %v2927
  %v3587 = vsel %vm1365, %v3513, %v2929
  %v3588 = vsel %vm1365, %v3515, %v2931
  %v3589 = vsel %vm1365, %v3517, %v2933
  %v3590 = vsel %vm1365, %v3519, %v2935
  %v3591 = vsel %vm1365, %v3521, %v2937
  %v3592 = vsel %vm1365, %v3523, %v2939
  %v3593 = vsel %vm1365, %v3525, %v2941
  %v3594 = vsel %vm1400, %v3560, %v2291
  %v3595 = vsel %vm1400, %v3561, %v2293
  %v3596 = vsel %vm1400, %v3562, %v2295
  %v3597 = vsel %vm1400, %v3563, %v2297
  %v3598 = vsel %vm1400, %v3564, %v2299
  %v3599 = vsel %vm1400, %v3565, %v2301
  %v3600 = vsel %vm1400, %v3566, %v2303
  %v3601 = vsel %vm1400, %v3567, %v2305
  %v3602 = vsel %vm1400, %v3568, %v2307
  %v3603 = vsel %vm1400, %v3569, %v2309
  %v3604 = vsel %vm1400, %v3570, %v2311
  %v3605 = vsel %vm1400, %v3571, %v2313
  %v3606 = vsel %vm1400, %v3572, %v2315
  %v3607 = vsel %vm1400, %v3573, %v2317
  %v3608 = vsel %vm1400, %v3574, %v2319
  %v3609 = vsel %vm1400, %v3575, %v2321
  %v3610 = vsel %vm1400, %v3576, %v2323
  %v3611 = vsel %vm1400, %v3577, %v2325
  %v3612 = vsel %vm1400, %v3578, %v2327
  %v3613 = vsel %vm1400, %v3579, %v2329
  %v3614 = vsel %vm1400, %v3580, %v2331
  %v3615 = vsel %vm1400, %v3581, %v2333
  %v3616 = vsel %vm1400, %v3582, %v2335
  %v3617 = vsel %vm1400, %v3583, %v2337
  %v3618 = vsel %vm1400, %v3584, %v2339
  %v3619 = vsel %vm1400, %v3585, %v2341
  %v3620 = vsel %vm1400, %v3586, %v2343
  %v3621 = vsel %vm1400, %v3587, %v2345
  %v3622 = vsel %vm1400, %v3588, %v2347
  %v3623 = vsel %vm1400, %v3589, %v2349
  %v3624 = vsel %vm1400, %v3590, %v2351
  %v3625 = vsel %vm1400, %v3591, %v2353
  %v3626 = vsel %vm1400, %v3592, %v2355
  %v3627 = vsel %vm1400, %v3593, %v2357
  %v3628 = vsel %vm1435, %v3594, %v1471
  %v3629 = vsel %vm1435, %v3595, %v1473
  %v3630 = vsel %vm1435, %v3596, %v1475
  %v3631 = vsel %vm1435, %v3597, %v1477
  %v3632 = vsel %vm1435, %v3598, %v1479
  %v3633 = vsel %vm1435, %v3599, %v1481
  %v3634 = vsel %vm1435, %v3600, %v1483
  %v3635 = vsel %vm1435, %v3601, %v1485
  %v3636 = vsel %vm1435, %v3602, %v1487
  %v3637 = vsel %vm1435, %v3603, %v1489
  %v3638 = vsel %vm1435, %v3604, %v1491
  %v3639 = vsel %vm1435, %v3605, %v1493
  %v3640 = vsel %vm1435, %v3606, %v1495
  %v3641 = vsel %vm1435, %v3607, %v1497
  %v3642 = vsel %vm1435, %v3608, %v1499
  %v3643 = vsel %vm1435, %v3609, %v1501
  %v3644 = vsel %vm1435, %v3610, %v1503
  %v3645 = vsel %vm1435, %v3611, %v1505
  %v3646 = vsel %vm1435, %v3612, %v1507
  %v3647 = vsel %vm1435, %v3613, %v1509
  %v3648 = vsel %vm1435, %v3614, %v1511
  %v3649 = vsel %vm1435, %v3615, %v1513
  %v3650 = vsel %vm1435, %v3616, %v1515
  %v3651 = vsel %vm1435, %v3617, %v1517
  %v3652 = vsel %vm1435, %v3618, %v1519
  %v3653 = vsel %vm1435, %v3619, %v1521
  %v3654 = vsel %vm1435, %v3620, %v1523
  %v3655 = vsel %vm1435, %v3621, %v1525
  %v3656 = vsel %vm1435, %v3622, %v1527
  %v3657 = vsel %vm1435, %v3623, %v1529
  %v3658 = vsel %vm1435, %v3624, %v1531
  %v3659 = vsel %vm1435, %v3625, %v1533
  %v3660 = vsel %vm1435, %v3626, %v1535
  %v3661 = vsel %vm1435, %v3627, %v1537
  %s3662 = scalar_lea.vmem %s3, 48
  %v3663 = vld [vmem:[%s3662] sm:$0xff]
  %v3664 = vld [vmem:[%s3662 + $0x8] sm:$0xff]
  %s3665 = scalar_lea.vmem %s4, 48
  %v3666 = vld [vmem:[%s3665] sm:$0xff]
  %v3667 = vld [vmem:[%s3665 + $0x8] sm:$0xff]
  %v3668 = vmul.f32 %v3424, %v3663
  %v3669 = vmul.f32 %v3425, %v3664
  %v3670 = vmul.f32 %v3426, %v3663
  %v3671 = vmul.f32 %v3427, %v3664
  %v3672 = vmul.f32 %v3428, %v3663
  %v3673 = vmul.f32 %v3429, %v3664
  %v3674 = vmul.f32 %v3430, %v3663
  %v3675 = vmul.f32 %v3431, %v3664
  %v3676 = vmul.f32 %v3432, %v3663
  %v3677 = vmul.f32 %v3433, %v3664
  %v3678 = vmul.f32 %v3434, %v3663
  %v3679 = vmul.f32 %v3435, %v3664
  %v3680 = vmul.f32 %v3436, %v3663
  %v3681 = vmul.f32 %v3437, %v3664
  %v3682 = vmul.f32 %v3438, %v3663
  %v3683 = vmul.f32 %v3439, %v3664
  %v3684 = vmul.f32 %v3440, %v3663
  %v3685 = vmul.f32 %v3441, %v3664
  %v3686 = vmul.f32 %v3442, %v3663
  %v3687 = vmul.f32 %v3443, %v3664
  %v3688 = vmul.f32 %v3444, %v3663
  %v3689 = vmul.f32 %v3445, %v3664
  %v3690 = vmul.f32 %v3446, %v3663
  %v3691 = vmul.f32 %v3447, %v3664
  %v3692 = vmul.f32 %v3448, %v3663
  %v3693 = vmul.f32 %v3449, %v3664
  %v3694 = vmul.f32 %v3450, %v3663
  %v3695 = vmul.f32 %v3451, %v3664
  %v3696 = vmul.f32 %v3452, %v3663
  %v3697 = vmul.f32 %v3453, %v3664
  %v3698 = vmul.f32 %v3454, %v3663
  %v3699 = vmul.f32 %v3455, %v3664
  %v3700 = vmul.f32 %v3456, %v3663
  %v3701 = vmul.f32 %v3457, %v3664
  %v3702 = vmul.f32 %v3628, %v3666
  %v3703 = vmul.f32 %v3629, %v3667
  %v3704 = vmul.f32 %v3630, %v3666
  %v3705 = vmul.f32 %v3631, %v3667
  %v3706 = vmul.f32 %v3632, %v3666
  %v3707 = vmul.f32 %v3633, %v3667
  %v3708 = vmul.f32 %v3634, %v3666
  %v3709 = vmul.f32 %v3635, %v3667
  %v3710 = vmul.f32 %v3636, %v3666
  %v3711 = vmul.f32 %v3637, %v3667
  %v3712 = vmul.f32 %v3638, %v3666
  %v3713 = vmul.f32 %v3639, %v3667
  %v3714 = vmul.f32 %v3640, %v3666
  %v3715 = vmul.f32 %v3641, %v3667
  %v3716 = vmul.f32 %v3642, %v3666
  %v3717 = vmul.f32 %v3643, %v3667
  %v3718 = vmul.f32 %v3644, %v3666
  %v3719 = vmul.f32 %v3645, %v3667
  %v3720 = vmul.f32 %v3646, %v3666
  %v3721 = vmul.f32 %v3647, %v3667
  %v3722 = vmul.f32 %v3648, %v3666
  %v3723 = vmul.f32 %v3649, %v3667
  %v3724 = vmul.f32 %v3650, %v3666
  %v3725 = vmul.f32 %v3651, %v3667
  %v3726 = vmul.f32 %v3652, %v3666
  %v3727 = vmul.f32 %v3653, %v3667
  %v3728 = vmul.f32 %v3654, %v3666
  %v3729 = vmul.f32 %v3655, %v3667
  %v3730 = vmul.f32 %v3656, %v3666
  %v3731 = vmul.f32 %v3657, %v3667
  %v3732 = vmul.f32 %v3658, %v3666
  %v3733 = vmul.f32 %v3659, %v3667
  %v3734 = vmul.f32 %v3660, %v3666
  %v3735 = vmul.f32 %v3661, %v3667
  %v3736 = vsub.f32 %v3668, %v3702
  %v3737 = vsub.f32 %v3669, %v3703
  %v3738 = vsub.f32 %v3670, %v3704
  %v3739 = vsub.f32 %v3671, %v3705
  %v3740 = vsub.f32 %v3672, %v3706
  %v3741 = vsub.f32 %v3673, %v3707
  %v3742 = vsub.f32 %v3674, %v3708
  %v3743 = vsub.f32 %v3675, %v3709
  %v3744 = vsub.f32 %v3676, %v3710
  %v3745 = vsub.f32 %v3677, %v3711
  %v3746 = vsub.f32 %v3678, %v3712
  %v3747 = vsub.f32 %v3679, %v3713
  %v3748 = vsub.f32 %v3680, %v3714
  %v3749 = vsub.f32 %v3681, %v3715
  %v3750 = vsub.f32 %v3682, %v3716
  %v3751 = vsub.f32 %v3683, %v3717
  %v3752 = vsub.f32 %v3684, %v3718
  %v3753 = vsub.f32 %v3685, %v3719
  %v3754 = vsub.f32 %v3686, %v3720
  %v3755 = vsub.f32 %v3687, %v3721
  %v3756 = vsub.f32 %v3688, %v3722
  %v3757 = vsub.f32 %v3689, %v3723
  %v3758 = vsub.f32 %v3690, %v3724
  %v3759 = vsub.f32 %v3691, %v3725
  %v3760 = vsub.f32 %v3692, %v3726
  %v3761 = vsub.f32 %v3693, %v3727
  %v3762 = vsub.f32 %v3694, %v3728
  %v3763 = vsub.f32 %v3695, %v3729
  %v3764 = vsub.f32 %v3696, %v3730
  %v3765 = vsub.f32 %v3697, %v3731
  %v3766 = vsub.f32 %v3698, %v3732
  %v3767 = vsub.f32 %v3699, %v3733
  %v3768 = vsub.f32 %v3700, %v3734
  %v3769 = vsub.f32 %v3701, %v3735
  %v3770 = vmul.f32 %v3424, %v3666
  %v3771 = vmul.f32 %v3425, %v3667
  %v3772 = vmul.f32 %v3426, %v3666
  %v3773 = vmul.f32 %v3427, %v3667
  %v3774 = vmul.f32 %v3428, %v3666
  %v3775 = vmul.f32 %v3429, %v3667
  %v3776 = vmul.f32 %v3430, %v3666
  %v3777 = vmul.f32 %v3431, %v3667
  %v3778 = vmul.f32 %v3432, %v3666
  %v3779 = vmul.f32 %v3433, %v3667
  %v3780 = vmul.f32 %v3434, %v3666
  %v3781 = vmul.f32 %v3435, %v3667
  %v3782 = vmul.f32 %v3436, %v3666
  %v3783 = vmul.f32 %v3437, %v3667
  %v3784 = vmul.f32 %v3438, %v3666
  %v3785 = vmul.f32 %v3439, %v3667
  %v3786 = vmul.f32 %v3440, %v3666
  %v3787 = vmul.f32 %v3441, %v3667
  %v3788 = vmul.f32 %v3442, %v3666
  %v3789 = vmul.f32 %v3443, %v3667
  %v3790 = vmul.f32 %v3444, %v3666
  %v3791 = vmul.f32 %v3445, %v3667
  %v3792 = vmul.f32 %v3446, %v3666
  %v3793 = vmul.f32 %v3447, %v3667
  %v3794 = vmul.f32 %v3448, %v3666
  %v3795 = vmul.f32 %v3449, %v3667
  %v3796 = vmul.f32 %v3450, %v3666
  %v3797 = vmul.f32 %v3451, %v3667
  %v3798 = vmul.f32 %v3452, %v3666
  %v3799 = vmul.f32 %v3453, %v3667
  %v3800 = vmul.f32 %v3454, %v3666
  %v3801 = vmul.f32 %v3455, %v3667
  %v3802 = vmul.f32 %v3456, %v3666
  %v3803 = vmul.f32 %v3457, %v3667
  %v3804 = vmul.f32 %v3628, %v3663
  %v3805 = vmul.f32 %v3629, %v3664
  %v3806 = vmul.f32 %v3630, %v3663
  %v3807 = vmul.f32 %v3631, %v3664
  %v3808 = vmul.f32 %v3632, %v3663
  %v3809 = vmul.f32 %v3633, %v3664
  %v3810 = vmul.f32 %v3634, %v3663
  %v3811 = vmul.f32 %v3635, %v3664
  %v3812 = vmul.f32 %v3636, %v3663
  %v3813 = vmul.f32 %v3637, %v3664
  %v3814 = vmul.f32 %v3638, %v3663
  %v3815 = vmul.f32 %v3639, %v3664
  %v3816 = vmul.f32 %v3640, %v3663
  %v3817 = vmul.f32 %v3641, %v3664
  %v3818 = vmul.f32 %v3642, %v3663
  %v3819 = vmul.f32 %v3643, %v3664
  %v3820 = vmul.f32 %v3644, %v3663
  %v3821 = vmul.f32 %v3645, %v3664
  %v3822 = vmul.f32 %v3646, %v3663
  %v3823 = vmul.f32 %v3647, %v3664
  %v3824 = vmul.f32 %v3648, %v3663
  %v3825 = vmul.f32 %v3649, %v3664
  %v3826 = vmul.f32 %v3650, %v3663
  %v3827 = vmul.f32 %v3651, %v3664
  %v3828 = vmul.f32 %v3652, %v3663
  %v3829 = vmul.f32 %v3653, %v3664
  %v3830 = vmul.f32 %v3654, %v3663
  %v3831 = vmul.f32 %v3655, %v3664
  %v3832 = vmul.f32 %v3656, %v3663
  %v3833 = vmul.f32 %v3657, %v3664
  %v3834 = vmul.f32 %v3658, %v3663
  %v3835 = vmul.f32 %v3659, %v3664
  %v3836 = vmul.f32 %v3660, %v3663
  %v3837 = vmul.f32 %v3661, %v3664
  %v3838 = vadd.f32 %v3770, %v3804
  %v3839 = vadd.f32 %v3771, %v3805
  %v3840 = vadd.f32 %v3772, %v3806
  %v3841 = vadd.f32 %v3773, %v3807
  %v3842 = vadd.f32 %v3774, %v3808
  %v3843 = vadd.f32 %v3775, %v3809
  %v3844 = vadd.f32 %v3776, %v3810
  %v3845 = vadd.f32 %v3777, %v3811
  %v3846 = vadd.f32 %v3778, %v3812
  %v3847 = vadd.f32 %v3779, %v3813
  %v3848 = vadd.f32 %v3780, %v3814
  %v3849 = vadd.f32 %v3781, %v3815
  %v3850 = vadd.f32 %v3782, %v3816
  %v3851 = vadd.f32 %v3783, %v3817
  %v3852 = vadd.f32 %v3784, %v3818
  %v3853 = vadd.f32 %v3785, %v3819
  %v3854 = vadd.f32 %v3786, %v3820
  %v3855 = vadd.f32 %v3787, %v3821
  %v3856 = vadd.f32 %v3788, %v3822
  %v3857 = vadd.f32 %v3789, %v3823
  %v3858 = vadd.f32 %v3790, %v3824
  %v3859 = vadd.f32 %v3791, %v3825
  %v3860 = vadd.f32 %v3792, %v3826
  %v3861 = vadd.f32 %v3793, %v3827
  %v3862 = vadd.f32 %v3794, %v3828
  %v3863 = vadd.f32 %v3795, %v3829
  %v3864 = vadd.f32 %v3796, %v3830
  %v3865 = vadd.f32 %v3797, %v3831
  %v3866 = vadd.f32 %v3798, %v3832
  %v3867 = vadd.f32 %v3799, %v3833
  %v3868 = vadd.f32 %v3800, %v3834
  %v3869 = vadd.f32 %v3801, %v3835
  %v3870 = vadd.f32 %v3802, %v3836
  %v3871 = vadd.f32 %v3803, %v3837
  %v3872 = vadd.f32 %v3288, %v3736
  %v3873 = vadd.f32 %v3289, %v3737
  %v3874 = vadd.f32 %v3290, %v3738
  %v3875 = vadd.f32 %v3291, %v3739
  %v3876 = vadd.f32 %v3292, %v3740
  %v3877 = vadd.f32 %v3293, %v3741
  %v3878 = vadd.f32 %v3294, %v3742
  %v3879 = vadd.f32 %v3295, %v3743
  %v3880 = vadd.f32 %v3296, %v3744
  %v3881 = vadd.f32 %v3297, %v3745
  %v3882 = vadd.f32 %v3298, %v3746
  %v3883 = vadd.f32 %v3299, %v3747
  %v3884 = vadd.f32 %v3300, %v3748
  %v3885 = vadd.f32 %v3301, %v3749
  %v3886 = vadd.f32 %v3302, %v3750
  %v3887 = vadd.f32 %v3303, %v3751
  %v3888 = vadd.f32 %v3304, %v3752
  %v3889 = vadd.f32 %v3305, %v3753
  %v3890 = vadd.f32 %v3306, %v3754
  %v3891 = vadd.f32 %v3307, %v3755
  %v3892 = vadd.f32 %v3308, %v3756
  %v3893 = vadd.f32 %v3309, %v3757
  %v3894 = vadd.f32 %v3310, %v3758
  %v3895 = vadd.f32 %v3311, %v3759
  %v3896 = vadd.f32 %v3312, %v3760
  %v3897 = vadd.f32 %v3313, %v3761
  %v3898 = vadd.f32 %v3314, %v3762
  %v3899 = vadd.f32 %v3315, %v3763
  %v3900 = vadd.f32 %v3316, %v3764
  %v3901 = vadd.f32 %v3317, %v3765
  %v3902 = vadd.f32 %v3318, %v3766
  %v3903 = vadd.f32 %v3319, %v3767
  %v3904 = vadd.f32 %v3320, %v3768
  %v3905 = vadd.f32 %v3321, %v3769
  %v3906 = vadd.f32 %v3322, %v3838
  %v3907 = vadd.f32 %v3323, %v3839
  %v3908 = vadd.f32 %v3324, %v3840
  %v3909 = vadd.f32 %v3325, %v3841
  %v3910 = vadd.f32 %v3326, %v3842
  %v3911 = vadd.f32 %v3327, %v3843
  %v3912 = vadd.f32 %v3328, %v3844
  %v3913 = vadd.f32 %v3329, %v3845
  %v3914 = vadd.f32 %v3330, %v3846
  %v3915 = vadd.f32 %v3331, %v3847
  %v3916 = vadd.f32 %v3332, %v3848
  %v3917 = vadd.f32 %v3333, %v3849
  %v3918 = vadd.f32 %v3334, %v3850
  %v3919 = vadd.f32 %v3335, %v3851
  %v3920 = vadd.f32 %v3336, %v3852
  %v3921 = vadd.f32 %v3337, %v3853
  %v3922 = vadd.f32 %v3338, %v3854
  %v3923 = vadd.f32 %v3339, %v3855
  %v3924 = vadd.f32 %v3340, %v3856
  %v3925 = vadd.f32 %v3341, %v3857
  %v3926 = vadd.f32 %v3342, %v3858
  %v3927 = vadd.f32 %v3343, %v3859
  %v3928 = vadd.f32 %v3344, %v3860
  %v3929 = vadd.f32 %v3345, %v3861
  %v3930 = vadd.f32 %v3346, %v3862
  %v3931 = vadd.f32 %v3347, %v3863
  %v3932 = vadd.f32 %v3348, %v3864
  %v3933 = vadd.f32 %v3349, %v3865
  %v3934 = vadd.f32 %v3350, %v3866
  %v3935 = vadd.f32 %v3351, %v3867
  %v3936 = vadd.f32 %v3352, %v3868
  %v3937 = vadd.f32 %v3353, %v3869
  %v3938 = vadd.f32 %v3354, %v3870
  %v3939 = vadd.f32 %v3355, %v3871
  %3974 = vrot.lane.b32.xlu0 %v3906, 8
  %v3975 = vpop.permute.xlu0 %3974
  %3976 = vrot.lane.b32.xlu0 %v3907, 8
  %v3977 = vpop.permute.xlu0 %3976
  %3978 = vrot.lane.b32.xlu0 %v3908, 8
  %v3979 = vpop.permute.xlu0 %3978
  %3980 = vrot.lane.b32.xlu0 %v3909, 8
  %v3981 = vpop.permute.xlu0 %3980
  %3982 = vrot.lane.b32.xlu0 %v3910, 8
  %v3983 = vpop.permute.xlu0 %3982
  %3984 = vrot.lane.b32.xlu0 %v3911, 8
  %v3985 = vpop.permute.xlu0 %3984
  %3986 = vrot.lane.b32.xlu0 %v3912, 8
  %v3987 = vpop.permute.xlu0 %3986
  %3988 = vrot.lane.b32.xlu0 %v3913, 8
  %v3989 = vpop.permute.xlu0 %3988
  %3990 = vrot.lane.b32.xlu0 %v3914, 8
  %v3991 = vpop.permute.xlu0 %3990
  %3992 = vrot.lane.b32.xlu0 %v3915, 8
  %v3993 = vpop.permute.xlu0 %3992
  %3994 = vrot.lane.b32.xlu0 %v3916, 8
  %v3995 = vpop.permute.xlu0 %3994
  %3996 = vrot.lane.b32.xlu0 %v3917, 8
  %v3997 = vpop.permute.xlu0 %3996
  %3998 = vrot.lane.b32.xlu0 %v3918, 8
  %v3999 = vpop.permute.xlu0 %3998
  %4000 = vrot.lane.b32.xlu0 %v3919, 8
  %v4001 = vpop.permute.xlu0 %4000
  %4002 = vrot.lane.b32.xlu0 %v3920, 8
  %v4003 = vpop.permute.xlu0 %4002
  %4004 = vrot.lane.b32.xlu0 %v3921, 8
  %v4005 = vpop.permute.xlu0 %4004
  %4006 = vrot.lane.b32.xlu0 %v3922, 8
  %v4007 = vpop.permute.xlu0 %4006
  %4008 = vrot.lane.b32.xlu0 %v3923, 8
  %v4009 = vpop.permute.xlu0 %4008
  %4010 = vrot.lane.b32.xlu0 %v3924, 8
  %v4011 = vpop.permute.xlu0 %4010
  %4012 = vrot.lane.b32.xlu0 %v3925, 8
  %v4013 = vpop.permute.xlu0 %4012
  %4014 = vrot.lane.b32.xlu0 %v3926, 8
  %v4015 = vpop.permute.xlu0 %4014
  %4016 = vrot.lane.b32.xlu0 %v3927, 8
  %v4017 = vpop.permute.xlu0 %4016
  %4018 = vrot.lane.b32.xlu0 %v3928, 8
  %v4019 = vpop.permute.xlu0 %4018
  %4020 = vrot.lane.b32.xlu0 %v3929, 8
  %v4021 = vpop.permute.xlu0 %4020
  %4022 = vrot.lane.b32.xlu0 %v3930, 8
  %v4023 = vpop.permute.xlu0 %4022
  %4024 = vrot.lane.b32.xlu0 %v3931, 8
  %v4025 = vpop.permute.xlu0 %4024
  %4026 = vrot.lane.b32.xlu0 %v3932, 8
  %v4027 = vpop.permute.xlu0 %4026
  %4028 = vrot.lane.b32.xlu0 %v3933, 8
  %v4029 = vpop.permute.xlu0 %4028
  %4030 = vrot.lane.b32.xlu0 %v3934, 8
  %v4031 = vpop.permute.xlu0 %4030
  %4032 = vrot.lane.b32.xlu0 %v3935, 8
  %v4033 = vpop.permute.xlu0 %4032
  %4034 = vrot.lane.b32.xlu0 %v3936, 8
  %v4035 = vpop.permute.xlu0 %4034
  %4036 = vrot.lane.b32.xlu0 %v3937, 8
  %v4037 = vpop.permute.xlu0 %4036
  %4038 = vrot.lane.b32.xlu0 %v3938, 8
  %v4039 = vpop.permute.xlu0 %4038
  %4040 = vrot.lane.b32.xlu0 %v3939, 8
  %v4041 = vpop.permute.xlu0 %4040
  %vm4076 = vcmask 64512
  %v4077 = vsel %vm4076, %v3872, %v3975
  %v4078 = vsel %vm4076, %v3873, %v3977
  %v4079 = vsel %vm4076, %v3874, %v3979
  %v4080 = vsel %vm4076, %v3875, %v3981
  %v4081 = vsel %vm4076, %v3876, %v3983
  %v4082 = vsel %vm4076, %v3877, %v3985
  %v4083 = vsel %vm4076, %v3878, %v3987
  %v4084 = vsel %vm4076, %v3879, %v3989
  %v4085 = vsel %vm4076, %v3880, %v3991
  %v4086 = vsel %vm4076, %v3881, %v3993
  %v4087 = vsel %vm4076, %v3882, %v3995
  %v4088 = vsel %vm4076, %v3883, %v3997
  %v4089 = vsel %vm4076, %v3884, %v3999
  %v4090 = vsel %vm4076, %v3885, %v4001
  %v4091 = vsel %vm4076, %v3886, %v4003
  %v4092 = vsel %vm4076, %v3887, %v4005
  %v4093 = vsel %vm4076, %v3888, %v4007
  %v4094 = vsel %vm4076, %v3889, %v4009
  %v4095 = vsel %vm4076, %v3890, %v4011
  %v4096 = vsel %vm4076, %v3891, %v4013
  %v4097 = vsel %vm4076, %v3892, %v4015
  %v4098 = vsel %vm4076, %v3893, %v4017
  %v4099 = vsel %vm4076, %v3894, %v4019
  %v4100 = vsel %vm4076, %v3895, %v4021
  %v4101 = vsel %vm4076, %v3896, %v4023
  %v4102 = vsel %vm4076, %v3897, %v4025
  %v4103 = vsel %vm4076, %v3898, %v4027
  %v4104 = vsel %vm4076, %v3899, %v4029
  %v4105 = vsel %vm4076, %v3900, %v4031
  %v4106 = vsel %vm4076, %v3901, %v4033
  %v4107 = vsel %vm4076, %v3902, %v4035
  %v4108 = vsel %vm4076, %v3903, %v4037
  %v4109 = vsel %vm4076, %v3904, %v4039
  %v4110 = vsel %vm4076, %v3905, %v4041
  %v4111 = vpack.c.bf16 %v4078, %v4077
  %v4112 = vpack.c.bf16 %v4080, %v4079
  %v4113 = vpack.c.bf16 %v4082, %v4081
  %v4114 = vpack.c.bf16 %v4084, %v4083
  %v4115 = vpack.c.bf16 %v4086, %v4085
  %v4116 = vpack.c.bf16 %v4088, %v4087
  %v4117 = vpack.c.bf16 %v4090, %v4089
  %v4118 = vpack.c.bf16 %v4092, %v4091
  %v4119 = vpack.c.bf16 %v4094, %v4093
  %v4120 = vpack.c.bf16 %v4096, %v4095
  %v4121 = vpack.c.bf16 %v4098, %v4097
  %v4122 = vpack.c.bf16 %v4100, %v4099
  %v4123 = vpack.c.bf16 %v4102, %v4101
  %v4124 = vpack.c.bf16 %v4104, %v4103
  %v4125 = vpack.c.bf16 %v4106, %v4105
  %v4126 = vpack.c.bf16 %v4108, %v4107
  %v4127 = vpack.c.bf16 %v4110, %v4109
  %v4128 = vld [vmem:[%s2] sm:$0xf]
  %v4129 = vld [vmem:[%s2 + $0x4] sm:$0xf]
  %v4130 = vld [vmem:[%s2 + $0x8] sm:$0xf]
  %v4131 = vld [vmem:[%s2 + $0xc] sm:$0xf]
  %v4132 = vld [vmem:[%s2 + $0x10] sm:$0xf]
  %v4133 = vld [vmem:[%s2 + $0x14] sm:$0xf]
  %v4134 = vld [vmem:[%s2 + $0x18] sm:$0xf]
  %v4135 = vld [vmem:[%s2 + $0x1c] sm:$0xf]
  %v4136 = vld [vmem:[%s2 + $0x20] sm:$0xf]
  %v4137 = vld [vmem:[%s2 + $0x24] sm:$0xf]
  %v4138 = vld [vmem:[%s2 + $0x28] sm:$0xf]
  %v4139 = vld [vmem:[%s2 + $0x2c] sm:$0xf]
  %v4140 = vld [vmem:[%s2 + $0x30] sm:$0xf]
  %v4141 = vld [vmem:[%s2 + $0x34] sm:$0xf]
  %v4142 = vld [vmem:[%s2 + $0x38] sm:$0xf]
  %v4143 = vld [vmem:[%s2 + $0x3c] sm:$0xf]
  %v4144 = vld [vmem:[%s2 + $0x40] sm:$0xf]
  %v4145 = vld [vmem:[%s2 + $0x44] sm:$0xf]
  %v4146 = vld [vmem:[%s2 + $0x48] sm:$0xf]
  %v4147 = vld [vmem:[%s2 + $0x4c] sm:$0xf]
  %v4148 = vld [vmem:[%s2 + $0x50] sm:$0xf]
  %v4149 = vld [vmem:[%s2 + $0x54] sm:$0xf]
  %v4150 = vld [vmem:[%s2 + $0x58] sm:$0xf]
  %v4151 = vld [vmem:[%s2 + $0x5c] sm:$0xf]
  %v4152 = vld [vmem:[%s2 + $0x60] sm:$0xf]
  %v4153 = vld [vmem:[%s2 + $0x64] sm:$0xf]
  %v4154 = vld [vmem:[%s2 + $0x68] sm:$0xf]
  %v4155 = vld [vmem:[%s2 + $0x6c] sm:$0xf]
  %v4156 = vld [vmem:[%s2 + $0x70] sm:$0xf]
  %v4157 = vld [vmem:[%s2 + $0x74] sm:$0xf]
  %v4158 = vld [vmem:[%s2 + $0x78] sm:$0xf]
  %v4159 = vld [vmem:[%s2 + $0x7c] sm:$0xf]
  %v4160 = vld [vmem:[%s2 + $0x80] sm:$0xf]
  %v4161 = vld [vmem:[%s2 + $0x84] sm:$0xf]
  %v4164 = vunpack.c.l.b16 %v4128
  %v4165 = vunpack.c.l.b16 %v4129
  %v4166 = vpack.c.b16 %v4165, %v4164
  %v4168 = vsel %vm100, %v4166, 0
  %4170 = vmatprep.subr.bf16.mxu0 0
  %4171 = vmatpush1.bf16.msra.mxu0 %v4111
  %4172 = vmatprep.subr.bf16.mxu0 0
  %4173 = vmatpush1.bf16.msra.mxu0 0
  %4174 = vmatprep.subr.bf16.mxu0 0
  %4175 = vmatpush1.bf16.msra.mxu0 0
  %4176 = vmatprep.subr.bf16.mxu0 0
  %4177 = vmatpush1.bf16.msra.mxu0 0
  %4178 = vmatprep.subr.bf16.mxu0 0
  %4179 = vmatpush1.bf16.msra.mxu0 0
  %4180 = vmatprep.subr.bf16.mxu0 0
  %4181 = vmatpush1.bf16.msra.mxu0 0
  %4182 = vmatprep.subr.bf16.mxu0 0
  %4183 = vmatpush1.bf16.msra.mxu0 0
  %4184 = vmatprep.subr.bf16.mxu0 0
  %4185 = vmatpush1.bf16.msra.mxu0 0
  %4186 = vmatprep.subr.bf16.mxu0 0
  %4187 = vmatpush1.bf16.msra.mxu0 0
  %4188 = vmatprep.subr.bf16.mxu0 0
  %4189 = vmatpush1.bf16.msra.mxu0 0
  %4190 = vmatprep.subr.bf16.mxu0 0
  %4191 = vmatpush1.bf16.msra.mxu0 0
  %4192 = vmatprep.subr.bf16.mxu0 0
  %4193 = vmatpush1.bf16.msra.mxu0 0
  %4194 = vmatprep.subr.bf16.mxu0 0
  %4195 = vmatpush1.bf16.msra.mxu0 0
  %4196 = vmatprep.subr.bf16.mxu0 0
  %4197 = vmatpush1.bf16.msra.mxu0 0
  %4198 = vmatprep.subr.bf16.mxu0 0
  %4199 = vmatpush1.bf16.msra.mxu0 0
  %4200 = vmatprep.subr.bf16.mxu0 0
  %4201 = vmatpush1.bf16.msra.mxu0 0
  %4202 = vmatprep.mubr.bf16.mxu0 0
  %4203 = vmatmul.mubr.bf16.gmra.mrb[0].mxu0 %v4168
  %v4204 = vpop.f32.mrb[0].mxu0
  %v4205 = vadd.f32 0.0, %v4204
  %v4206 = vpop.f32.mrb[0].mxu0
  %v4207 = vpop.f32.mrb[0].mxu0
  %v4208 = vadd.f32 0.0, %v4207
  %v4209 = vpop.f32.mrb[0].mxu0
  %4210 = vdwg.mxu0
  %v4213 = vunpack.c.l.b16 %v4130
  %v4214 = vunpack.c.l.b16 %v4131
  %v4215 = vpack.c.b16 %v4214, %v4213
  %v4217 = vsel %vm100, %v4215, 0
  %4219 = vmatprep.subr.bf16.mxu0 0
  %4220 = vmatpush1.bf16.msra.mxu0 %v4112
  %4221 = vmatprep.subr.bf16.mxu0 0
  %4222 = vmatpush1.bf16.msra.mxu0 0
  %4223 = vmatprep.subr.bf16.mxu0 0
  %4224 = vmatpush1.bf16.msra.mxu0 0
  %4225 = vmatprep.subr.bf16.mxu0 0
  %4226 = vmatpush1.bf16.msra.mxu0 0
  %4227 = vmatprep.subr.bf16.mxu0 0
  %4228 = vmatpush1.bf16.msra.mxu0 0
  %4229 = vmatprep.subr.bf16.mxu0 0
  %4230 = vmatpush1.bf16.msra.mxu0 0
  %4231 = vmatprep.subr.bf16.mxu0 0
  %4232 = vmatpush1.bf16.msra.mxu0 0
  %4233 = vmatprep.subr.bf16.mxu0 0
  %4234 = vmatpush1.bf16.msra.mxu0 0
  %4235 = vmatprep.subr.bf16.mxu0 0
  %4236 = vmatpush1.bf16.msra.mxu0 0
  %4237 = vmatprep.subr.bf16.mxu0 0
  %4238 = vmatpush1.bf16.msra.mxu0 0
  %4239 = vmatprep.subr.bf16.mxu0 0
  %4240 = vmatpush1.bf16.msra.mxu0 0
  %4241 = vmatprep.subr.bf16.mxu0 0
  %4242 = vmatpush1.bf16.msra.mxu0 0
  %4243 = vmatprep.subr.bf16.mxu0 0
  %4244 = vmatpush1.bf16.msra.mxu0 0
  %4245 = vmatprep.subr.bf16.mxu0 0
  %4246 = vmatpush1.bf16.msra.mxu0 0
  %4247 = vmatprep.subr.bf16.mxu0 0
  %4248 = vmatpush1.bf16.msra.mxu0 0
  %4249 = vmatprep.subr.bf16.mxu0 0
  %4250 = vmatpush1.bf16.msra.mxu0 0
  %4251 = vmatprep.mubr.bf16.mxu0 0
  %4252 = vmatmul.mubr.bf16.gmra.mrb[0].mxu0 %v4217
  %v4253 = vpop.f32.mrb[0].mxu0
  %v4254 = vadd.f32 0.0, %v4253
  %v4255 = vpop.f32.mrb[0].mxu0
  %v4256 = vpop.f32.mrb[0].mxu0
  %v4257 = vadd.f32 0.0, %v4256
  %v4258 = vpop.f32.mrb[0].mxu0
  %4259 = vdwg.mxu0
  %v4262 = vunpack.c.l.b16 %v4132
  %v4263 = vunpack.c.l.b16 %v4133
  %v4264 = vpack.c.b16 %v4263, %v4262
  %v4266 = vsel %vm100, %v4264, 0
  %4268 = vmatprep.subr.bf16.mxu0 0
  %4269 = vmatpush1.bf16.msra.mxu0 %v4113
  %4270 = vmatprep.subr.bf16.mxu0 0
  %4271 = vmatpush1.bf16.msra.mxu0 0
  %4272 = vmatprep.subr.bf16.mxu0 0
  %4273 = vmatpush1.bf16.msra.mxu0 0
  %4274 = vmatprep.subr.bf16.mxu0 0
  %4275 = vmatpush1.bf16.msra.mxu0 0
  %4276 = vmatprep.subr.bf16.mxu0 0
  %4277 = vmatpush1.bf16.msra.mxu0 0
  %4278 = vmatprep.subr.bf16.mxu0 0
  %4279 = vmatpush1.bf16.msra.mxu0 0
  %4280 = vmatprep.subr.bf16.mxu0 0
  %4281 = vmatpush1.bf16.msra.mxu0 0
  %4282 = vmatprep.subr.bf16.mxu0 0
  %4283 = vmatpush1.bf16.msra.mxu0 0
  %4284 = vmatprep.subr.bf16.mxu0 0
  %4285 = vmatpush1.bf16.msra.mxu0 0
  %4286 = vmatprep.subr.bf16.mxu0 0
  %4287 = vmatpush1.bf16.msra.mxu0 0
  %4288 = vmatprep.subr.bf16.mxu0 0
  %4289 = vmatpush1.bf16.msra.mxu0 0
  %4290 = vmatprep.subr.bf16.mxu0 0
  %4291 = vmatpush1.bf16.msra.mxu0 0
  %4292 = vmatprep.subr.bf16.mxu0 0
  %4293 = vmatpush1.bf16.msra.mxu0 0
  %4294 = vmatprep.subr.bf16.mxu0 0
  %4295 = vmatpush1.bf16.msra.mxu0 0
  %4296 = vmatprep.subr.bf16.mxu0 0
  %4297 = vmatpush1.bf16.msra.mxu0 0
  %4298 = vmatprep.subr.bf16.mxu0 0
  %4299 = vmatpush1.bf16.msra.mxu0 0
  %4300 = vmatprep.mubr.bf16.mxu0 0
  %4301 = vmatmul.mubr.bf16.gmra.mrb[0].mxu0 %v4266
  %v4302 = vpop.f32.mrb[0].mxu0
  %v4303 = vadd.f32 0.0, %v4302
  %v4304 = vpop.f32.mrb[0].mxu0
  %v4305 = vpop.f32.mrb[0].mxu0
  %v4306 = vadd.f32 0.0, %v4305
  %v4307 = vpop.f32.mrb[0].mxu0
  %4308 = vdwg.mxu0
  %v4311 = vunpack.c.l.b16 %v4134
  %v4312 = vunpack.c.l.b16 %v4135
  %v4313 = vpack.c.b16 %v4312, %v4311
  %v4315 = vsel %vm100, %v4313, 0
  %4317 = vmatprep.subr.bf16.mxu0 0
  %4318 = vmatpush1.bf16.msra.mxu0 %v4114
  %4319 = vmatprep.subr.bf16.mxu0 0
  %4320 = vmatpush1.bf16.msra.mxu0 0
  %4321 = vmatprep.subr.bf16.mxu0 0
  %4322 = vmatpush1.bf16.msra.mxu0 0
  %4323 = vmatprep.subr.bf16.mxu0 0
  %4324 = vmatpush1.bf16.msra.mxu0 0
  %4325 = vmatprep.subr.bf16.mxu0 0
  %4326 = vmatpush1.bf16.msra.mxu0 0
  %4327 = vmatprep.subr.bf16.mxu0 0
  %4328 = vmatpush1.bf16.msra.mxu0 0
  %4329 = vmatprep.subr.bf16.mxu0 0
  %4330 = vmatpush1.bf16.msra.mxu0 0
  %4331 = vmatprep.subr.bf16.mxu0 0
  %4332 = vmatpush1.bf16.msra.mxu0 0
  %4333 = vmatprep.subr.bf16.mxu0 0
  %4334 = vmatpush1.bf16.msra.mxu0 0
  %4335 = vmatprep.subr.bf16.mxu0 0
  %4336 = vmatpush1.bf16.msra.mxu0 0
  %4337 = vmatprep.subr.bf16.mxu0 0
  %4338 = vmatpush1.bf16.msra.mxu0 0
  %4339 = vmatprep.subr.bf16.mxu0 0
  %4340 = vmatpush1.bf16.msra.mxu0 0
  %4341 = vmatprep.subr.bf16.mxu0 0
  %4342 = vmatpush1.bf16.msra.mxu0 0
  %4343 = vmatprep.subr.bf16.mxu0 0
  %4344 = vmatpush1.bf16.msra.mxu0 0
  %4345 = vmatprep.subr.bf16.mxu0 0
  %4346 = vmatpush1.bf16.msra.mxu0 0
  %4347 = vmatprep.subr.bf16.mxu0 0
  %4348 = vmatpush1.bf16.msra.mxu0 0
  %4349 = vmatprep.mubr.bf16.mxu0 0
  %4350 = vmatmul.mubr.bf16.gmra.mrb[0].mxu0 %v4315
  %v4351 = vpop.f32.mrb[0].mxu0
  %v4352 = vadd.f32 0.0, %v4351
  %v4353 = vpop.f32.mrb[0].mxu0
  %v4354 = vpop.f32.mrb[0].mxu0
  %v4355 = vadd.f32 0.0, %v4354
  %v4356 = vpop.f32.mrb[0].mxu0
  %4357 = vdwg.mxu0
  %v4360 = vunpack.c.l.b16 %v4136
  %v4361 = vunpack.c.l.b16 %v4137
  %v4362 = vpack.c.b16 %v4361, %v4360
  %v4364 = vsel %vm100, %v4362, 0
  %4366 = vmatprep.subr.bf16.mxu0 0
  %4367 = vmatpush1.bf16.msra.mxu0 %v4115
  %4368 = vmatprep.subr.bf16.mxu0 0
  %4369 = vmatpush1.bf16.msra.mxu0 0
  %4370 = vmatprep.subr.bf16.mxu0 0
  %4371 = vmatpush1.bf16.msra.mxu0 0
  %4372 = vmatprep.subr.bf16.mxu0 0
  %4373 = vmatpush1.bf16.msra.mxu0 0
  %4374 = vmatprep.subr.bf16.mxu0 0
  %4375 = vmatpush1.bf16.msra.mxu0 0
  %4376 = vmatprep.subr.bf16.mxu0 0
  %4377 = vmatpush1.bf16.msra.mxu0 0
  %4378 = vmatprep.subr.bf16.mxu0 0
  %4379 = vmatpush1.bf16.msra.mxu0 0
  %4380 = vmatprep.subr.bf16.mxu0 0
  %4381 = vmatpush1.bf16.msra.mxu0 0
  %4382 = vmatprep.subr.bf16.mxu0 0
  %4383 = vmatpush1.bf16.msra.mxu0 0
  %4384 = vmatprep.subr.bf16.mxu0 0
  %4385 = vmatpush1.bf16.msra.mxu0 0
  %4386 = vmatprep.subr.bf16.mxu0 0
  %4387 = vmatpush1.bf16.msra.mxu0 0
  %4388 = vmatprep.subr.bf16.mxu0 0
  %4389 = vmatpush1.bf16.msra.mxu0 0
  %4390 = vmatprep.subr.bf16.mxu0 0
  %4391 = vmatpush1.bf16.msra.mxu0 0
  %4392 = vmatprep.subr.bf16.mxu0 0
  %4393 = vmatpush1.bf16.msra.mxu0 0
  %4394 = vmatprep.subr.bf16.mxu0 0
  %4395 = vmatpush1.bf16.msra.mxu0 0
  %4396 = vmatprep.subr.bf16.mxu0 0
  %4397 = vmatpush1.bf16.msra.mxu0 0
  %4398 = vmatprep.mubr.bf16.mxu0 0
  %4399 = vmatmul.mubr.bf16.gmra.mrb[0].mxu0 %v4364
  %v4400 = vpop.f32.mrb[0].mxu0
  %v4401 = vadd.f32 0.0, %v4400
  %v4402 = vpop.f32.mrb[0].mxu0
  %v4403 = vpop.f32.mrb[0].mxu0
  %v4404 = vadd.f32 0.0, %v4403
  %v4405 = vpop.f32.mrb[0].mxu0
  %4406 = vdwg.mxu0
  %v4409 = vunpack.c.l.b16 %v4138
  %v4410 = vunpack.c.l.b16 %v4139
  %v4411 = vpack.c.b16 %v4410, %v4409
  %v4413 = vsel %vm100, %v4411, 0
  %4415 = vmatprep.subr.bf16.mxu0 0
  %4416 = vmatpush1.bf16.msra.mxu0 %v4116
  %4417 = vmatprep.subr.bf16.mxu0 0
  %4418 = vmatpush1.bf16.msra.mxu0 0
  %4419 = vmatprep.subr.bf16.mxu0 0
  %4420 = vmatpush1.bf16.msra.mxu0 0
  %4421 = vmatprep.subr.bf16.mxu0 0
  %4422 = vmatpush1.bf16.msra.mxu0 0
  %4423 = vmatprep.subr.bf16.mxu0 0
  %4424 = vmatpush1.bf16.msra.mxu0 0
  %4425 = vmatprep.subr.bf16.mxu0 0
  %4426 = vmatpush1.bf16.msra.mxu0 0
  %4427 = vmatprep.subr.bf16.mxu0 0
  %4428 = vmatpush1.bf16.msra.mxu0 0
  %4429 = vmatprep.subr.bf16.mxu0 0
  %4430 = vmatpush1.bf16.msra.mxu0 0
  %4431 = vmatprep.subr.bf16.mxu0 0
  %4432 = vmatpush1.bf16.msra.mxu0 0
  %4433 = vmatprep.subr.bf16.mxu0 0
  %4434 = vmatpush1.bf16.msra.mxu0 0
  %4435 = vmatprep.subr.bf16.mxu0 0
  %4436 = vmatpush1.bf16.msra.mxu0 0
  %4437 = vmatprep.subr.bf16.mxu0 0
  %4438 = vmatpush1.bf16.msra.mxu0 0
  %4439 = vmatprep.subr.bf16.mxu0 0
  %4440 = vmatpush1.bf16.msra.mxu0 0
  %4441 = vmatprep.subr.bf16.mxu0 0
  %4442 = vmatpush1.bf16.msra.mxu0 0
  %4443 = vmatprep.subr.bf16.mxu0 0
  %4444 = vmatpush1.bf16.msra.mxu0 0
  %4445 = vmatprep.subr.bf16.mxu0 0
  %4446 = vmatpush1.bf16.msra.mxu0 0
  %4447 = vmatprep.mubr.bf16.mxu0 0
  %4448 = vmatmul.mubr.bf16.gmra.mrb[0].mxu0 %v4413
  %v4449 = vpop.f32.mrb[0].mxu0
  %v4450 = vadd.f32 0.0, %v4449
  %v4451 = vpop.f32.mrb[0].mxu0
  %v4452 = vpop.f32.mrb[0].mxu0
  %v4453 = vadd.f32 0.0, %v4452
  %v4454 = vpop.f32.mrb[0].mxu0
  %4455 = vdwg.mxu0
  %v4458 = vunpack.c.l.b16 %v4140
  %v4459 = vunpack.c.l.b16 %v4141
  %v4460 = vpack.c.b16 %v4459, %v4458
  %v4462 = vsel %vm100, %v4460, 0
  %4464 = vmatprep.subr.bf16.mxu0 0
  %4465 = vmatpush1.bf16.msra.mxu0 %v4117
  %4466 = vmatprep.subr.bf16.mxu0 0
  %4467 = vmatpush1.bf16.msra.mxu0 0
  %4468 = vmatprep.subr.bf16.mxu0 0
  %4469 = vmatpush1.bf16.msra.mxu0 0
  %4470 = vmatprep.subr.bf16.mxu0 0
  %4471 = vmatpush1.bf16.msra.mxu0 0
  %4472 = vmatprep.subr.bf16.mxu0 0
  %4473 = vmatpush1.bf16.msra.mxu0 0
  %4474 = vmatprep.subr.bf16.mxu0 0
  %4475 = vmatpush1.bf16.msra.mxu0 0
  %4476 = vmatprep.subr.bf16.mxu0 0
  %4477 = vmatpush1.bf16.msra.mxu0 0
  %4478 = vmatprep.subr.bf16.mxu0 0
  %4479 = vmatpush1.bf16.msra.mxu0 0
  %4480 = vmatprep.subr.bf16.mxu0 0
  %4481 = vmatpush1.bf16.msra.mxu0 0
  %4482 = vmatprep.subr.bf16.mxu0 0
  %4483 = vmatpush1.bf16.msra.mxu0 0
  %4484 = vmatprep.subr.bf16.mxu0 0
  %4485 = vmatpush1.bf16.msra.mxu0 0
  %4486 = vmatprep.subr.bf16.mxu0 0
  %4487 = vmatpush1.bf16.msra.mxu0 0
  %4488 = vmatprep.subr.bf16.mxu0 0
  %4489 = vmatpush1.bf16.msra.mxu0 0
  %4490 = vmatprep.subr.bf16.mxu0 0
  %4491 = vmatpush1.bf16.msra.mxu0 0
  %4492 = vmatprep.subr.bf16.mxu0 0
  %4493 = vmatpush1.bf16.msra.mxu0 0
  %4494 = vmatprep.subr.bf16.mxu0 0
  %4495 = vmatpush1.bf16.msra.mxu0 0
  %4496 = vmatprep.mubr.bf16.mxu0 0
  %4497 = vmatmul.mubr.bf16.gmra.mrb[0].mxu0 %v4462
  %v4498 = vpop.f32.mrb[0].mxu0
  %v4499 = vadd.f32 0.0, %v4498
  %v4500 = vpop.f32.mrb[0].mxu0
  %v4501 = vpop.f32.mrb[0].mxu0
  %v4502 = vadd.f32 0.0, %v4501
  %v4503 = vpop.f32.mrb[0].mxu0
  %4504 = vdwg.mxu0
  %v4507 = vunpack.c.l.b16 %v4142
  %v4508 = vunpack.c.l.b16 %v4143
  %v4509 = vpack.c.b16 %v4508, %v4507
  %v4511 = vsel %vm100, %v4509, 0
  %4513 = vmatprep.subr.bf16.mxu0 0
  %4514 = vmatpush1.bf16.msra.mxu0 %v4118
  %4515 = vmatprep.subr.bf16.mxu0 0
  %4516 = vmatpush1.bf16.msra.mxu0 0
  %4517 = vmatprep.subr.bf16.mxu0 0
  %4518 = vmatpush1.bf16.msra.mxu0 0
  %4519 = vmatprep.subr.bf16.mxu0 0
  %4520 = vmatpush1.bf16.msra.mxu0 0
  %4521 = vmatprep.subr.bf16.mxu0 0
  %4522 = vmatpush1.bf16.msra.mxu0 0
  %4523 = vmatprep.subr.bf16.mxu0 0
  %4524 = vmatpush1.bf16.msra.mxu0 0
  %4525 = vmatprep.subr.bf16.mxu0 0
  %4526 = vmatpush1.bf16.msra.mxu0 0
  %4527 = vmatprep.subr.bf16.mxu0 0
  %4528 = vmatpush1.bf16.msra.mxu0 0
  %4529 = vmatprep.subr.bf16.mxu0 0
  %4530 = vmatpush1.bf16.msra.mxu0 0
  %4531 = vmatprep.subr.bf16.mxu0 0
  %4532 = vmatpush1.bf16.msra.mxu0 0
  %4533 = vmatprep.subr.bf16.mxu0 0
  %4534 = vmatpush1.bf16.msra.mxu0 0
  %4535 = vmatprep.subr.bf16.mxu0 0
  %4536 = vmatpush1.bf16.msra.mxu0 0
  %4537 = vmatprep.subr.bf16.mxu0 0
  %4538 = vmatpush1.bf16.msra.mxu0 0
  %4539 = vmatprep.subr.bf16.mxu0 0
  %4540 = vmatpush1.bf16.msra.mxu0 0
  %4541 = vmatprep.subr.bf16.mxu0 0
  %4542 = vmatpush1.bf16.msra.mxu0 0
  %4543 = vmatprep.subr.bf16.mxu0 0
  %4544 = vmatpush1.bf16.msra.mxu0 0
  %4545 = vmatprep.mubr.bf16.mxu0 0
  %4546 = vmatmul.mubr.bf16.gmra.mrb[0].mxu0 %v4511
  %v4547 = vpop.f32.mrb[0].mxu0
  %v4548 = vadd.f32 0.0, %v4547
  %v4549 = vpop.f32.mrb[0].mxu0
  %v4550 = vpop.f32.mrb[0].mxu0
  %v4551 = vadd.f32 0.0, %v4550
  %v4552 = vpop.f32.mrb[0].mxu0
  %4553 = vdwg.mxu0
  %v4556 = vunpack.c.l.b16 %v4144
  %v4557 = vunpack.c.l.b16 %v4145
  %v4558 = vpack.c.b16 %v4557, %v4556
  %v4560 = vsel %vm100, %v4558, 0
  %4562 = vmatprep.subr.bf16.mxu0 0
  %4563 = vmatpush1.bf16.msra.mxu0 %v4119
  %4564 = vmatprep.subr.bf16.mxu0 0
  %4565 = vmatpush1.bf16.msra.mxu0 0
  %4566 = vmatprep.subr.bf16.mxu0 0
  %4567 = vmatpush1.bf16.msra.mxu0 0
  %4568 = vmatprep.subr.bf16.mxu0 0
  %4569 = vmatpush1.bf16.msra.mxu0 0
  %4570 = vmatprep.subr.bf16.mxu0 0
  %4571 = vmatpush1.bf16.msra.mxu0 0
  %4572 = vmatprep.subr.bf16.mxu0 0
  %4573 = vmatpush1.bf16.msra.mxu0 0
  %4574 = vmatprep.subr.bf16.mxu0 0
  %4575 = vmatpush1.bf16.msra.mxu0 0
  %4576 = vmatprep.subr.bf16.mxu0 0
  %4577 = vmatpush1.bf16.msra.mxu0 0
  %4578 = vmatprep.subr.bf16.mxu0 0
  %4579 = vmatpush1.bf16.msra.mxu0 0
  %4580 = vmatprep.subr.bf16.mxu0 0
  %4581 = vmatpush1.bf16.msra.mxu0 0
  %4582 = vmatprep.subr.bf16.mxu0 0
  %4583 = vmatpush1.bf16.msra.mxu0 0
  %4584 = vmatprep.subr.bf16.mxu0 0
  %4585 = vmatpush1.bf16.msra.mxu0 0
  %4586 = vmatprep.subr.bf16.mxu0 0
  %4587 = vmatpush1.bf16.msra.mxu0 0
  %4588 = vmatprep.subr.bf16.mxu0 0
  %4589 = vmatpush1.bf16.msra.mxu0 0
  %4590 = vmatprep.subr.bf16.mxu0 0
  %4591 = vmatpush1.bf16.msra.mxu0 0
  %4592 = vmatprep.subr.bf16.mxu0 0
  %4593 = vmatpush1.bf16.msra.mxu0 0
  %4594 = vmatprep.mubr.bf16.mxu0 0
  %4595 = vmatmul.mubr.bf16.gmra.mrb[0].mxu0 %v4560
  %v4596 = vpop.f32.mrb[0].mxu0
  %v4597 = vadd.f32 0.0, %v4596
  %v4598 = vpop.f32.mrb[0].mxu0
  %v4599 = vpop.f32.mrb[0].mxu0
  %v4600 = vadd.f32 0.0, %v4599
  %v4601 = vpop.f32.mrb[0].mxu0
  %4602 = vdwg.mxu0
  %v4605 = vunpack.c.l.b16 %v4146
  %v4606 = vunpack.c.l.b16 %v4147
  %v4607 = vpack.c.b16 %v4606, %v4605
  %v4609 = vsel %vm100, %v4607, 0
  %4611 = vmatprep.subr.bf16.mxu0 0
  %4612 = vmatpush1.bf16.msra.mxu0 %v4120
  %4613 = vmatprep.subr.bf16.mxu0 0
  %4614 = vmatpush1.bf16.msra.mxu0 0
  %4615 = vmatprep.subr.bf16.mxu0 0
  %4616 = vmatpush1.bf16.msra.mxu0 0
  %4617 = vmatprep.subr.bf16.mxu0 0
  %4618 = vmatpush1.bf16.msra.mxu0 0
  %4619 = vmatprep.subr.bf16.mxu0 0
  %4620 = vmatpush1.bf16.msra.mxu0 0
  %4621 = vmatprep.subr.bf16.mxu0 0
  %4622 = vmatpush1.bf16.msra.mxu0 0
  %4623 = vmatprep.subr.bf16.mxu0 0
  %4624 = vmatpush1.bf16.msra.mxu0 0
  %4625 = vmatprep.subr.bf16.mxu0 0
  %4626 = vmatpush1.bf16.msra.mxu0 0
  %4627 = vmatprep.subr.bf16.mxu0 0
  %4628 = vmatpush1.bf16.msra.mxu0 0
  %4629 = vmatprep.subr.bf16.mxu0 0
  %4630 = vmatpush1.bf16.msra.mxu0 0
  %4631 = vmatprep.subr.bf16.mxu0 0
  %4632 = vmatpush1.bf16.msra.mxu0 0
  %4633 = vmatprep.subr.bf16.mxu0 0
  %4634 = vmatpush1.bf16.msra.mxu0 0
  %4635 = vmatprep.subr.bf16.mxu0 0
  %4636 = vmatpush1.bf16.msra.mxu0 0
  %4637 = vmatprep.subr.bf16.mxu0 0
  %4638 = vmatpush1.bf16.msra.mxu0 0
  %4639 = vmatprep.subr.bf16.mxu0 0
  %4640 = vmatpush1.bf16.msra.mxu0 0
  %4641 = vmatprep.subr.bf16.mxu0 0
  %4642 = vmatpush1.bf16.msra.mxu0 0
  %4643 = vmatprep.mubr.bf16.mxu0 0
  %4644 = vmatmul.mubr.bf16.gmra.mrb[0].mxu0 %v4609
  %v4645 = vpop.f32.mrb[0].mxu0
  %v4646 = vadd.f32 0.0, %v4645
  %v4647 = vpop.f32.mrb[0].mxu0
  %v4648 = vpop.f32.mrb[0].mxu0
  %v4649 = vadd.f32 0.0, %v4648
  %v4650 = vpop.f32.mrb[0].mxu0
  %4651 = vdwg.mxu0
  %v4654 = vunpack.c.l.b16 %v4148
  %v4655 = vunpack.c.l.b16 %v4149
  %v4656 = vpack.c.b16 %v4655, %v4654
  %v4658 = vsel %vm100, %v4656, 0
  %4660 = vmatprep.subr.bf16.mxu0 0
  %4661 = vmatpush1.bf16.msra.mxu0 %v4121
  %4662 = vmatprep.subr.bf16.mxu0 0
  %4663 = vmatpush1.bf16.msra.mxu0 0
  %4664 = vmatprep.subr.bf16.mxu0 0
  %4665 = vmatpush1.bf16.msra.mxu0 0
  %4666 = vmatprep.subr.bf16.mxu0 0
  %4667 = vmatpush1.bf16.msra.mxu0 0
  %4668 = vmatprep.subr.bf16.mxu0 0
  %4669 = vmatpush1.bf16.msra.mxu0 0
  %4670 = vmatprep.subr.bf16.mxu0 0
  %4671 = vmatpush1.bf16.msra.mxu0 0
  %4672 = vmatprep.subr.bf16.mxu0 0
  %4673 = vmatpush1.bf16.msra.mxu0 0
  %4674 = vmatprep.subr.bf16.mxu0 0
  %4675 = vmatpush1.bf16.msra.mxu0 0
  %4676 = vmatprep.subr.bf16.mxu0 0
  %4677 = vmatpush1.bf16.msra.mxu0 0
  %4678 = vmatprep.subr.bf16.mxu0 0
  %4679 = vmatpush1.bf16.msra.mxu0 0
  %4680 = vmatprep.subr.bf16.mxu0 0
  %4681 = vmatpush1.bf16.msra.mxu0 0
  %4682 = vmatprep.subr.bf16.mxu0 0
  %4683 = vmatpush1.bf16.msra.mxu0 0
  %4684 = vmatprep.subr.bf16.mxu0 0
  %4685 = vmatpush1.bf16.msra.mxu0 0
  %4686 = vmatprep.subr.bf16.mxu0 0
  %4687 = vmatpush1.bf16.msra.mxu0 0
  %4688 = vmatprep.subr.bf16.mxu0 0
  %4689 = vmatpush1.bf16.msra.mxu0 0
  %4690 = vmatprep.subr.bf16.mxu0 0
  %4691 = vmatpush1.bf16.msra.mxu0 0
  %4692 = vmatprep.mubr.bf16.mxu0 0
  %4693 = vmatmul.mubr.bf16.gmra.mrb[0].mxu0 %v4658
  %v4694 = vpop.f32.mrb[0].mxu0
  %v4695 = vadd.f32 0.0, %v4694
  %v4696 = vpop.f32.mrb[0].mxu0
  %v4697 = vpop.f32.mrb[0].mxu0
  %v4698 = vadd.f32 0.0, %v4697
  %v4699 = vpop.f32.mrb[0].mxu0
  %4700 = vdwg.mxu0
  %v4703 = vunpack.c.l.b16 %v4150
  %v4704 = vunpack.c.l.b16 %v4151
  %v4705 = vpack.c.b16 %v4704, %v4703
  %v4707 = vsel %vm100, %v4705, 0
  %4709 = vmatprep.subr.bf16.mxu0 0
  %4710 = vmatpush1.bf16.msra.mxu0 %v4122
  %4711 = vmatprep.subr.bf16.mxu0 0
  %4712 = vmatpush1.bf16.msra.mxu0 0
  %4713 = vmatprep.subr.bf16.mxu0 0
  %4714 = vmatpush1.bf16.msra.mxu0 0
  %4715 = vmatprep.subr.bf16.mxu0 0
  %4716 = vmatpush1.bf16.msra.mxu0 0
  %4717 = vmatprep.subr.bf16.mxu0 0
  %4718 = vmatpush1.bf16.msra.mxu0 0
  %4719 = vmatprep.subr.bf16.mxu0 0
  %4720 = vmatpush1.bf16.msra.mxu0 0
  %4721 = vmatprep.subr.bf16.mxu0 0
  %4722 = vmatpush1.bf16.msra.mxu0 0
  %4723 = vmatprep.subr.bf16.mxu0 0
  %4724 = vmatpush1.bf16.msra.mxu0 0
  %4725 = vmatprep.subr.bf16.mxu0 0
  %4726 = vmatpush1.bf16.msra.mxu0 0
  %4727 = vmatprep.subr.bf16.mxu0 0
  %4728 = vmatpush1.bf16.msra.mxu0 0
  %4729 = vmatprep.subr.bf16.mxu0 0
  %4730 = vmatpush1.bf16.msra.mxu0 0
  %4731 = vmatprep.subr.bf16.mxu0 0
  %4732 = vmatpush1.bf16.msra.mxu0 0
  %4733 = vmatprep.subr.bf16.mxu0 0
  %4734 = vmatpush1.bf16.msra.mxu0 0
  %4735 = vmatprep.subr.bf16.mxu0 0
  %4736 = vmatpush1.bf16.msra.mxu0 0
  %4737 = vmatprep.subr.bf16.mxu0 0
  %4738 = vmatpush1.bf16.msra.mxu0 0
  %4739 = vmatprep.subr.bf16.mxu0 0
  %4740 = vmatpush1.bf16.msra.mxu0 0
  %4741 = vmatprep.mubr.bf16.mxu0 0
  %4742 = vmatmul.mubr.bf16.gmra.mrb[0].mxu0 %v4707
  %v4743 = vpop.f32.mrb[0].mxu0
  %v4744 = vadd.f32 0.0, %v4743
  %v4745 = vpop.f32.mrb[0].mxu0
  %v4746 = vpop.f32.mrb[0].mxu0
  %v4747 = vadd.f32 0.0, %v4746
  %v4748 = vpop.f32.mrb[0].mxu0
  %4749 = vdwg.mxu0
  %v4752 = vunpack.c.l.b16 %v4152
  %v4753 = vunpack.c.l.b16 %v4153
  %v4754 = vpack.c.b16 %v4753, %v4752
  %v4756 = vsel %vm100, %v4754, 0
  %4758 = vmatprep.subr.bf16.mxu0 0
  %4759 = vmatpush1.bf16.msra.mxu0 %v4123
  %4760 = vmatprep.subr.bf16.mxu0 0
  %4761 = vmatpush1.bf16.msra.mxu0 0
  %4762 = vmatprep.subr.bf16.mxu0 0
  %4763 = vmatpush1.bf16.msra.mxu0 0
  %4764 = vmatprep.subr.bf16.mxu0 0
  %4765 = vmatpush1.bf16.msra.mxu0 0
  %4766 = vmatprep.subr.bf16.mxu0 0
  %4767 = vmatpush1.bf16.msra.mxu0 0
  %4768 = vmatprep.subr.bf16.mxu0 0
  %4769 = vmatpush1.bf16.msra.mxu0 0
  %4770 = vmatprep.subr.bf16.mxu0 0
  %4771 = vmatpush1.bf16.msra.mxu0 0
  %4772 = vmatprep.subr.bf16.mxu0 0
  %4773 = vmatpush1.bf16.msra.mxu0 0
  %4774 = vmatprep.subr.bf16.mxu0 0
  %4775 = vmatpush1.bf16.msra.mxu0 0
  %4776 = vmatprep.subr.bf16.mxu0 0
  %4777 = vmatpush1.bf16.msra.mxu0 0
  %4778 = vmatprep.subr.bf16.mxu0 0
  %4779 = vmatpush1.bf16.msra.mxu0 0
  %4780 = vmatprep.subr.bf16.mxu0 0
  %4781 = vmatpush1.bf16.msra.mxu0 0
  %4782 = vmatprep.subr.bf16.mxu0 0
  %4783 = vmatpush1.bf16.msra.mxu0 0
  %4784 = vmatprep.subr.bf16.mxu0 0
  %4785 = vmatpush1.bf16.msra.mxu0 0
  %4786 = vmatprep.subr.bf16.mxu0 0
  %4787 = vmatpush1.bf16.msra.mxu0 0
  %4788 = vmatprep.subr.bf16.mxu0 0
  %4789 = vmatpush1.bf16.msra.mxu0 0
  %4790 = vmatprep.mubr.bf16.mxu0 0
  %4791 = vmatmul.mubr.bf16.gmra.mrb[0].mxu0 %v4756
  %v4792 = vpop.f32.mrb[0].mxu0
  %v4793 = vadd.f32 0.0, %v4792
  %v4794 = vpop.f32.mrb[0].mxu0
  %v4795 = vpop.f32.mrb[0].mxu0
  %v4796 = vadd.f32 0.0, %v4795
  %v4797 = vpop.f32.mrb[0].mxu0
  %4798 = vdwg.mxu0
  %v4801 = vunpack.c.l.b16 %v4154
  %v4802 = vunpack.c.l.b16 %v4155
  %v4803 = vpack.c.b16 %v4802, %v4801
  %v4805 = vsel %vm100, %v4803, 0
  %4807 = vmatprep.subr.bf16.mxu0 0
  %4808 = vmatpush1.bf16.msra.mxu0 %v4124
  %4809 = vmatprep.subr.bf16.mxu0 0
  %4810 = vmatpush1.bf16.msra.mxu0 0
  %4811 = vmatprep.subr.bf16.mxu0 0
  %4812 = vmatpush1.bf16.msra.mxu0 0
  %4813 = vmatprep.subr.bf16.mxu0 0
  %4814 = vmatpush1.bf16.msra.mxu0 0
  %4815 = vmatprep.subr.bf16.mxu0 0
  %4816 = vmatpush1.bf16.msra.mxu0 0
  %4817 = vmatprep.subr.bf16.mxu0 0
  %4818 = vmatpush1.bf16.msra.mxu0 0
  %4819 = vmatprep.subr.bf16.mxu0 0
  %4820 = vmatpush1.bf16.msra.mxu0 0
  %4821 = vmatprep.subr.bf16.mxu0 0
  %4822 = vmatpush1.bf16.msra.mxu0 0
  %4823 = vmatprep.subr.bf16.mxu0 0
  %4824 = vmatpush1.bf16.msra.mxu0 0
  %4825 = vmatprep.subr.bf16.mxu0 0
  %4826 = vmatpush1.bf16.msra.mxu0 0
  %4827 = vmatprep.subr.bf16.mxu0 0
  %4828 = vmatpush1.bf16.msra.mxu0 0
  %4829 = vmatprep.subr.bf16.mxu0 0
  %4830 = vmatpush1.bf16.msra.mxu0 0
  %4831 = vmatprep.subr.bf16.mxu0 0
  %4832 = vmatpush1.bf16.msra.mxu0 0
  %4833 = vmatprep.subr.bf16.mxu0 0
  %4834 = vmatpush1.bf16.msra.mxu0 0
  %4835 = vmatprep.subr.bf16.mxu0 0
  %4836 = vmatpush1.bf16.msra.mxu0 0
  %4837 = vmatprep.subr.bf16.mxu0 0
  %4838 = vmatpush1.bf16.msra.mxu0 0
  %4839 = vmatprep.mubr.bf16.mxu0 0
  %4840 = vmatmul.mubr.bf16.gmra.mrb[0].mxu0 %v4805
  %v4841 = vpop.f32.mrb[0].mxu0
  %v4842 = vadd.f32 0.0, %v4841
  %v4843 = vpop.f32.mrb[0].mxu0
  %v4844 = vpop.f32.mrb[0].mxu0
  %v4845 = vadd.f32 0.0, %v4844
  %v4846 = vpop.f32.mrb[0].mxu0
  %4847 = vdwg.mxu0
  %v4850 = vunpack.c.l.b16 %v4156
  %v4851 = vunpack.c.l.b16 %v4157
  %v4852 = vpack.c.b16 %v4851, %v4850
  %v4854 = vsel %vm100, %v4852, 0
  %4856 = vmatprep.subr.bf16.mxu0 0
  %4857 = vmatpush1.bf16.msra.mxu0 %v4125
  %4858 = vmatprep.subr.bf16.mxu0 0
  %4859 = vmatpush1.bf16.msra.mxu0 0
  %4860 = vmatprep.subr.bf16.mxu0 0
  %4861 = vmatpush1.bf16.msra.mxu0 0
  %4862 = vmatprep.subr.bf16.mxu0 0
  %4863 = vmatpush1.bf16.msra.mxu0 0
  %4864 = vmatprep.subr.bf16.mxu0 0
  %4865 = vmatpush1.bf16.msra.mxu0 0
  %4866 = vmatprep.subr.bf16.mxu0 0
  %4867 = vmatpush1.bf16.msra.mxu0 0
  %4868 = vmatprep.subr.bf16.mxu0 0
  %4869 = vmatpush1.bf16.msra.mxu0 0
  %4870 = vmatprep.subr.bf16.mxu0 0
  %4871 = vmatpush1.bf16.msra.mxu0 0
  %4872 = vmatprep.subr.bf16.mxu0 0
  %4873 = vmatpush1.bf16.msra.mxu0 0
  %4874 = vmatprep.subr.bf16.mxu0 0
  %4875 = vmatpush1.bf16.msra.mxu0 0
  %4876 = vmatprep.subr.bf16.mxu0 0
  %4877 = vmatpush1.bf16.msra.mxu0 0
  %4878 = vmatprep.subr.bf16.mxu0 0
  %4879 = vmatpush1.bf16.msra.mxu0 0
  %4880 = vmatprep.subr.bf16.mxu0 0
  %4881 = vmatpush1.bf16.msra.mxu0 0
  %4882 = vmatprep.subr.bf16.mxu0 0
  %4883 = vmatpush1.bf16.msra.mxu0 0
  %4884 = vmatprep.subr.bf16.mxu0 0
  %4885 = vmatpush1.bf16.msra.mxu0 0
  %4886 = vmatprep.subr.bf16.mxu0 0
  %4887 = vmatpush1.bf16.msra.mxu0 0
  %4888 = vmatprep.mubr.bf16.mxu0 0
  %4889 = vmatmul.mubr.bf16.gmra.mrb[0].mxu0 %v4854
  %v4890 = vpop.f32.mrb[0].mxu0
  %v4891 = vadd.f32 0.0, %v4890
  %v4892 = vpop.f32.mrb[0].mxu0
  %v4893 = vpop.f32.mrb[0].mxu0
  %v4894 = vadd.f32 0.0, %v4893
  %v4895 = vpop.f32.mrb[0].mxu0
  %4896 = vdwg.mxu0
  %v4899 = vunpack.c.l.b16 %v4158
  %v4900 = vunpack.c.l.b16 %v4159
  %v4901 = vpack.c.b16 %v4900, %v4899
  %v4903 = vsel %vm100, %v4901, 0
  %4905 = vmatprep.subr.bf16.mxu0 0
  %4906 = vmatpush1.bf16.msra.mxu0 %v4126
  %4907 = vmatprep.subr.bf16.mxu0 0
  %4908 = vmatpush1.bf16.msra.mxu0 0
  %4909 = vmatprep.subr.bf16.mxu0 0
  %4910 = vmatpush1.bf16.msra.mxu0 0
  %4911 = vmatprep.subr.bf16.mxu0 0
  %4912 = vmatpush1.bf16.msra.mxu0 0
  %4913 = vmatprep.subr.bf16.mxu0 0
  %4914 = vmatpush1.bf16.msra.mxu0 0
  %4915 = vmatprep.subr.bf16.mxu0 0
  %4916 = vmatpush1.bf16.msra.mxu0 0
  %4917 = vmatprep.subr.bf16.mxu0 0
  %4918 = vmatpush1.bf16.msra.mxu0 0
  %4919 = vmatprep.subr.bf16.mxu0 0
  %4920 = vmatpush1.bf16.msra.mxu0 0
  %4921 = vmatprep.subr.bf16.mxu0 0
  %4922 = vmatpush1.bf16.msra.mxu0 0
  %4923 = vmatprep.subr.bf16.mxu0 0
  %4924 = vmatpush1.bf16.msra.mxu0 0
  %4925 = vmatprep.subr.bf16.mxu0 0
  %4926 = vmatpush1.bf16.msra.mxu0 0
  %4927 = vmatprep.subr.bf16.mxu0 0
  %4928 = vmatpush1.bf16.msra.mxu0 0
  %4929 = vmatprep.subr.bf16.mxu0 0
  %4930 = vmatpush1.bf16.msra.mxu0 0
  %4931 = vmatprep.subr.bf16.mxu0 0
  %4932 = vmatpush1.bf16.msra.mxu0 0
  %4933 = vmatprep.subr.bf16.mxu0 0
  %4934 = vmatpush1.bf16.msra.mxu0 0
  %4935 = vmatprep.subr.bf16.mxu0 0
  %4936 = vmatpush1.bf16.msra.mxu0 0
  %4937 = vmatprep.mubr.bf16.mxu0 0
  %4938 = vmatmul.mubr.bf16.gmra.mrb[0].mxu0 %v4903
  %v4939 = vpop.f32.mrb[0].mxu0
  %v4940 = vadd.f32 0.0, %v4939
  %v4941 = vpop.f32.mrb[0].mxu0
  %v4942 = vpop.f32.mrb[0].mxu0
  %v4943 = vadd.f32 0.0, %v4942
  %v4944 = vpop.f32.mrb[0].mxu0
  %4945 = vdwg.mxu0
  %v4948 = vunpack.c.l.b16 %v4160
  %v4949 = vunpack.c.l.b16 %v4161
  %v4950 = vpack.c.b16 %v4949, %v4948
  %v4952 = vsel %vm100, %v4950, 0
  %4954 = vmatprep.subr.bf16.mxu0 0
  %4955 = vmatpush1.bf16.msra.mxu0 %v4127
  %4956 = vmatprep.subr.bf16.mxu0 0
  %4957 = vmatpush1.bf16.msra.mxu0 0
  %4958 = vmatprep.subr.bf16.mxu0 0
  %4959 = vmatpush1.bf16.msra.mxu0 0
  %4960 = vmatprep.subr.bf16.mxu0 0
  %4961 = vmatpush1.bf16.msra.mxu0 0
  %4962 = vmatprep.subr.bf16.mxu0 0
  %4963 = vmatpush1.bf16.msra.mxu0 0
  %4964 = vmatprep.subr.bf16.mxu0 0
  %4965 = vmatpush1.bf16.msra.mxu0 0
  %4966 = vmatprep.subr.bf16.mxu0 0
  %4967 = vmatpush1.bf16.msra.mxu0 0
  %4968 = vmatprep.subr.bf16.mxu0 0
  %4969 = vmatpush1.bf16.msra.mxu0 0
  %4970 = vmatprep.subr.bf16.mxu0 0
  %4971 = vmatpush1.bf16.msra.mxu0 0
  %4972 = vmatprep.subr.bf16.mxu0 0
  %4973 = vmatpush1.bf16.msra.mxu0 0
  %4974 = vmatprep.subr.bf16.mxu0 0
  %4975 = vmatpush1.bf16.msra.mxu0 0
  %4976 = vmatprep.subr.bf16.mxu0 0
  %4977 = vmatpush1.bf16.msra.mxu0 0
  %4978 = vmatprep.subr.bf16.mxu0 0
  %4979 = vmatpush1.bf16.msra.mxu0 0
  %4980 = vmatprep.subr.bf16.mxu0 0
  %4981 = vmatpush1.bf16.msra.mxu0 0
  %4982 = vmatprep.subr.bf16.mxu0 0
  %4983 = vmatpush1.bf16.msra.mxu0 0
  %4984 = vmatprep.subr.bf16.mxu0 0
  %4985 = vmatpush1.bf16.msra.mxu0 0
  %4986 = vmatprep.mubr.bf16.mxu0 0
  %4987 = vmatmul.mubr.bf16.gmra.mrb[0].mxu0 %v4952
  %v4988 = vpop.f32.mrb[0].mxu0
  %v4989 = vadd.f32 0.0, %v4988
  %v4990 = vpop.f32.mrb[0].mxu0
  %v4991 = vpop.f32.mrb[0].mxu0
  %v4992 = vadd.f32 0.0, %v4991
  %v4993 = vpop.f32.mrb[0].mxu0
  %4994 = vdwg.mxu0
  %v4995 = vpack.c.bf16 %v4208, %v4205
  %v4996 = vpack.c.bf16 %v4257, %v4254
  %v4997 = vpack.c.bf16 %v4306, %v4303
  %v4998 = vpack.c.bf16 %v4355, %v4352
  %v4999 = vpack.c.bf16 %v4404, %v4401
  %v5000 = vpack.c.bf16 %v4453, %v4450
  %v5001 = vpack.c.bf16 %v4502, %v4499
  %v5002 = vpack.c.bf16 %v4551, %v4548
  %v5003 = vpack.c.bf16 %v4600, %v4597
  %v5004 = vpack.c.bf16 %v4649, %v4646
  %v5005 = vpack.c.bf16 %v4698, %v4695
  %v5006 = vpack.c.bf16 %v4747, %v4744
  %v5007 = vpack.c.bf16 %v4796, %v4793
  %v5008 = vpack.c.bf16 %v4845, %v4842
  %v5009 = vpack.c.bf16 %v4894, %v4891
  %v5010 = vpack.c.bf16 %v4943, %v4940
  %v5011 = vpack.c.bf16 %v4992, %v4989
  %v5029 = vunpack.c.l.b16 %v4995
  %v5030 = vunpack.c.h.b16 %v4995
  %v5031 = vunpack.c.l.b16 %v4996
  %v5032 = vunpack.c.h.b16 %v4996
  %v5033 = vunpack.c.l.b16 %v4997
  %v5034 = vunpack.c.h.b16 %v4997
  %v5035 = vunpack.c.l.b16 %v4998
  %v5036 = vunpack.c.h.b16 %v4998
  %v5037 = vunpack.c.l.b16 %v4999
  %v5038 = vunpack.c.h.b16 %v4999
  %v5039 = vunpack.c.l.b16 %v5000
  %v5040 = vunpack.c.h.b16 %v5000
  %v5041 = vunpack.c.l.b16 %v5001
  %v5042 = vunpack.c.h.b16 %v5001
  %v5043 = vunpack.c.l.b16 %v5002
  %v5044 = vunpack.c.h.b16 %v5002
  %v5045 = vunpack.c.l.b16 %v5003
  %v5046 = vunpack.c.h.b16 %v5003
  %v5047 = vunpack.c.l.b16 %v5004
  %v5048 = vunpack.c.h.b16 %v5004
  %v5049 = vunpack.c.l.b16 %v5005
  %v5050 = vunpack.c.h.b16 %v5005
  %v5051 = vunpack.c.l.b16 %v5006
  %v5052 = vunpack.c.h.b16 %v5006
  %v5053 = vunpack.c.l.b16 %v5007
  %v5054 = vunpack.c.h.b16 %v5007
  %v5055 = vunpack.c.l.b16 %v5008
  %v5056 = vunpack.c.h.b16 %v5008
  %v5057 = vunpack.c.l.b16 %v5009
  %v5058 = vunpack.c.h.b16 %v5009
  %v5059 = vunpack.c.l.b16 %v5010
  %v5060 = vunpack.c.h.b16 %v5010
  %v5061 = vunpack.c.l.b16 %v5011
  %v5062 = vunpack.c.h.b16 %v5011
  %v5063 = vpack.c.b16 %v5029, %v5029
  %v5064 = vpack.c.b16 %v5030, %v5030
  %v5065 = vpack.c.b16 %v5031, %v5031
  %v5066 = vpack.c.b16 %v5032, %v5032
  %v5067 = vpack.c.b16 %v5033, %v5033
  %v5068 = vpack.c.b16 %v5034, %v5034
  %v5069 = vpack.c.b16 %v5035, %v5035
  %v5070 = vpack.c.b16 %v5036, %v5036
  %v5071 = vpack.c.b16 %v5037, %v5037
  %v5072 = vpack.c.b16 %v5038, %v5038
  %v5073 = vpack.c.b16 %v5039, %v5039
  %v5074 = vpack.c.b16 %v5040, %v5040
  %v5075 = vpack.c.b16 %v5041, %v5041
  %v5076 = vpack.c.b16 %v5042, %v5042
  %v5077 = vpack.c.b16 %v5043, %v5043
  %v5078 = vpack.c.b16 %v5044, %v5044
  %v5079 = vpack.c.b16 %v5045, %v5045
  %v5080 = vpack.c.b16 %v5046, %v5046
  %v5081 = vpack.c.b16 %v5047, %v5047
  %v5082 = vpack.c.b16 %v5048, %v5048
  %v5083 = vpack.c.b16 %v5049, %v5049
  %v5084 = vpack.c.b16 %v5050, %v5050
  %v5085 = vpack.c.b16 %v5051, %v5051
  %v5086 = vpack.c.b16 %v5052, %v5052
  %v5087 = vpack.c.b16 %v5053, %v5053
  %v5088 = vpack.c.b16 %v5054, %v5054
  %v5089 = vpack.c.b16 %v5055, %v5055
  %v5090 = vpack.c.b16 %v5056, %v5056
  %v5091 = vpack.c.b16 %v5057, %v5057
  %v5092 = vpack.c.b16 %v5058, %v5058
  %v5093 = vpack.c.b16 %v5059, %v5059
  %v5094 = vpack.c.b16 %v5060, %v5060
  %v5095 = vpack.c.b16 %v5061, %v5061
  %v5096 = vpack.c.b16 %v5062, %v5062
  %vm5131 = vcmask 125952
  %5132 = vst.msk [vmem:[%s5] sm:$0xf] %vm5131, %v5063
  %5133 = vst.msk [vmem:[%s5 + $0x4] sm:$0xf] %vm5131, %v5064
  %5134 = vst.msk [vmem:[%s5 + $0x8] sm:$0xf] %vm5131, %v5065
  %5135 = vst.msk [vmem:[%s5 + $0xc] sm:$0xf] %vm5131, %v5066
  %5136 = vst.msk [vmem:[%s5 + $0x10] sm:$0xf] %vm5131, %v5067
  %5137 = vst.msk [vmem:[%s5 + $0x14] sm:$0xf] %vm5131, %v5068
  %5138 = vst.msk [vmem:[%s5 + $0x18] sm:$0xf] %vm5131, %v5069
  %5139 = vst.msk [vmem:[%s5 + $0x1c] sm:$0xf] %vm5131, %v5070
  %5140 = vst.msk [vmem:[%s5 + $0x20] sm:$0xf] %vm5131, %v5071
  %5141 = vst.msk [vmem:[%s5 + $0x24] sm:$0xf] %vm5131, %v5072
  %5142 = vst.msk [vmem:[%s5 + $0x28] sm:$0xf] %vm5131, %v5073
  %5143 = vst.msk [vmem:[%s5 + $0x2c] sm:$0xf] %vm5131, %v5074
  %5144 = vst.msk [vmem:[%s5 + $0x30] sm:$0xf] %vm5131, %v5075
  %5145 = vst.msk [vmem:[%s5 + $0x34] sm:$0xf] %vm5131, %v5076
  %5146 = vst.msk [vmem:[%s5 + $0x38] sm:$0xf] %vm5131, %v5077
  %5147 = vst.msk [vmem:[%s5 + $0x3c] sm:$0xf] %vm5131, %v5078
  %5148 = vst.msk [vmem:[%s5 + $0x40] sm:$0xf] %vm5131, %v5079
  %5149 = vst.msk [vmem:[%s5 + $0x44] sm:$0xf] %vm5131, %v5080
  %5150 = vst.msk [vmem:[%s5 + $0x48] sm:$0xf] %vm5131, %v5081
  %5151 = vst.msk [vmem:[%s5 + $0x4c] sm:$0xf] %vm5131, %v5082
  %5152 = vst.msk [vmem:[%s5 + $0x50] sm:$0xf] %vm5131, %v5083
  %5153 = vst.msk [vmem:[%s5 + $0x54] sm:$0xf] %vm5131, %v5084
  %5154 = vst.msk [vmem:[%s5 + $0x58] sm:$0xf] %vm5131, %v5085
  %5155 = vst.msk [vmem:[%s5 + $0x5c] sm:$0xf] %vm5131, %v5086
  %5156 = vst.msk [vmem:[%s5 + $0x60] sm:$0xf] %vm5131, %v5087
  %5157 = vst.msk [vmem:[%s5 + $0x64] sm:$0xf] %vm5131, %v5088
  %5158 = vst.msk [vmem:[%s5 + $0x68] sm:$0xf] %vm5131, %v5089
  %5159 = vst.msk [vmem:[%s5 + $0x6c] sm:$0xf] %vm5131, %v5090
  %5160 = vst.msk [vmem:[%s5 + $0x70] sm:$0xf] %vm5131, %v5091
  %5161 = vst.msk [vmem:[%s5 + $0x74] sm:$0xf] %vm5131, %v5092
  %5162 = vst.msk [vmem:[%s5 + $0x78] sm:$0xf] %vm5131, %v5093
  %5163 = vst.msk [vmem:[%s5 + $0x7c] sm:$0xf] %vm5131, %v5094
  %5164 = vst.msk [vmem:[%s5 + $0x80] sm:$0xf] %vm5131, %v5095
  %5165 = vst.msk [vmem:[%s5 + $0x84] sm:$0xf] %vm5131, %v5096
  // Predicated region
  $region22: #{spectral_filter_forward.1} parent=0 // pred_check
    _
  $region23: #{spectral_filter_forward.1} parent=0 // pred_check_branch
    %5167 = sbr.rel (0) target = $region25
  $region24: #{spectral_filter_forward.1} parent=0 // pred_region
    _
  $region25: #{spectral_filter_forward.1} parent=0 // pred_fallthru
    _
  // Predicated region
  $region26: #{spectral_filter_forward.1} parent=0 // pred_check
    _
  $region27: #{spectral_filter_forward.1} parent=0 // pred_check_branch
    %5169 = sbr.rel (0) target = $region29
  $region28: #{spectral_filter_forward.1} parent=0 // pred_region
    _
  $region29: #{spectral_filter_forward.1} parent=0 // pred_fallthru
    _

</llo_original>
